<compile_context>
chip_gen: v6e
topology: v6e:2x2x1
jax: 0.10.0
libtpu: 0.0.40
codegen_flags: <defaults>
</compile_context>

<pallas_src>
import math

import jax
import jax.numpy as jnp
from jax.experimental import pallas as pl
from jax.experimental.pallas import tpu as pltpu

# ----- synthetic "BERT" config (small shapes) -----
B, S, H = 2, 8, 128          # batch, seq_len, hidden_size
NUM_HEADS = 4
HEAD_DIM = H // NUM_HEADS
INTER = 256                  # FFN intermediate size
NUM_LAYERS = 2
VOCAB = 128
NUM_TYPES = 2
NUM_CLASSES = 4
PAD_CLASSES = 128            # lane-dense padded classifier width
LN_EPS = 1e-12               # BERT default layer-norm eps


# ---------------- in-kernel helpers ----------------
def _layernorm(x, gamma, beta):
    # single-pass statistics: var = E[x^2] - mu^2 (two reductions issue back-to-back)
    mu = jnp.mean(x, axis=-1, keepdims=True)
    var = jnp.maximum(jnp.mean(x * x, axis=-1, keepdims=True) - mu * mu, 0.0)
    return (x - mu) * jax.lax.rsqrt(var + LN_EPS) * gamma + beta


def _gelu(x):
    # TODO(synk): BERT/PyTorch uses erf GELU; tanh approximation used (EUP-friendly, ~1e-3 dev).
    c = math.sqrt(2.0 / math.pi)
    return 0.5 * x * (1.0 + jnp.tanh(c * (x + 0.044715 * x * x * x)))


# ---------------- fused Pallas kernel (one sequence per grid step) ----------------
def fused_bert_kernel(x_ref, bias_ref, eg_ref, eb_ref,
                      wqkv_ref, bqkv_ref, wo_ref, bo_ref,
                      g1_ref, be1_ref, w1_ref, bf1_ref,
                      w2_ref, bf2_ref, g2_ref, be2_ref,
                      wp_ref, bp_ref, wf_ref, bfc_ref,
                      o_ref):
    # ---- embedding LayerNorm ----
    x = _layernorm(x_ref[0], eg_ref[0, 0], eb_ref[0, 0])      # [S, H] f32
    bias = bias_ref[0]                                        # [1, S] f32 additive mask bias
    scale = 1.0 / math.sqrt(HEAD_DIM)

    # ---- encoder layers: stacked weights, activation stays resident ----
    def layer_fn(i, x):
        xb = x.astype(jnp.bfloat16)
        # fused QKV projection: one [H, 3H] matmul (bf16 in, f32 acc)
        qkv = jnp.dot(xb, wqkv_ref[i],
                      preferred_element_type=jnp.float32) + bqkv_ref[i]   # [S, 3H]
        wo_l = wo_ref[i]                                                  # [H, H] bf16

        attn = jnp.zeros((S, H), jnp.float32)
        for h in range(NUM_HEADS):                      # static unroll over heads
            sl = slice(h * HEAD_DIM, (h + 1) * HEAD_DIM)
            qh = qkv[:, sl].astype(jnp.bfloat16)                              # [S, Dh]
            kh = qkv[:, H + h * HEAD_DIM:H + (h + 1) * HEAD_DIM].astype(jnp.bfloat16)
            vh = qkv[:, 2 * H + h * HEAD_DIM:2 * H + (h + 1) * HEAD_DIM].astype(jnp.bfloat16)

            s = jnp.einsum('qd,kd->qk', qh, kh,
                           preferred_element_type=jnp.float32) * scale + bias  # f32
            s = s - jnp.max(s, axis=-1, keepdims=True)
            p = jnp.exp(s)
            p = p * pl.reciprocal(jnp.sum(p, axis=-1, keepdims=True), approx=True)
            ctx = jnp.einsum('qk,kd->qd', p.astype(jnp.bfloat16), vh,
                             preferred_element_type=jnp.float32)               # [S, Dh]
            # accumulate output projection per head (no lane-axis concatenate)
            attn = attn + jnp.dot(ctx.astype(jnp.bfloat16), wo_l[sl, :],
                                  preferred_element_type=jnp.float32)
        attn = attn + bo_ref[i]
        # attention-output dropout (p=0.1) is identity at inference
        x1 = _layernorm(x + attn, g1_ref[i], be1_ref[i])

        ff = _gelu(jnp.dot(x1.astype(jnp.bfloat16), w1_ref[i],
                           preferred_element_type=jnp.float32) + bf1_ref[i])
        ff = jnp.dot(ff.astype(jnp.bfloat16), w2_ref[i],
                     preferred_element_type=jnp.float32) + bf2_ref[i]
        # FFN-output dropout (p=0.1) is identity at inference
        return _layernorm(x1 + ff, g2_ref[i], be2_ref[i])

    x = jax.lax.fori_loop(0, NUM_LAYERS, layer_fn, x, unroll=True)

    # ---- BERT pooler ([CLS] token) + classifier head ----
    cls = x[0:1, :]                                            # [1, H]
    pooled = jnp.tanh(jnp.dot(cls.astype(jnp.bfloat16), wp_ref[...],
                              preferred_element_type=jnp.float32) + bp_ref[...])
    # classifier dropout (p=0.1) is identity at inference
    logits = jnp.dot(pooled.astype(jnp.bfloat16), wf_ref[...],
                     preferred_element_type=jnp.float32) + bfc_ref[...]   # [1, 128] lane-dense
    o_ref[0] = logits


# ---------------- pallas_call wrapper ----------------
def _full_spec(shape):
    n = len(shape)
    return pl.BlockSpec(shape, lambda b: (0,) * n)


_WEIGHT_SHAPES = [
    (1, 1, H), (1, 1, H),                                # embedding LN gamma/beta
    (NUM_LAYERS, H, 3 * H), (NUM_LAYERS, 1, 3 * H),      # fused QKV
    (NUM_LAYERS, H, H), (NUM_LAYERS, 1, H),              # attention output proj
    (NUM_LAYERS, 1, H), (NUM_LAYERS, 1, H),              # LN1
    (NUM_LAYERS, H, INTER), (NUM_LAYERS, 1, INTER),      # FFN up
    (NUM_LAYERS, INTER, H), (NUM_LAYERS, 1, H),          # FFN down
    (NUM_LAYERS, 1, H), (NUM_LAYERS, 1, H),              # LN2
    (H, H), (1, H),                                      # pooler
    (H, PAD_CLASSES), (1, PAD_CLASSES),                  # classifier (padded to 128 lanes)
]

_fused_forward = pl.pallas_call(
    fused_bert_kernel,
    out_shape=jax.ShapeDtypeStruct((B, 1, PAD_CLASSES), jnp.float32),
    grid=(B,),
    in_specs=[pl.BlockSpec((1, S, H), lambda b: (b, 0, 0)),      # embedded activations
              pl.BlockSpec((1, 1, S), lambda b: (b, 0, 0))]      # attention mask bias
             + [_full_spec(s) for s in _WEIGHT_SHAPES],
    out_specs=pl.BlockSpec((1, 1, PAD_CLASSES), lambda b: (b, 0, 0)),
    compiler_params=pltpu.CompilerParams(dimension_semantics=("parallel",)),
)


# ---------------- parameter init (deterministic, synthetic) ----------------
def init_params(key):
    ks = iter(jax.random.split(key, 32))

    def w(shape):
        return jax.random.normal(next(ks), shape, jnp.float32) * 0.02

    p = {}
    p['word_emb'] = w((VOCAB, H))
    p['pos_emb'] = w((S, H))
    p['type_emb'] = w((NUM_TYPES, H))
    p['emb_ln_g'] = jnp.ones((1, 1, H), jnp.float32)
    p['emb_ln_b'] = jnp.zeros((1, 1, H), jnp.float32)

    # per-layer weights stacked on a leading NUM_LAYERS axis; matmul weights bf16, rest f32
    p['wqkv'] = w((NUM_LAYERS, H, 3 * H)).astype(jnp.bfloat16)
    p['bqkv'] = jnp.zeros((NUM_LAYERS, 1, 3 * H), jnp.float32)
    p['wo'] = w((NUM_LAYERS, H, H)).astype(jnp.bfloat16)
    p['bo'] = jnp.zeros((NUM_LAYERS, 1, H), jnp.float32)
    p['ln1_g'] = jnp.ones((NUM_LAYERS, 1, H), jnp.float32)
    p['ln1_b'] = jnp.zeros((NUM_LAYERS, 1, H), jnp.float32)
    p['w1'] = w((NUM_LAYERS, H, INTER)).astype(jnp.bfloat16)
    p['b1'] = jnp.zeros((NUM_LAYERS, 1, INTER), jnp.float32)
    p['w2'] = w((NUM_LAYERS, INTER, H)).astype(jnp.bfloat16)
    p['b2'] = jnp.zeros((NUM_LAYERS, 1, H), jnp.float32)
    p['ln2_g'] = jnp.ones((NUM_LAYERS, 1, H), jnp.float32)
    p['ln2_b'] = jnp.zeros((NUM_LAYERS, 1, H), jnp.float32)

    p['pooler_w'] = w((H, H)).astype(jnp.bfloat16)
    p['pooler_b'] = jnp.zeros((1, H), jnp.float32)
    fc_w = w((H, NUM_CLASSES))
    p['fc_w'] = jnp.pad(fc_w, ((0, 0), (0, PAD_CLASSES - NUM_CLASSES))).astype(jnp.bfloat16)
    p['fc_b'] = jnp.zeros((1, PAD_CLASSES), jnp.float32)
    return p


# ---------------- forward pass ----------------
@jax.jit
def bert_classifier_forward(params, input_ids, attention_mask):
    # embedding gathers are XLA glue; everything else runs inside ONE fused Pallas kernel.
    # token_type_ids assumed all-zero (type embedding 0), matching default BERT usage.
    x = (params['word_emb'][input_ids]
         + params['pos_emb'][None, :, :]
         + params['type_emb'][0][None, None, :])                # [B, S, H] f32
    # additive attention-mask bias, kept in f32 (mask must not saturate in bf16)
    bias = (1.0 - attention_mask.astype(jnp.float32))[:, None, :] * -1e9   # [B, 1, S]

    logits_padded = _fused_forward(
        x, bias,
        params['emb_ln_g'], params['emb_ln_b'],
        params['wqkv'], params['bqkv'], params['wo'], params['bo'],
        params['ln1_g'], params['ln1_b'], params['w1'], params['b1'],
        params['w2'], params['b2'], params['ln2_g'], params['ln2_b'],
        params['pooler_w'], params['pooler_b'], params['fc_w'], params['fc_b'])
    return logits_padded[:, 0, :NUM_CLASSES]


if __name__ == "__main__":
    key = jax.random.PRNGKey(0)
    kp, ki = jax.random.split(key)
    params = init_params(kp)

    input_ids = jax.random.randint(ki, (B, S), 0, VOCAB, dtype=jnp.int32)
    # mask out the last two tokens of the second sequence
    attention_mask = jnp.array([[1] * S,
                                [1] * (S - 2) + [0, 0]], dtype=jnp.int32)

    logits = bert_classifier_forward(params, input_ids, attention_mask)
    jax.block_until_ready(logits)
    assert logits.shape == (B, NUM_CLASSES)
    assert bool(jnp.all(jnp.isfinite(logits)))
    print("KERNEL_OK")
</pallas_src>

<mosaic_0001>
module attributes {stable_mosaic.version = 11 : i64} {
  func.func @fused_bert_kernel(%arg0: i32, %arg1: memref<1x8x128xf32, #tpu.memory_space<vmem>>, %arg2: memref<1x1x8xf32, #tpu.memory_space<vmem>>, %arg3: memref<1x1x128xf32, #tpu.memory_space<vmem>>, %arg4: memref<1x1x128xf32, #tpu.memory_space<vmem>>, %arg5: memref<2x128x384xbf16, #tpu.memory_space<vmem>>, %arg6: memref<2x1x384xf32, #tpu.memory_space<vmem>>, %arg7: memref<2x128x128xbf16, #tpu.memory_space<vmem>>, %arg8: memref<2x1x128xf32, #tpu.memory_space<vmem>>, %arg9: memref<2x1x128xf32, #tpu.memory_space<vmem>>, %arg10: memref<2x1x128xf32, #tpu.memory_space<vmem>>, %arg11: memref<2x128x256xbf16, #tpu.memory_space<vmem>>, %arg12: memref<2x1x256xf32, #tpu.memory_space<vmem>>, %arg13: memref<2x256x128xbf16, #tpu.memory_space<vmem>>, %arg14: memref<2x1x128xf32, #tpu.memory_space<vmem>>, %arg15: memref<2x1x128xf32, #tpu.memory_space<vmem>>, %arg16: memref<2x1x128xf32, #tpu.memory_space<vmem>>, %arg17: memref<128x128xbf16, #tpu.memory_space<vmem>>, %arg18: memref<1x128xf32, #tpu.memory_space<vmem>>, %arg19: memref<128x128xbf16, #tpu.memory_space<vmem>>, %arg20: memref<1x128xf32, #tpu.memory_space<vmem>>, %arg21: memref<1x1x128xf32, #tpu.memory_space<vmem>>) attributes {dimension_semantics = [#tpu.dimension_semantics<parallel>], iteration_bounds = array<i64: 2>, scalar_prefetch = 0 : i64, scratch_operands = 0 : i64, tpu.core_type = #tpu.core_type<tc>, window_params = [{transform_indices = @transform_0, window_bounds = array<i64: 1, 8, 128>}, {transform_indices = @transform_1, window_bounds = array<i64: 1, 1, 8>}, {pipeline_mode = #tpu.pipeline_mode<synchronous>, transform_indices = @transform_2, window_bounds = array<i64: 1, 1, 128>}, {pipeline_mode = #tpu.pipeline_mode<synchronous>, transform_indices = @transform_3, window_bounds = array<i64: 1, 1, 128>}, {pipeline_mode = #tpu.pipeline_mode<synchronous>, transform_indices = @transform_4, window_bounds = array<i64: 2, 128, 384>}, {pipeline_mode = #tpu.pipeline_mode<synchronous>, transform_indices = @transform_5, window_bounds = array<i64: 2, 1, 384>}, {pipeline_mode = #tpu.pipeline_mode<synchronous>, transform_indices = @transform_6, window_bounds = array<i64: 2, 128, 128>}, {pipeline_mode = #tpu.pipeline_mode<synchronous>, transform_indices = @transform_7, window_bounds = array<i64: 2, 1, 128>}, {pipeline_mode = #tpu.pipeline_mode<synchronous>, transform_indices = @transform_8, window_bounds = array<i64: 2, 1, 128>}, {pipeline_mode = #tpu.pipeline_mode<synchronous>, transform_indices = @transform_9, window_bounds = array<i64: 2, 1, 128>}, {pipeline_mode = #tpu.pipeline_mode<synchronous>, transform_indices = @transform_10, window_bounds = array<i64: 2, 128, 256>}, {pipeline_mode = #tpu.pipeline_mode<synchronous>, transform_indices = @transform_11, window_bounds = array<i64: 2, 1, 256>}, {pipeline_mode = #tpu.pipeline_mode<synchronous>, transform_indices = @transform_12, window_bounds = array<i64: 2, 256, 128>}, {pipeline_mode = #tpu.pipeline_mode<synchronous>, transform_indices = @transform_13, window_bounds = array<i64: 2, 1, 128>}, {pipeline_mode = #tpu.pipeline_mode<synchronous>, transform_indices = @transform_14, window_bounds = array<i64: 2, 1, 128>}, {pipeline_mode = #tpu.pipeline_mode<synchronous>, transform_indices = @transform_15, window_bounds = array<i64: 2, 1, 128>}, {pipeline_mode = #tpu.pipeline_mode<synchronous>, transform_indices = @transform_16, window_bounds = array<i64: 128, 128>}, {pipeline_mode = #tpu.pipeline_mode<synchronous>, transform_indices = @transform_17, window_bounds = array<i64: 1, 128>}, {pipeline_mode = #tpu.pipeline_mode<synchronous>, transform_indices = @transform_18, window_bounds = array<i64: 128, 128>}, {pipeline_mode = #tpu.pipeline_mode<synchronous>, transform_indices = @transform_19, window_bounds = array<i64: 1, 128>}, {transform_indices = @transform_20, window_bounds = array<i64: 1, 1, 128>}]} {
    %c0 = arith.constant 0 : index
    %c0_0 = arith.constant 0 : index
    %c0_1 = arith.constant 0 : index
    %0 = vector.load %arg1[%c0, %c0_0, %c0_1] : memref<1x8x128xf32, #tpu.memory_space<vmem>>, vector<1x8x128xf32>
    %1 = vector.shape_cast %0 : vector<1x8x128xf32> to vector<8x128xf32>
    %c0_2 = arith.constant 0 : index
    %c0_3 = arith.constant 0 : index
    %c0_4 = arith.constant 0 : index
    %2 = vector.load %arg3[%c0_2, %c0_3, %c0_4] : memref<1x1x128xf32, #tpu.memory_space<vmem>>, vector<1x1x128xf32>
    %3 = vector.shape_cast %2 : vector<1x1x128xf32> to vector<128xf32>
    %c0_5 = arith.constant 0 : index
    %c0_6 = arith.constant 0 : index
    %c0_7 = arith.constant 0 : index
    %4 = vector.load %arg4[%c0_5, %c0_6, %c0_7] : memref<1x1x128xf32, #tpu.memory_space<vmem>>, vector<1x1x128xf32>
    %5 = vector.shape_cast %4 : vector<1x1x128xf32> to vector<128xf32>
    %cst = arith.constant dense<0.000000e+00> : vector<8xf32>
    %6 = vector.multi_reduction <add>, %1, %cst [1] : vector<8x128xf32> to vector<8xf32>
    %7 = vector.shape_cast %6 : vector<8xf32> to vector<8x1xf32>
    %cst_8 = arith.constant 1.280000e+02 : f32
    %8 = vector.broadcast %cst_8 : f32 to vector<8x1xf32>
    %9 = arith.divf %7, %8 : vector<8x1xf32>
    %10 = arith.mulf %1, %1 : vector<8x128xf32>
    %cst_9 = arith.constant dense<0.000000e+00> : vector<8xf32>
    %11 = vector.multi_reduction <add>, %10, %cst_9 [1] : vector<8x128xf32> to vector<8xf32>
    %12 = vector.shape_cast %11 : vector<8xf32> to vector<8x1xf32>
    %cst_10 = arith.constant 1.280000e+02 : f32
    %13 = vector.broadcast %cst_10 : f32 to vector<8x1xf32>
    %14 = arith.divf %12, %13 : vector<8x1xf32>
    %15 = arith.mulf %9, %9 : vector<8x1xf32>
    %16 = arith.subf %14, %15 : vector<8x1xf32>
    %cst_11 = arith.constant 0.000000e+00 : f32
    %17 = vector.broadcast %cst_11 : f32 to vector<8x1xf32>
    %18 = arith.maximumf %16, %17 : vector<8x1xf32>
    %19 = vector.broadcast %9 : vector<8x1xf32> to vector<8x128xf32>
    %20 = arith.subf %1, %19 : vector<8x128xf32>
    %cst_12 = arith.constant 9.99999996E-13 : f32
    %21 = vector.broadcast %cst_12 : f32 to vector<8x1xf32>
    %22 = arith.addf %18, %21 : vector<8x1xf32>
    %23 = math.rsqrt %22 : vector<8x1xf32>
    %24 = vector.broadcast %23 : vector<8x1xf32> to vector<8x128xf32>
    %25 = arith.mulf %20, %24 : vector<8x128xf32>
    %26 = vector.shape_cast %3 : vector<128xf32> to vector<1x128xf32>
    %27 = vector.broadcast %26 : vector<1x128xf32> to vector<8x128xf32>
    %28 = arith.mulf %25, %27 : vector<8x128xf32>
    %29 = vector.shape_cast %5 : vector<128xf32> to vector<1x128xf32>
    %30 = vector.broadcast %29 : vector<1x128xf32> to vector<8x128xf32>
    %31 = arith.addf %28, %30 : vector<8x128xf32>
    %c0_13 = arith.constant 0 : index
    %c0_14 = arith.constant 0 : index
    %c0_15 = arith.constant 0 : index
    %32 = vector.load %arg2[%c0_13, %c0_14, %c0_15] : memref<1x1x8xf32, #tpu.memory_space<vmem>>, vector<1x1x8xf32>
    %33 = vector.shape_cast %32 : vector<1x1x8xf32> to vector<1x8xf32>
    %c0_i32 = arith.constant 0 : i32
    %34 = arith.truncf %31 : vector<8x128xf32> to vector<8x128xbf16>
    %35 = arith.index_cast %c0_i32 : i32 to index
    %c0_16 = arith.constant 0 : index
    %c0_17 = arith.constant 0 : index
    %36 = vector.load %arg5[%35, %c0_16, %c0_17] : memref<2x128x384xbf16, #tpu.memory_space<vmem>>, vector<1x128x384xbf16>
    %37 = vector.shape_cast %36 : vector<1x128x384xbf16> to vector<128x384xbf16>
    %cst_18 = arith.constant dense<0.000000e+00> : vector<8x384xf32>
    %38 = tpu.matmul %34, %37, %cst_18 {dimension_numbers = #tpu.dot_dimension_numbers<[1], [0], [0], [1], [0, 0, 1, 1], [], []>} : vector<8x128xbf16>, vector<128x384xbf16>, vector<8x384xf32> -> vector<8x384xf32>
    %39 = arith.index_cast %c0_i32 : i32 to index
    %c0_19 = arith.constant 0 : index
    %c0_20 = arith.constant 0 : index
    %40 = vector.load %arg6[%39, %c0_19, %c0_20] : memref<2x1x384xf32, #tpu.memory_space<vmem>>, vector<1x1x384xf32>
    %41 = vector.shape_cast %40 : vector<1x1x384xf32> to vector<1x384xf32>
    %42 = vector.broadcast %41 : vector<1x384xf32> to vector<8x384xf32>
    %43 = arith.addf %38, %42 : vector<8x384xf32>
    %44 = arith.index_cast %c0_i32 : i32 to index
    %c0_21 = arith.constant 0 : index
    %c0_22 = arith.constant 0 : index
    %45 = vector.load %arg7[%44, %c0_21, %c0_22] : memref<2x128x128xbf16, #tpu.memory_space<vmem>>, vector<1x128x128xbf16>
    %46 = vector.shape_cast %45 : vector<1x128x128xbf16> to vector<128x128xbf16>
    %cst_23 = arith.constant 0.000000e+00 : f32
    %47 = vector.broadcast %cst_23 : f32 to vector<8x128xf32>
    %48 = vector.extract_strided_slice %43 {offsets = [0, 0], sizes = [8, 32], strides = [1, 1]} : vector<8x384xf32> to vector<8x32xf32>
    %49 = arith.truncf %48 : vector<8x32xf32> to vector<8x32xbf16>
    %50 = vector.extract_strided_slice %43 {offsets = [0, 128], sizes = [8, 32], strides = [1, 1]} : vector<8x384xf32> to vector<8x32xf32>
    %51 = arith.truncf %50 : vector<8x32xf32> to vector<8x32xbf16>
    %52 = vector.extract_strided_slice %43 {offsets = [0, 256], sizes = [8, 32], strides = [1, 1]} : vector<8x384xf32> to vector<8x32xf32>
    %53 = arith.truncf %52 : vector<8x32xf32> to vector<8x32xbf16>
    "tpu.trace_start"() <{level = 10 : i32, message = "qd,kd->qk"}> : () -> ()
    %cst_24 = arith.constant dense<0.000000e+00> : vector<8x8xf32>
    %54 = tpu.matmul %49, %51, %cst_24 {dimension_numbers = #tpu.dot_dimension_numbers<[1], [1], [0], [0], [0, 0, 1, 0], [], []>} : vector<8x32xbf16>, vector<8x32xbf16>, vector<8x8xf32> -> vector<8x8xf32>
    "tpu.trace_stop"() : () -> ()
    %cst_25 = arith.constant 0.176776692 : f32
    %55 = vector.broadcast %cst_25 : f32 to vector<8x8xf32>
    %56 = arith.mulf %54, %55 : vector<8x8xf32>
    %57 = vector.broadcast %33 : vector<1x8xf32> to vector<8x8xf32>
    %58 = arith.addf %56, %57 : vector<8x8xf32>
    %cst_26 = arith.constant dense<0xFF800000> : vector<8xf32>
    %59 = vector.multi_reduction <maximumf>, %58, %cst_26 [1] : vector<8x8xf32> to vector<8xf32>
    %60 = vector.shape_cast %59 : vector<8xf32> to vector<8x1xf32>
    %61 = vector.broadcast %60 : vector<8x1xf32> to vector<8x8xf32>
    %62 = arith.subf %58, %61 : vector<8x8xf32>
    %63 = math.exp %62 : vector<8x8xf32>
    %cst_27 = arith.constant dense<0.000000e+00> : vector<8xf32>
    %64 = vector.multi_reduction <add>, %63, %cst_27 [1] : vector<8x8xf32> to vector<8xf32>
    %65 = vector.shape_cast %64 : vector<8xf32> to vector<8x1xf32>
    %66 = tpu.reciprocal %65 {approx = true} : vector<8x1xf32> -> vector<8x1xf32>
    %67 = vector.broadcast %66 : vector<8x1xf32> to vector<8x8xf32>
    %68 = arith.mulf %63, %67 : vector<8x8xf32>
    %69 = arith.truncf %68 : vector<8x8xf32> to vector<8x8xbf16>
    "tpu.trace_start"() <{level = 10 : i32, message = "qk,kd->qd"}> : () -> ()
    %cst_28 = arith.constant dense<0.000000e+00> : vector<8x32xf32>
    %70 = tpu.matmul %69, %53, %cst_28 {dimension_numbers = #tpu.dot_dimension_numbers<[1], [0], [0], [1], [0, 0, 1, 1], [], []>} : vector<8x8xbf16>, vector<8x32xbf16>, vector<8x32xf32> -> vector<8x32xf32>
    "tpu.trace_stop"() : () -> ()
    %71 = arith.truncf %70 : vector<8x32xf32> to vector<8x32xbf16>
    %72 = vector.extract_strided_slice %46 {offsets = [0, 0], sizes = [32, 128], strides = [1, 1]} : vector<128x128xbf16> to vector<32x128xbf16>
    %cst_29 = arith.constant dense<0.000000e+00> : vector<8x128xf32>
    %73 = tpu.matmul %71, %72, %cst_29 {dimension_numbers = #tpu.dot_dimension_numbers<[1], [0], [0], [1], [0, 0, 1, 1], [], []>} : vector<8x32xbf16>, vector<32x128xbf16>, vector<8x128xf32> -> vector<8x128xf32>
    %74 = arith.addf %47, %73 : vector<8x128xf32>
    %75 = vector.extract_strided_slice %43 {offsets = [0, 32], sizes = [8, 32], strides = [1, 1]} : vector<8x384xf32> to vector<8x32xf32>
    %76 = arith.truncf %75 : vector<8x32xf32> to vector<8x32xbf16>
    %77 = vector.extract_strided_slice %43 {offsets = [0, 160], sizes = [8, 32], strides = [1, 1]} : vector<8x384xf32> to vector<8x32xf32>
    %78 = arith.truncf %77 : vector<8x32xf32> to vector<8x32xbf16>
    %79 = vector.extract_strided_slice %43 {offsets = [0, 288], sizes = [8, 32], strides = [1, 1]} : vector<8x384xf32> to vector<8x32xf32>
    %80 = arith.truncf %79 : vector<8x32xf32> to vector<8x32xbf16>
    "tpu.trace_start"() <{level = 10 : i32, message = "qd,kd->qk"}> : () -> ()
    %cst_30 = arith.constant dense<0.000000e+00> : vector<8x8xf32>
    %81 = tpu.matmul %76, %78, %cst_30 {dimension_numbers = #tpu.dot_dimension_numbers<[1], [1], [0], [0], [0, 0, 1, 0], [], []>} : vector<8x32xbf16>, vector<8x32xbf16>, vector<8x8xf32> -> vector<8x8xf32>
    "tpu.trace_stop"() : () -> ()
    %cst_31 = arith.constant 0.176776692 : f32
    %82 = vector.broadcast %cst_31 : f32 to vector<8x8xf32>
    %83 = arith.mulf %81, %82 : vector<8x8xf32>
    %84 = vector.broadcast %33 : vector<1x8xf32> to vector<8x8xf32>
    %85 = arith.addf %83, %84 : vector<8x8xf32>
    %cst_32 = arith.constant dense<0xFF800000> : vector<8xf32>
    %86 = vector.multi_reduction <maximumf>, %85, %cst_32 [1] : vector<8x8xf32> to vector<8xf32>
    %87 = vector.shape_cast %86 : vector<8xf32> to vector<8x1xf32>
    %88 = vector.broadcast %87 : vector<8x1xf32> to vector<8x8xf32>
    %89 = arith.subf %85, %88 : vector<8x8xf32>
    %90 = math.exp %89 : vector<8x8xf32>
    %cst_33 = arith.constant dense<0.000000e+00> : vector<8xf32>
    %91 = vector.multi_reduction <add>, %90, %cst_33 [1] : vector<8x8xf32> to vector<8xf32>
    %92 = vector.shape_cast %91 : vector<8xf32> to vector<8x1xf32>
    %93 = tpu.reciprocal %92 {approx = true} : vector<8x1xf32> -> vector<8x1xf32>
    %94 = vector.broadcast %93 : vector<8x1xf32> to vector<8x8xf32>
    %95 = arith.mulf %90, %94 : vector<8x8xf32>
    %96 = arith.truncf %95 : vector<8x8xf32> to vector<8x8xbf16>
    "tpu.trace_start"() <{level = 10 : i32, message = "qk,kd->qd"}> : () -> ()
    %cst_34 = arith.constant dense<0.000000e+00> : vector<8x32xf32>
    %97 = tpu.matmul %96, %80, %cst_34 {dimension_numbers = #tpu.dot_dimension_numbers<[1], [0], [0], [1], [0, 0, 1, 1], [], []>} : vector<8x8xbf16>, vector<8x32xbf16>, vector<8x32xf32> -> vector<8x32xf32>
    "tpu.trace_stop"() : () -> ()
    %98 = arith.truncf %97 : vector<8x32xf32> to vector<8x32xbf16>
    %99 = vector.extract_strided_slice %46 {offsets = [32, 0], sizes = [32, 128], strides = [1, 1]} : vector<128x128xbf16> to vector<32x128xbf16>
    %cst_35 = arith.constant dense<0.000000e+00> : vector<8x128xf32>
    %100 = tpu.matmul %98, %99, %cst_35 {dimension_numbers = #tpu.dot_dimension_numbers<[1], [0], [0], [1], [0, 0, 1, 1], [], []>} : vector<8x32xbf16>, vector<32x128xbf16>, vector<8x128xf32> -> vector<8x128xf32>
    %101 = arith.addf %74, %100 : vector<8x128xf32>
    %102 = vector.extract_strided_slice %43 {offsets = [0, 64], sizes = [8, 32], strides = [1, 1]} : vector<8x384xf32> to vector<8x32xf32>
    %103 = arith.truncf %102 : vector<8x32xf32> to vector<8x32xbf16>
    %104 = vector.extract_strided_slice %43 {offsets = [0, 192], sizes = [8, 32], strides = [1, 1]} : vector<8x384xf32> to vector<8x32xf32>
    %105 = arith.truncf %104 : vector<8x32xf32> to vector<8x32xbf16>
    %106 = vector.extract_strided_slice %43 {offsets = [0, 320], sizes = [8, 32], strides = [1, 1]} : vector<8x384xf32> to vector<8x32xf32>
    %107 = arith.truncf %106 : vector<8x32xf32> to vector<8x32xbf16>
    "tpu.trace_start"() <{level = 10 : i32, message = "qd,kd->qk"}> : () -> ()
    %cst_36 = arith.constant dense<0.000000e+00> : vector<8x8xf32>
    %108 = tpu.matmul %103, %105, %cst_36 {dimension_numbers = #tpu.dot_dimension_numbers<[1], [1], [0], [0], [0, 0, 1, 0], [], []>} : vector<8x32xbf16>, vector<8x32xbf16>, vector<8x8xf32> -> vector<8x8xf32>
    "tpu.trace_stop"() : () -> ()
    %cst_37 = arith.constant 0.176776692 : f32
    %109 = vector.broadcast %cst_37 : f32 to vector<8x8xf32>
    %110 = arith.mulf %108, %109 : vector<8x8xf32>
    %111 = vector.broadcast %33 : vector<1x8xf32> to vector<8x8xf32>
    %112 = arith.addf %110, %111 : vector<8x8xf32>
    %cst_38 = arith.constant dense<0xFF800000> : vector<8xf32>
    %113 = vector.multi_reduction <maximumf>, %112, %cst_38 [1] : vector<8x8xf32> to vector<8xf32>
    %114 = vector.shape_cast %113 : vector<8xf32> to vector<8x1xf32>
    %115 = vector.broadcast %114 : vector<8x1xf32> to vector<8x8xf32>
    %116 = arith.subf %112, %115 : vector<8x8xf32>
    %117 = math.exp %116 : vector<8x8xf32>
    %cst_39 = arith.constant dense<0.000000e+00> : vector<8xf32>
    %118 = vector.multi_reduction <add>, %117, %cst_39 [1] : vector<8x8xf32> to vector<8xf32>
    %119 = vector.shape_cast %118 : vector<8xf32> to vector<8x1xf32>
    %120 = tpu.reciprocal %119 {approx = true} : vector<8x1xf32> -> vector<8x1xf32>
    %121 = vector.broadcast %120 : vector<8x1xf32> to vector<8x8xf32>
    %122 = arith.mulf %117, %121 : vector<8x8xf32>
    %123 = arith.truncf %122 : vector<8x8xf32> to vector<8x8xbf16>
    "tpu.trace_start"() <{level = 10 : i32, message = "qk,kd->qd"}> : () -> ()
    %cst_40 = arith.constant dense<0.000000e+00> : vector<8x32xf32>
    %124 = tpu.matmul %123, %107, %cst_40 {dimension_numbers = #tpu.dot_dimension_numbers<[1], [0], [0], [1], [0, 0, 1, 1], [], []>} : vector<8x8xbf16>, vector<8x32xbf16>, vector<8x32xf32> -> vector<8x32xf32>
    "tpu.trace_stop"() : () -> ()
    %125 = arith.truncf %124 : vector<8x32xf32> to vector<8x32xbf16>
    %126 = vector.extract_strided_slice %46 {offsets = [64, 0], sizes = [32, 128], strides = [1, 1]} : vector<128x128xbf16> to vector<32x128xbf16>
    %cst_41 = arith.constant dense<0.000000e+00> : vector<8x128xf32>
    %127 = tpu.matmul %125, %126, %cst_41 {dimension_numbers = #tpu.dot_dimension_numbers<[1], [0], [0], [1], [0, 0, 1, 1], [], []>} : vector<8x32xbf16>, vector<32x128xbf16>, vector<8x128xf32> -> vector<8x128xf32>
    %128 = arith.addf %101, %127 : vector<8x128xf32>
    %129 = vector.extract_strided_slice %43 {offsets = [0, 96], sizes = [8, 32], strides = [1, 1]} : vector<8x384xf32> to vector<8x32xf32>
    %130 = arith.truncf %129 : vector<8x32xf32> to vector<8x32xbf16>
    %131 = vector.extract_strided_slice %43 {offsets = [0, 224], sizes = [8, 32], strides = [1, 1]} : vector<8x384xf32> to vector<8x32xf32>
    %132 = arith.truncf %131 : vector<8x32xf32> to vector<8x32xbf16>
    %133 = vector.extract_strided_slice %43 {offsets = [0, 352], sizes = [8, 32], strides = [1, 1]} : vector<8x384xf32> to vector<8x32xf32>
    %134 = arith.truncf %133 : vector<8x32xf32> to vector<8x32xbf16>
    "tpu.trace_start"() <{level = 10 : i32, message = "qd,kd->qk"}> : () -> ()
    %cst_42 = arith.constant dense<0.000000e+00> : vector<8x8xf32>
    %135 = tpu.matmul %130, %132, %cst_42 {dimension_numbers = #tpu.dot_dimension_numbers<[1], [1], [0], [0], [0, 0, 1, 0], [], []>} : vector<8x32xbf16>, vector<8x32xbf16>, vector<8x8xf32> -> vector<8x8xf32>
    "tpu.trace_stop"() : () -> ()
    %cst_43 = arith.constant 0.176776692 : f32
    %136 = vector.broadcast %cst_43 : f32 to vector<8x8xf32>
    %137 = arith.mulf %135, %136 : vector<8x8xf32>
    %138 = vector.broadcast %33 : vector<1x8xf32> to vector<8x8xf32>
    %139 = arith.addf %137, %138 : vector<8x8xf32>
    %cst_44 = arith.constant dense<0xFF800000> : vector<8xf32>
    %140 = vector.multi_reduction <maximumf>, %139, %cst_44 [1] : vector<8x8xf32> to vector<8xf32>
    %141 = vector.shape_cast %140 : vector<8xf32> to vector<8x1xf32>
    %142 = vector.broadcast %141 : vector<8x1xf32> to vector<8x8xf32>
    %143 = arith.subf %139, %142 : vector<8x8xf32>
    %144 = math.exp %143 : vector<8x8xf32>
    %cst_45 = arith.constant dense<0.000000e+00> : vector<8xf32>
    %145 = vector.multi_reduction <add>, %144, %cst_45 [1] : vector<8x8xf32> to vector<8xf32>
    %146 = vector.shape_cast %145 : vector<8xf32> to vector<8x1xf32>
    %147 = tpu.reciprocal %146 {approx = true} : vector<8x1xf32> -> vector<8x1xf32>
    %148 = vector.broadcast %147 : vector<8x1xf32> to vector<8x8xf32>
    %149 = arith.mulf %144, %148 : vector<8x8xf32>
    %150 = arith.truncf %149 : vector<8x8xf32> to vector<8x8xbf16>
    "tpu.trace_start"() <{level = 10 : i32, message = "qk,kd->qd"}> : () -> ()
    %cst_46 = arith.constant dense<0.000000e+00> : vector<8x32xf32>
    %151 = tpu.matmul %150, %134, %cst_46 {dimension_numbers = #tpu.dot_dimension_numbers<[1], [0], [0], [1], [0, 0, 1, 1], [], []>} : vector<8x8xbf16>, vector<8x32xbf16>, vector<8x32xf32> -> vector<8x32xf32>
    "tpu.trace_stop"() : () -> ()
    %152 = arith.truncf %151 : vector<8x32xf32> to vector<8x32xbf16>
    %153 = vector.extract_strided_slice %46 {offsets = [96, 0], sizes = [32, 128], strides = [1, 1]} : vector<128x128xbf16> to vector<32x128xbf16>
    %cst_47 = arith.constant dense<0.000000e+00> : vector<8x128xf32>
    %154 = tpu.matmul %152, %153, %cst_47 {dimension_numbers = #tpu.dot_dimension_numbers<[1], [0], [0], [1], [0, 0, 1, 1], [], []>} : vector<8x32xbf16>, vector<32x128xbf16>, vector<8x128xf32> -> vector<8x128xf32>
    %155 = arith.addf %128, %154 : vector<8x128xf32>
    %156 = arith.index_cast %c0_i32 : i32 to index
    %c0_48 = arith.constant 0 : index
    %c0_49 = arith.constant 0 : index
    %157 = vector.load %arg8[%156, %c0_48, %c0_49] : memref<2x1x128xf32, #tpu.memory_space<vmem>>, vector<1x1x128xf32>
    %158 = vector.shape_cast %157 : vector<1x1x128xf32> to vector<1x128xf32>
    %159 = vector.broadcast %158 : vector<1x128xf32> to vector<8x128xf32>
    %160 = arith.addf %155, %159 : vector<8x128xf32>
    %161 = arith.addf %31, %160 : vector<8x128xf32>
    %162 = arith.index_cast %c0_i32 : i32 to index
    %c0_50 = arith.constant 0 : index
    %c0_51 = arith.constant 0 : index
    %163 = vector.load %arg9[%162, %c0_50, %c0_51] : memref<2x1x128xf32, #tpu.memory_space<vmem>>, vector<1x1x128xf32>
    %164 = vector.shape_cast %163 : vector<1x1x128xf32> to vector<1x128xf32>
    %165 = arith.index_cast %c0_i32 : i32 to index
    %c0_52 = arith.constant 0 : index
    %c0_53 = arith.constant 0 : index
    %166 = vector.load %arg10[%165, %c0_52, %c0_53] : memref<2x1x128xf32, #tpu.memory_space<vmem>>, vector<1x1x128xf32>
    %167 = vector.shape_cast %166 : vector<1x1x128xf32> to vector<1x128xf32>
    %cst_54 = arith.constant dense<0.000000e+00> : vector<8xf32>
    %168 = vector.multi_reduction <add>, %161, %cst_54 [1] : vector<8x128xf32> to vector<8xf32>
    %169 = vector.shape_cast %168 : vector<8xf32> to vector<8x1xf32>
    %cst_55 = arith.constant 1.280000e+02 : f32
    %170 = vector.broadcast %cst_55 : f32 to vector<8x1xf32>
    %171 = arith.divf %169, %170 : vector<8x1xf32>
    %172 = arith.mulf %161, %161 : vector<8x128xf32>
    %cst_56 = arith.constant dense<0.000000e+00> : vector<8xf32>
    %173 = vector.multi_reduction <add>, %172, %cst_56 [1] : vector<8x128xf32> to vector<8xf32>
    %174 = vector.shape_cast %173 : vector<8xf32> to vector<8x1xf32>
    %cst_57 = arith.constant 1.280000e+02 : f32
    %175 = vector.broadcast %cst_57 : f32 to vector<8x1xf32>
    %176 = arith.divf %174, %175 : vector<8x1xf32>
    %177 = arith.mulf %171, %171 : vector<8x1xf32>
    %178 = arith.subf %176, %177 : vector<8x1xf32>
    %cst_58 = arith.constant 0.000000e+00 : f32
    %179 = vector.broadcast %cst_58 : f32 to vector<8x1xf32>
    %180 = arith.maximumf %178, %179 : vector<8x1xf32>
    %181 = vector.broadcast %171 : vector<8x1xf32> to vector<8x128xf32>
    %182 = arith.subf %161, %181 : vector<8x128xf32>
    %cst_59 = arith.constant 9.99999996E-13 : f32
    %183 = vector.broadcast %cst_59 : f32 to vector<8x1xf32>
    %184 = arith.addf %180, %183 : vector<8x1xf32>
    %185 = math.rsqrt %184 : vector<8x1xf32>
    %186 = vector.broadcast %185 : vector<8x1xf32> to vector<8x128xf32>
    %187 = arith.mulf %182, %186 : vector<8x128xf32>
    %188 = vector.broadcast %164 : vector<1x128xf32> to vector<8x128xf32>
    %189 = arith.mulf %187, %188 : vector<8x128xf32>
    %190 = vector.broadcast %167 : vector<1x128xf32> to vector<8x128xf32>
    %191 = arith.addf %189, %190 : vector<8x128xf32>
    %192 = arith.truncf %191 : vector<8x128xf32> to vector<8x128xbf16>
    %193 = arith.index_cast %c0_i32 : i32 to index
    %c0_60 = arith.constant 0 : index
    %c0_61 = arith.constant 0 : index
    %194 = vector.load %arg11[%193, %c0_60, %c0_61] : memref<2x128x256xbf16, #tpu.memory_space<vmem>>, vector<1x128x256xbf16>
    %195 = vector.shape_cast %194 : vector<1x128x256xbf16> to vector<128x256xbf16>
    %cst_62 = arith.constant dense<0.000000e+00> : vector<8x256xf32>
    %196 = tpu.matmul %192, %195, %cst_62 {dimension_numbers = #tpu.dot_dimension_numbers<[1], [0], [0], [1], [0, 0, 1, 1], [], []>} : vector<8x128xbf16>, vector<128x256xbf16>, vector<8x256xf32> -> vector<8x256xf32>
    %197 = arith.index_cast %c0_i32 : i32 to index
    %c0_63 = arith.constant 0 : index
    %c0_64 = arith.constant 0 : index
    %198 = vector.load %arg12[%197, %c0_63, %c0_64] : memref<2x1x256xf32, #tpu.memory_space<vmem>>, vector<1x1x256xf32>
    %199 = vector.shape_cast %198 : vector<1x1x256xf32> to vector<1x256xf32>
    %200 = vector.broadcast %199 : vector<1x256xf32> to vector<8x256xf32>
    %201 = arith.addf %196, %200 : vector<8x256xf32>
    %cst_65 = arith.constant 5.000000e-01 : f32
    %202 = vector.broadcast %cst_65 : f32 to vector<8x256xf32>
    %203 = arith.mulf %202, %201 : vector<8x256xf32>
    %cst_66 = arith.constant 4.471500e-02 : f32
    %204 = vector.broadcast %cst_66 : f32 to vector<8x256xf32>
    %205 = arith.mulf %204, %201 : vector<8x256xf32>
    %206 = arith.mulf %205, %201 : vector<8x256xf32>
    %207 = arith.mulf %206, %201 : vector<8x256xf32>
    %208 = arith.addf %201, %207 : vector<8x256xf32>
    %cst_67 = arith.constant 0.797884583 : f32
    %209 = vector.broadcast %cst_67 : f32 to vector<8x256xf32>
    %210 = arith.mulf %209, %208 : vector<8x256xf32>
    %211 = math.tanh %210 : vector<8x256xf32>
    %cst_68 = arith.constant 1.000000e+00 : f32
    %212 = vector.broadcast %cst_68 : f32 to vector<8x256xf32>
    %213 = arith.addf %212, %211 : vector<8x256xf32>
    %214 = arith.mulf %203, %213 : vector<8x256xf32>
    %215 = arith.truncf %214 : vector<8x256xf32> to vector<8x256xbf16>
    %216 = arith.index_cast %c0_i32 : i32 to index
    %c0_69 = arith.constant 0 : index
    %c0_70 = arith.constant 0 : index
    %217 = vector.load %arg13[%216, %c0_69, %c0_70] : memref<2x256x128xbf16, #tpu.memory_space<vmem>>, vector<1x256x128xbf16>
    %218 = vector.shape_cast %217 : vector<1x256x128xbf16> to vector<256x128xbf16>
    %cst_71 = arith.constant dense<0.000000e+00> : vector<8x128xf32>
    %219 = tpu.matmul %215, %218, %cst_71 {dimension_numbers = #tpu.dot_dimension_numbers<[1], [0], [0], [1], [0, 0, 1, 1], [], []>} : vector<8x256xbf16>, vector<256x128xbf16>, vector<8x128xf32> -> vector<8x128xf32>
    %220 = arith.index_cast %c0_i32 : i32 to index
    %c0_72 = arith.constant 0 : index
    %c0_73 = arith.constant 0 : index
    %221 = vector.load %arg14[%220, %c0_72, %c0_73] : memref<2x1x128xf32, #tpu.memory_space<vmem>>, vector<1x1x128xf32>
    %222 = vector.shape_cast %221 : vector<1x1x128xf32> to vector<1x128xf32>
    %223 = vector.broadcast %222 : vector<1x128xf32> to vector<8x128xf32>
    %224 = arith.addf %219, %223 : vector<8x128xf32>
    %225 = arith.addf %191, %224 : vector<8x128xf32>
    %226 = arith.index_cast %c0_i32 : i32 to index
    %c0_74 = arith.constant 0 : index
    %c0_75 = arith.constant 0 : index
    %227 = vector.load %arg15[%226, %c0_74, %c0_75] : memref<2x1x128xf32, #tpu.memory_space<vmem>>, vector<1x1x128xf32>
    %228 = vector.shape_cast %227 : vector<1x1x128xf32> to vector<1x128xf32>
    %229 = arith.index_cast %c0_i32 : i32 to index
    %c0_76 = arith.constant 0 : index
    %c0_77 = arith.constant 0 : index
    %230 = vector.load %arg16[%229, %c0_76, %c0_77] : memref<2x1x128xf32, #tpu.memory_space<vmem>>, vector<1x1x128xf32>
    %231 = vector.shape_cast %230 : vector<1x1x128xf32> to vector<1x128xf32>
    %cst_78 = arith.constant dense<0.000000e+00> : vector<8xf32>
    %232 = vector.multi_reduction <add>, %225, %cst_78 [1] : vector<8x128xf32> to vector<8xf32>
    %233 = vector.shape_cast %232 : vector<8xf32> to vector<8x1xf32>
    %cst_79 = arith.constant 1.280000e+02 : f32
    %234 = vector.broadcast %cst_79 : f32 to vector<8x1xf32>
    %235 = arith.divf %233, %234 : vector<8x1xf32>
    %236 = arith.mulf %225, %225 : vector<8x128xf32>
    %cst_80 = arith.constant dense<0.000000e+00> : vector<8xf32>
    %237 = vector.multi_reduction <add>, %236, %cst_80 [1] : vector<8x128xf32> to vector<8xf32>
    %238 = vector.shape_cast %237 : vector<8xf32> to vector<8x1xf32>
    %cst_81 = arith.constant 1.280000e+02 : f32
    %239 = vector.broadcast %cst_81 : f32 to vector<8x1xf32>
    %240 = arith.divf %238, %239 : vector<8x1xf32>
    %241 = arith.mulf %235, %235 : vector<8x1xf32>
    %242 = arith.subf %240, %241 : vector<8x1xf32>
    %cst_82 = arith.constant 0.000000e+00 : f32
    %243 = vector.broadcast %cst_82 : f32 to vector<8x1xf32>
    %244 = arith.maximumf %242, %243 : vector<8x1xf32>
    %245 = vector.broadcast %235 : vector<8x1xf32> to vector<8x128xf32>
    %246 = arith.subf %225, %245 : vector<8x128xf32>
    %cst_83 = arith.constant 9.99999996E-13 : f32
    %247 = vector.broadcast %cst_83 : f32 to vector<8x1xf32>
    %248 = arith.addf %244, %247 : vector<8x1xf32>
    %249 = math.rsqrt %248 : vector<8x1xf32>
    %250 = vector.broadcast %249 : vector<8x1xf32> to vector<8x128xf32>
    %251 = arith.mulf %246, %250 : vector<8x128xf32>
    %252 = vector.broadcast %228 : vector<1x128xf32> to vector<8x128xf32>
    %253 = arith.mulf %251, %252 : vector<8x128xf32>
    %254 = vector.broadcast %231 : vector<1x128xf32> to vector<8x128xf32>
    %255 = arith.addf %253, %254 : vector<8x128xf32>
    %c1_i32 = arith.constant 1 : i32
    %256 = arith.truncf %255 : vector<8x128xf32> to vector<8x128xbf16>
    %257 = arith.index_cast %c1_i32 : i32 to index
    %c0_84 = arith.constant 0 : index
    %c0_85 = arith.constant 0 : index
    %258 = vector.load %arg5[%257, %c0_84, %c0_85] : memref<2x128x384xbf16, #tpu.memory_space<vmem>>, vector<1x128x384xbf16>
    %259 = vector.shape_cast %258 : vector<1x128x384xbf16> to vector<128x384xbf16>
    %cst_86 = arith.constant dense<0.000000e+00> : vector<8x384xf32>
    %260 = tpu.matmul %256, %259, %cst_86 {dimension_numbers = #tpu.dot_dimension_numbers<[1], [0], [0], [1], [0, 0, 1, 1], [], []>} : vector<8x128xbf16>, vector<128x384xbf16>, vector<8x384xf32> -> vector<8x384xf32>
    %261 = arith.index_cast %c1_i32 : i32 to index
    %c0_87 = arith.constant 0 : index
    %c0_88 = arith.constant 0 : index
    %262 = vector.load %arg6[%261, %c0_87, %c0_88] : memref<2x1x384xf32, #tpu.memory_space<vmem>>, vector<1x1x384xf32>
    %263 = vector.shape_cast %262 : vector<1x1x384xf32> to vector<1x384xf32>
    %264 = vector.broadcast %263 : vector<1x384xf32> to vector<8x384xf32>
    %265 = arith.addf %260, %264 : vector<8x384xf32>
    %266 = arith.index_cast %c1_i32 : i32 to index
    %c0_89 = arith.constant 0 : index
    %c0_90 = arith.constant 0 : index
    %267 = vector.load %arg7[%266, %c0_89, %c0_90] : memref<2x128x128xbf16, #tpu.memory_space<vmem>>, vector<1x128x128xbf16>
    %268 = vector.shape_cast %267 : vector<1x128x128xbf16> to vector<128x128xbf16>
    %cst_91 = arith.constant 0.000000e+00 : f32
    %269 = vector.broadcast %cst_91 : f32 to vector<8x128xf32>
    %270 = vector.extract_strided_slice %265 {offsets = [0, 0], sizes = [8, 32], strides = [1, 1]} : vector<8x384xf32> to vector<8x32xf32>
    %271 = arith.truncf %270 : vector<8x32xf32> to vector<8x32xbf16>
    %272 = vector.extract_strided_slice %265 {offsets = [0, 128], sizes = [8, 32], strides = [1, 1]} : vector<8x384xf32> to vector<8x32xf32>
    %273 = arith.truncf %272 : vector<8x32xf32> to vector<8x32xbf16>
    %274 = vector.extract_strided_slice %265 {offsets = [0, 256], sizes = [8, 32], strides = [1, 1]} : vector<8x384xf32> to vector<8x32xf32>
    %275 = arith.truncf %274 : vector<8x32xf32> to vector<8x32xbf16>
    "tpu.trace_start"() <{level = 10 : i32, message = "qd,kd->qk"}> : () -> ()
    %cst_92 = arith.constant dense<0.000000e+00> : vector<8x8xf32>
    %276 = tpu.matmul %271, %273, %cst_92 {dimension_numbers = #tpu.dot_dimension_numbers<[1], [1], [0], [0], [0, 0, 1, 0], [], []>} : vector<8x32xbf16>, vector<8x32xbf16>, vector<8x8xf32> -> vector<8x8xf32>
    "tpu.trace_stop"() : () -> ()
    %cst_93 = arith.constant 0.176776692 : f32
    %277 = vector.broadcast %cst_93 : f32 to vector<8x8xf32>
    %278 = arith.mulf %276, %277 : vector<8x8xf32>
    %279 = vector.broadcast %33 : vector<1x8xf32> to vector<8x8xf32>
    %280 = arith.addf %278, %279 : vector<8x8xf32>
    %cst_94 = arith.constant dense<0xFF800000> : vector<8xf32>
    %281 = vector.multi_reduction <maximumf>, %280, %cst_94 [1] : vector<8x8xf32> to vector<8xf32>
    %282 = vector.shape_cast %281 : vector<8xf32> to vector<8x1xf32>
    %283 = vector.broadcast %282 : vector<8x1xf32> to vector<8x8xf32>
    %284 = arith.subf %280, %283 : vector<8x8xf32>
    %285 = math.exp %284 : vector<8x8xf32>
    %cst_95 = arith.constant dense<0.000000e+00> : vector<8xf32>
    %286 = vector.multi_reduction <add>, %285, %cst_95 [1] : vector<8x8xf32> to vector<8xf32>
    %287 = vector.shape_cast %286 : vector<8xf32> to vector<8x1xf32>
    %288 = tpu.reciprocal %287 {approx = true} : vector<8x1xf32> -> vector<8x1xf32>
    %289 = vector.broadcast %288 : vector<8x1xf32> to vector<8x8xf32>
    %290 = arith.mulf %285, %289 : vector<8x8xf32>
    %291 = arith.truncf %290 : vector<8x8xf32> to vector<8x8xbf16>
    "tpu.trace_start"() <{level = 10 : i32, message = "qk,kd->qd"}> : () -> ()
    %cst_96 = arith.constant dense<0.000000e+00> : vector<8x32xf32>
    %292 = tpu.matmul %291, %275, %cst_96 {dimension_numbers = #tpu.dot_dimension_numbers<[1], [0], [0], [1], [0, 0, 1, 1], [], []>} : vector<8x8xbf16>, vector<8x32xbf16>, vector<8x32xf32> -> vector<8x32xf32>
    "tpu.trace_stop"() : () -> ()
    %293 = arith.truncf %292 : vector<8x32xf32> to vector<8x32xbf16>
    %294 = vector.extract_strided_slice %268 {offsets = [0, 0], sizes = [32, 128], strides = [1, 1]} : vector<128x128xbf16> to vector<32x128xbf16>
    %cst_97 = arith.constant dense<0.000000e+00> : vector<8x128xf32>
    %295 = tpu.matmul %293, %294, %cst_97 {dimension_numbers = #tpu.dot_dimension_numbers<[1], [0], [0], [1], [0, 0, 1, 1], [], []>} : vector<8x32xbf16>, vector<32x128xbf16>, vector<8x128xf32> -> vector<8x128xf32>
    %296 = arith.addf %269, %295 : vector<8x128xf32>
    %297 = vector.extract_strided_slice %265 {offsets = [0, 32], sizes = [8, 32], strides = [1, 1]} : vector<8x384xf32> to vector<8x32xf32>
    %298 = arith.truncf %297 : vector<8x32xf32> to vector<8x32xbf16>
    %299 = vector.extract_strided_slice %265 {offsets = [0, 160], sizes = [8, 32], strides = [1, 1]} : vector<8x384xf32> to vector<8x32xf32>
    %300 = arith.truncf %299 : vector<8x32xf32> to vector<8x32xbf16>
    %301 = vector.extract_strided_slice %265 {offsets = [0, 288], sizes = [8, 32], strides = [1, 1]} : vector<8x384xf32> to vector<8x32xf32>
    %302 = arith.truncf %301 : vector<8x32xf32> to vector<8x32xbf16>
    "tpu.trace_start"() <{level = 10 : i32, message = "qd,kd->qk"}> : () -> ()
    %cst_98 = arith.constant dense<0.000000e+00> : vector<8x8xf32>
    %303 = tpu.matmul %298, %300, %cst_98 {dimension_numbers = #tpu.dot_dimension_numbers<[1], [1], [0], [0], [0, 0, 1, 0], [], []>} : vector<8x32xbf16>, vector<8x32xbf16>, vector<8x8xf32> -> vector<8x8xf32>
    "tpu.trace_stop"() : () -> ()
    %cst_99 = arith.constant 0.176776692 : f32
    %304 = vector.broadcast %cst_99 : f32 to vector<8x8xf32>
    %305 = arith.mulf %303, %304 : vector<8x8xf32>
    %306 = vector.broadcast %33 : vector<1x8xf32> to vector<8x8xf32>
    %307 = arith.addf %305, %306 : vector<8x8xf32>
    %cst_100 = arith.constant dense<0xFF800000> : vector<8xf32>
    %308 = vector.multi_reduction <maximumf>, %307, %cst_100 [1] : vector<8x8xf32> to vector<8xf32>
    %309 = vector.shape_cast %308 : vector<8xf32> to vector<8x1xf32>
    %310 = vector.broadcast %309 : vector<8x1xf32> to vector<8x8xf32>
    %311 = arith.subf %307, %310 : vector<8x8xf32>
    %312 = math.exp %311 : vector<8x8xf32>
    %cst_101 = arith.constant dense<0.000000e+00> : vector<8xf32>
    %313 = vector.multi_reduction <add>, %312, %cst_101 [1] : vector<8x8xf32> to vector<8xf32>
    %314 = vector.shape_cast %313 : vector<8xf32> to vector<8x1xf32>
    %315 = tpu.reciprocal %314 {approx = true} : vector<8x1xf32> -> vector<8x1xf32>
    %316 = vector.broadcast %315 : vector<8x1xf32> to vector<8x8xf32>
    %317 = arith.mulf %312, %316 : vector<8x8xf32>
    %318 = arith.truncf %317 : vector<8x8xf32> to vector<8x8xbf16>
    "tpu.trace_start"() <{level = 10 : i32, message = "qk,kd->qd"}> : () -> ()
    %cst_102 = arith.constant dense<0.000000e+00> : vector<8x32xf32>
    %319 = tpu.matmul %318, %302, %cst_102 {dimension_numbers = #tpu.dot_dimension_numbers<[1], [0], [0], [1], [0, 0, 1, 1], [], []>} : vector<8x8xbf16>, vector<8x32xbf16>, vector<8x32xf32> -> vector<8x32xf32>
    "tpu.trace_stop"() : () -> ()
    %320 = arith.truncf %319 : vector<8x32xf32> to vector<8x32xbf16>
    %321 = vector.extract_strided_slice %268 {offsets = [32, 0], sizes = [32, 128], strides = [1, 1]} : vector<128x128xbf16> to vector<32x128xbf16>
    %cst_103 = arith.constant dense<0.000000e+00> : vector<8x128xf32>
    %322 = tpu.matmul %320, %321, %cst_103 {dimension_numbers = #tpu.dot_dimension_numbers<[1], [0], [0], [1], [0, 0, 1, 1], [], []>} : vector<8x32xbf16>, vector<32x128xbf16>, vector<8x128xf32> -> vector<8x128xf32>
    %323 = arith.addf %296, %322 : vector<8x128xf32>
    %324 = vector.extract_strided_slice %265 {offsets = [0, 64], sizes = [8, 32], strides = [1, 1]} : vector<8x384xf32> to vector<8x32xf32>
    %325 = arith.truncf %324 : vector<8x32xf32> to vector<8x32xbf16>
    %326 = vector.extract_strided_slice %265 {offsets = [0, 192], sizes = [8, 32], strides = [1, 1]} : vector<8x384xf32> to vector<8x32xf32>
    %327 = arith.truncf %326 : vector<8x32xf32> to vector<8x32xbf16>
    %328 = vector.extract_strided_slice %265 {offsets = [0, 320], sizes = [8, 32], strides = [1, 1]} : vector<8x384xf32> to vector<8x32xf32>
    %329 = arith.truncf %328 : vector<8x32xf32> to vector<8x32xbf16>
    "tpu.trace_start"() <{level = 10 : i32, message = "qd,kd->qk"}> : () -> ()
    %cst_104 = arith.constant dense<0.000000e+00> : vector<8x8xf32>
    %330 = tpu.matmul %325, %327, %cst_104 {dimension_numbers = #tpu.dot_dimension_numbers<[1], [1], [0], [0], [0, 0, 1, 0], [], []>} : vector<8x32xbf16>, vector<8x32xbf16>, vector<8x8xf32> -> vector<8x8xf32>
    "tpu.trace_stop"() : () -> ()
    %cst_105 = arith.constant 0.176776692 : f32
    %331 = vector.broadcast %cst_105 : f32 to vector<8x8xf32>
    %332 = arith.mulf %330, %331 : vector<8x8xf32>
    %333 = vector.broadcast %33 : vector<1x8xf32> to vector<8x8xf32>
    %334 = arith.addf %332, %333 : vector<8x8xf32>
    %cst_106 = arith.constant dense<0xFF800000> : vector<8xf32>
    %335 = vector.multi_reduction <maximumf>, %334, %cst_106 [1] : vector<8x8xf32> to vector<8xf32>
    %336 = vector.shape_cast %335 : vector<8xf32> to vector<8x1xf32>
    %337 = vector.broadcast %336 : vector<8x1xf32> to vector<8x8xf32>
    %338 = arith.subf %334, %337 : vector<8x8xf32>
    %339 = math.exp %338 : vector<8x8xf32>
    %cst_107 = arith.constant dense<0.000000e+00> : vector<8xf32>
    %340 = vector.multi_reduction <add>, %339, %cst_107 [1] : vector<8x8xf32> to vector<8xf32>
    %341 = vector.shape_cast %340 : vector<8xf32> to vector<8x1xf32>
    %342 = tpu.reciprocal %341 {approx = true} : vector<8x1xf32> -> vector<8x1xf32>
    %343 = vector.broadcast %342 : vector<8x1xf32> to vector<8x8xf32>
    %344 = arith.mulf %339, %343 : vector<8x8xf32>
    %345 = arith.truncf %344 : vector<8x8xf32> to vector<8x8xbf16>
    "tpu.trace_start"() <{level = 10 : i32, message = "qk,kd->qd"}> : () -> ()
    %cst_108 = arith.constant dense<0.000000e+00> : vector<8x32xf32>
    %346 = tpu.matmul %345, %329, %cst_108 {dimension_numbers = #tpu.dot_dimension_numbers<[1], [0], [0], [1], [0, 0, 1, 1], [], []>} : vector<8x8xbf16>, vector<8x32xbf16>, vector<8x32xf32> -> vector<8x32xf32>
    "tpu.trace_stop"() : () -> ()
    %347 = arith.truncf %346 : vector<8x32xf32> to vector<8x32xbf16>
    %348 = vector.extract_strided_slice %268 {offsets = [64, 0], sizes = [32, 128], strides = [1, 1]} : vector<128x128xbf16> to vector<32x128xbf16>
    %cst_109 = arith.constant dense<0.000000e+00> : vector<8x128xf32>
    %349 = tpu.matmul %347, %348, %cst_109 {dimension_numbers = #tpu.dot_dimension_numbers<[1], [0], [0], [1], [0, 0, 1, 1], [], []>} : vector<8x32xbf16>, vector<32x128xbf16>, vector<8x128xf32> -> vector<8x128xf32>
    %350 = arith.addf %323, %349 : vector<8x128xf32>
    %351 = vector.extract_strided_slice %265 {offsets = [0, 96], sizes = [8, 32], strides = [1, 1]} : vector<8x384xf32> to vector<8x32xf32>
    %352 = arith.truncf %351 : vector<8x32xf32> to vector<8x32xbf16>
    %353 = vector.extract_strided_slice %265 {offsets = [0, 224], sizes = [8, 32], strides = [1, 1]} : vector<8x384xf32> to vector<8x32xf32>
    %354 = arith.truncf %353 : vector<8x32xf32> to vector<8x32xbf16>
    %355 = vector.extract_strided_slice %265 {offsets = [0, 352], sizes = [8, 32], strides = [1, 1]} : vector<8x384xf32> to vector<8x32xf32>
    %356 = arith.truncf %355 : vector<8x32xf32> to vector<8x32xbf16>
    "tpu.trace_start"() <{level = 10 : i32, message = "qd,kd->qk"}> : () -> ()
    %cst_110 = arith.constant dense<0.000000e+00> : vector<8x8xf32>
    %357 = tpu.matmul %352, %354, %cst_110 {dimension_numbers = #tpu.dot_dimension_numbers<[1], [1], [0], [0], [0, 0, 1, 0], [], []>} : vector<8x32xbf16>, vector<8x32xbf16>, vector<8x8xf32> -> vector<8x8xf32>
    "tpu.trace_stop"() : () -> ()
    %cst_111 = arith.constant 0.176776692 : f32
    %358 = vector.broadcast %cst_111 : f32 to vector<8x8xf32>
    %359 = arith.mulf %357, %358 : vector<8x8xf32>
    %360 = vector.broadcast %33 : vector<1x8xf32> to vector<8x8xf32>
    %361 = arith.addf %359, %360 : vector<8x8xf32>
    %cst_112 = arith.constant dense<0xFF800000> : vector<8xf32>
    %362 = vector.multi_reduction <maximumf>, %361, %cst_112 [1] : vector<8x8xf32> to vector<8xf32>
    %363 = vector.shape_cast %362 : vector<8xf32> to vector<8x1xf32>
    %364 = vector.broadcast %363 : vector<8x1xf32> to vector<8x8xf32>
    %365 = arith.subf %361, %364 : vector<8x8xf32>
    %366 = math.exp %365 : vector<8x8xf32>
    %cst_113 = arith.constant dense<0.000000e+00> : vector<8xf32>
    %367 = vector.multi_reduction <add>, %366, %cst_113 [1] : vector<8x8xf32> to vector<8xf32>
    %368 = vector.shape_cast %367 : vector<8xf32> to vector<8x1xf32>
    %369 = tpu.reciprocal %368 {approx = true} : vector<8x1xf32> -> vector<8x1xf32>
    %370 = vector.broadcast %369 : vector<8x1xf32> to vector<8x8xf32>
    %371 = arith.mulf %366, %370 : vector<8x8xf32>
    %372 = arith.truncf %371 : vector<8x8xf32> to vector<8x8xbf16>
    "tpu.trace_start"() <{level = 10 : i32, message = "qk,kd->qd"}> : () -> ()
    %cst_114 = arith.constant dense<0.000000e+00> : vector<8x32xf32>
    %373 = tpu.matmul %372, %356, %cst_114 {dimension_numbers = #tpu.dot_dimension_numbers<[1], [0], [0], [1], [0, 0, 1, 1], [], []>} : vector<8x8xbf16>, vector<8x32xbf16>, vector<8x32xf32> -> vector<8x32xf32>
    "tpu.trace_stop"() : () -> ()
    %374 = arith.truncf %373 : vector<8x32xf32> to vector<8x32xbf16>
    %375 = vector.extract_strided_slice %268 {offsets = [96, 0], sizes = [32, 128], strides = [1, 1]} : vector<128x128xbf16> to vector<32x128xbf16>
    %cst_115 = arith.constant dense<0.000000e+00> : vector<8x128xf32>
    %376 = tpu.matmul %374, %375, %cst_115 {dimension_numbers = #tpu.dot_dimension_numbers<[1], [0], [0], [1], [0, 0, 1, 1], [], []>} : vector<8x32xbf16>, vector<32x128xbf16>, vector<8x128xf32> -> vector<8x128xf32>
    %377 = arith.addf %350, %376 : vector<8x128xf32>
    %378 = arith.index_cast %c1_i32 : i32 to index
    %c0_116 = arith.constant 0 : index
    %c0_117 = arith.constant 0 : index
    %379 = vector.load %arg8[%378, %c0_116, %c0_117] : memref<2x1x128xf32, #tpu.memory_space<vmem>>, vector<1x1x128xf32>
    %380 = vector.shape_cast %379 : vector<1x1x128xf32> to vector<1x128xf32>
    %381 = vector.broadcast %380 : vector<1x128xf32> to vector<8x128xf32>
    %382 = arith.addf %377, %381 : vector<8x128xf32>
    %383 = arith.addf %255, %382 : vector<8x128xf32>
    %384 = arith.index_cast %c1_i32 : i32 to index
    %c0_118 = arith.constant 0 : index
    %c0_119 = arith.constant 0 : index
    %385 = vector.load %arg9[%384, %c0_118, %c0_119] : memref<2x1x128xf32, #tpu.memory_space<vmem>>, vector<1x1x128xf32>
    %386 = vector.shape_cast %385 : vector<1x1x128xf32> to vector<1x128xf32>
    %387 = arith.index_cast %c1_i32 : i32 to index
    %c0_120 = arith.constant 0 : index
    %c0_121 = arith.constant 0 : index
    %388 = vector.load %arg10[%387, %c0_120, %c0_121] : memref<2x1x128xf32, #tpu.memory_space<vmem>>, vector<1x1x128xf32>
    %389 = vector.shape_cast %388 : vector<1x1x128xf32> to vector<1x128xf32>
    %cst_122 = arith.constant dense<0.000000e+00> : vector<8xf32>
    %390 = vector.multi_reduction <add>, %383, %cst_122 [1] : vector<8x128xf32> to vector<8xf32>
    %391 = vector.shape_cast %390 : vector<8xf32> to vector<8x1xf32>
    %cst_123 = arith.constant 1.280000e+02 : f32
    %392 = vector.broadcast %cst_123 : f32 to vector<8x1xf32>
    %393 = arith.divf %391, %392 : vector<8x1xf32>
    %394 = arith.mulf %383, %383 : vector<8x128xf32>
    %cst_124 = arith.constant dense<0.000000e+00> : vector<8xf32>
    %395 = vector.multi_reduction <add>, %394, %cst_124 [1] : vector<8x128xf32> to vector<8xf32>
    %396 = vector.shape_cast %395 : vector<8xf32> to vector<8x1xf32>
    %cst_125 = arith.constant 1.280000e+02 : f32
    %397 = vector.broadcast %cst_125 : f32 to vector<8x1xf32>
    %398 = arith.divf %396, %397 : vector<8x1xf32>
    %399 = arith.mulf %393, %393 : vector<8x1xf32>
    %400 = arith.subf %398, %399 : vector<8x1xf32>
    %cst_126 = arith.constant 0.000000e+00 : f32
    %401 = vector.broadcast %cst_126 : f32 to vector<8x1xf32>
    %402 = arith.maximumf %400, %401 : vector<8x1xf32>
    %403 = vector.broadcast %393 : vector<8x1xf32> to vector<8x128xf32>
    %404 = arith.subf %383, %403 : vector<8x128xf32>
    %cst_127 = arith.constant 9.99999996E-13 : f32
    %405 = vector.broadcast %cst_127 : f32 to vector<8x1xf32>
    %406 = arith.addf %402, %405 : vector<8x1xf32>
    %407 = math.rsqrt %406 : vector<8x1xf32>
    %408 = vector.broadcast %407 : vector<8x1xf32> to vector<8x128xf32>
    %409 = arith.mulf %404, %408 : vector<8x128xf32>
    %410 = vector.broadcast %386 : vector<1x128xf32> to vector<8x128xf32>
    %411 = arith.mulf %409, %410 : vector<8x128xf32>
    %412 = vector.broadcast %389 : vector<1x128xf32> to vector<8x128xf32>
    %413 = arith.addf %411, %412 : vector<8x128xf32>
    %414 = arith.truncf %413 : vector<8x128xf32> to vector<8x128xbf16>
    %415 = arith.index_cast %c1_i32 : i32 to index
    %c0_128 = arith.constant 0 : index
    %c0_129 = arith.constant 0 : index
    %416 = vector.load %arg11[%415, %c0_128, %c0_129] : memref<2x128x256xbf16, #tpu.memory_space<vmem>>, vector<1x128x256xbf16>
    %417 = vector.shape_cast %416 : vector<1x128x256xbf16> to vector<128x256xbf16>
    %cst_130 = arith.constant dense<0.000000e+00> : vector<8x256xf32>
    %418 = tpu.matmul %414, %417, %cst_130 {dimension_numbers = #tpu.dot_dimension_numbers<[1], [0], [0], [1], [0, 0, 1, 1], [], []>} : vector<8x128xbf16>, vector<128x256xbf16>, vector<8x256xf32> -> vector<8x256xf32>
    %419 = arith.index_cast %c1_i32 : i32 to index
    %c0_131 = arith.constant 0 : index
    %c0_132 = arith.constant 0 : index
    %420 = vector.load %arg12[%419, %c0_131, %c0_132] : memref<2x1x256xf32, #tpu.memory_space<vmem>>, vector<1x1x256xf32>
    %421 = vector.shape_cast %420 : vector<1x1x256xf32> to vector<1x256xf32>
    %422 = vector.broadcast %421 : vector<1x256xf32> to vector<8x256xf32>
    %423 = arith.addf %418, %422 : vector<8x256xf32>
    %cst_133 = arith.constant 5.000000e-01 : f32
    %424 = vector.broadcast %cst_133 : f32 to vector<8x256xf32>
    %425 = arith.mulf %424, %423 : vector<8x256xf32>
    %cst_134 = arith.constant 4.471500e-02 : f32
    %426 = vector.broadcast %cst_134 : f32 to vector<8x256xf32>
    %427 = arith.mulf %426, %423 : vector<8x256xf32>
    %428 = arith.mulf %427, %423 : vector<8x256xf32>
    %429 = arith.mulf %428, %423 : vector<8x256xf32>
    %430 = arith.addf %423, %429 : vector<8x256xf32>
    %cst_135 = arith.constant 0.797884583 : f32
    %431 = vector.broadcast %cst_135 : f32 to vector<8x256xf32>
    %432 = arith.mulf %431, %430 : vector<8x256xf32>
    %433 = math.tanh %432 : vector<8x256xf32>
    %cst_136 = arith.constant 1.000000e+00 : f32
    %434 = vector.broadcast %cst_136 : f32 to vector<8x256xf32>
    %435 = arith.addf %434, %433 : vector<8x256xf32>
    %436 = arith.mulf %425, %435 : vector<8x256xf32>
    %437 = arith.truncf %436 : vector<8x256xf32> to vector<8x256xbf16>
    %438 = arith.index_cast %c1_i32 : i32 to index
    %c0_137 = arith.constant 0 : index
    %c0_138 = arith.constant 0 : index
    %439 = vector.load %arg13[%438, %c0_137, %c0_138] : memref<2x256x128xbf16, #tpu.memory_space<vmem>>, vector<1x256x128xbf16>
    %440 = vector.shape_cast %439 : vector<1x256x128xbf16> to vector<256x128xbf16>
    %cst_139 = arith.constant dense<0.000000e+00> : vector<8x128xf32>
    %441 = tpu.matmul %437, %440, %cst_139 {dimension_numbers = #tpu.dot_dimension_numbers<[1], [0], [0], [1], [0, 0, 1, 1], [], []>} : vector<8x256xbf16>, vector<256x128xbf16>, vector<8x128xf32> -> vector<8x128xf32>
    %442 = arith.index_cast %c1_i32 : i32 to index
    %c0_140 = arith.constant 0 : index
    %c0_141 = arith.constant 0 : index
    %443 = vector.load %arg14[%442, %c0_140, %c0_141] : memref<2x1x128xf32, #tpu.memory_space<vmem>>, vector<1x1x128xf32>
    %444 = vector.shape_cast %443 : vector<1x1x128xf32> to vector<1x128xf32>
    %445 = vector.broadcast %444 : vector<1x128xf32> to vector<8x128xf32>
    %446 = arith.addf %441, %445 : vector<8x128xf32>
    %447 = arith.addf %413, %446 : vector<8x128xf32>
    %448 = arith.index_cast %c1_i32 : i32 to index
    %c0_142 = arith.constant 0 : index
    %c0_143 = arith.constant 0 : index
    %449 = vector.load %arg15[%448, %c0_142, %c0_143] : memref<2x1x128xf32, #tpu.memory_space<vmem>>, vector<1x1x128xf32>
    %450 = vector.shape_cast %449 : vector<1x1x128xf32> to vector<1x128xf32>
    %451 = arith.index_cast %c1_i32 : i32 to index
    %c0_144 = arith.constant 0 : index
    %c0_145 = arith.constant 0 : index
    %452 = vector.load %arg16[%451, %c0_144, %c0_145] : memref<2x1x128xf32, #tpu.memory_space<vmem>>, vector<1x1x128xf32>
    %453 = vector.shape_cast %452 : vector<1x1x128xf32> to vector<1x128xf32>
    %cst_146 = arith.constant dense<0.000000e+00> : vector<8xf32>
    %454 = vector.multi_reduction <add>, %447, %cst_146 [1] : vector<8x128xf32> to vector<8xf32>
    %455 = vector.shape_cast %454 : vector<8xf32> to vector<8x1xf32>
    %cst_147 = arith.constant 1.280000e+02 : f32
    %456 = vector.broadcast %cst_147 : f32 to vector<8x1xf32>
    %457 = arith.divf %455, %456 : vector<8x1xf32>
    %458 = arith.mulf %447, %447 : vector<8x128xf32>
    %cst_148 = arith.constant dense<0.000000e+00> : vector<8xf32>
    %459 = vector.multi_reduction <add>, %458, %cst_148 [1] : vector<8x128xf32> to vector<8xf32>
    %460 = vector.shape_cast %459 : vector<8xf32> to vector<8x1xf32>
    %cst_149 = arith.constant 1.280000e+02 : f32
    %461 = vector.broadcast %cst_149 : f32 to vector<8x1xf32>
    %462 = arith.divf %460, %461 : vector<8x1xf32>
    %463 = arith.mulf %457, %457 : vector<8x1xf32>
    %464 = arith.subf %462, %463 : vector<8x1xf32>
    %cst_150 = arith.constant 0.000000e+00 : f32
    %465 = vector.broadcast %cst_150 : f32 to vector<8x1xf32>
    %466 = arith.maximumf %464, %465 : vector<8x1xf32>
    %467 = vector.broadcast %457 : vector<8x1xf32> to vector<8x128xf32>
    %468 = arith.subf %447, %467 : vector<8x128xf32>
    %cst_151 = arith.constant 9.99999996E-13 : f32
    %469 = vector.broadcast %cst_151 : f32 to vector<8x1xf32>
    %470 = arith.addf %466, %469 : vector<8x1xf32>
    %471 = math.rsqrt %470 : vector<8x1xf32>
    %472 = vector.broadcast %471 : vector<8x1xf32> to vector<8x128xf32>
    %473 = arith.mulf %468, %472 : vector<8x128xf32>
    %474 = vector.broadcast %450 : vector<1x128xf32> to vector<8x128xf32>
    %475 = arith.mulf %473, %474 : vector<8x128xf32>
    %476 = vector.broadcast %453 : vector<1x128xf32> to vector<8x128xf32>
    %477 = arith.addf %475, %476 : vector<8x128xf32>
    %c2_i32 = arith.constant 2 : i32
    %478 = vector.extract_strided_slice %477 {offsets = [0, 0], sizes = [1, 128], strides = [1, 1]} : vector<8x128xf32> to vector<1x128xf32>
    %479 = arith.truncf %478 : vector<1x128xf32> to vector<1x128xbf16>
    %c0_152 = arith.constant 0 : index
    %c0_153 = arith.constant 0 : index
    %480 = vector.load %arg17[%c0_152, %c0_153] : memref<128x128xbf16, #tpu.memory_space<vmem>>, vector<128x128xbf16>
    %cst_154 = arith.constant dense<0.000000e+00> : vector<1x128xf32>
    %481 = tpu.matmul %479, %480, %cst_154 {dimension_numbers = #tpu.dot_dimension_numbers<[1], [0], [0], [1], [0, 0, 1, 1], [], []>} : vector<1x128xbf16>, vector<128x128xbf16>, vector<1x128xf32> -> vector<1x128xf32>
    %c0_155 = arith.constant 0 : index
    %c0_156 = arith.constant 0 : index
    %482 = vector.load %arg18[%c0_155, %c0_156] : memref<1x128xf32, #tpu.memory_space<vmem>>, vector<1x128xf32>
    %483 = arith.addf %481, %482 : vector<1x128xf32>
    %484 = math.tanh %483 : vector<1x128xf32>
    %485 = arith.truncf %484 : vector<1x128xf32> to vector<1x128xbf16>
    %c0_157 = arith.constant 0 : index
    %c0_158 = arith.constant 0 : index
    %486 = vector.load %arg19[%c0_157, %c0_158] : memref<128x128xbf16, #tpu.memory_space<vmem>>, vector<128x128xbf16>
    %cst_159 = arith.constant dense<0.000000e+00> : vector<1x128xf32>
    %487 = tpu.matmul %485, %486, %cst_159 {dimension_numbers = #tpu.dot_dimension_numbers<[1], [0], [0], [1], [0, 0, 1, 1], [], []>} : vector<1x128xbf16>, vector<128x128xbf16>, vector<1x128xf32> -> vector<1x128xf32>
    %c0_160 = arith.constant 0 : index
    %c0_161 = arith.constant 0 : index
    %488 = vector.load %arg20[%c0_160, %c0_161] : memref<1x128xf32, #tpu.memory_space<vmem>>, vector<1x128xf32>
    %489 = arith.addf %487, %488 : vector<1x128xf32>
    %c0_162 = arith.constant 0 : index
    %c0_163 = arith.constant 0 : index
    %c0_164 = arith.constant 0 : index
    %490 = vector.load %arg21[%c0_162, %c0_163, %c0_164] : memref<1x1x128xf32, #tpu.memory_space<vmem>>, vector<1x1x128xf32>
    %491 = vector.shape_cast %490 : vector<1x1x128xf32> to vector<1x128xf32>
    %492 = vector.shape_cast %489 : vector<1x128xf32> to vector<1x1x128xf32>
    tpu.vector_store %arg21[%c0_162, %c0_163, %c0_164], %492 {strides = array<i32>} : memref<1x1x128xf32, #tpu.memory_space<vmem>>, vector<1x1x128xf32>,
    return
  }
  func.func @transform_0(%arg0: i32) -> (i32, i32, i32) {
    %c0_i32 = arith.constant 0 : i32
    %c0_i32_0 = arith.constant 0 : i32
    %c0_i32_1 = arith.constant 0 : i32
    return %arg0, %c0_i32, %c0_i32_0 : i32, i32, i32
  }
  func.func @transform_1(%arg0: i32) -> (i32, i32, i32) {
    %c0_i32 = arith.constant 0 : i32
    %c0_i32_0 = arith.constant 0 : i32
    %c0_i32_1 = arith.constant 0 : i32
    return %arg0, %c0_i32, %c0_i32_0 : i32, i32, i32
  }
  func.func @transform_2(%arg0: i32) -> (i32, i32, i32) {
    %c0_i32 = arith.constant 0 : i32
    %c0_i32_0 = arith.constant 0 : i32
    %c0_i32_1 = arith.constant 0 : i32
    %c0_i32_2 = arith.constant 0 : i32
    return %c0_i32, %c0_i32_0, %c0_i32_1 : i32, i32, i32
  }
  func.func @transform_3(%arg0: i32) -> (i32, i32, i32) {
    %c0_i32 = arith.constant 0 : i32
    %c0_i32_0 = arith.constant 0 : i32
    %c0_i32_1 = arith.constant 0 : i32
    %c0_i32_2 = arith.constant 0 : i32
    return %c0_i32, %c0_i32_0, %c0_i32_1 : i32, i32, i32
  }
  func.func @transform_4(%arg0: i32) -> (i32, i32, i32) {
    %c0_i32 = arith.constant 0 : i32
    %c0_i32_0 = arith.constant 0 : i32
    %c0_i32_1 = arith.constant 0 : i32
    %c0_i32_2 = arith.constant 0 : i32
    return %c0_i32, %c0_i32_0, %c0_i32_1 : i32, i32, i32
  }
  func.func @transform_5(%arg0: i32) -> (i32, i32, i32) {
    %c0_i32 = arith.constant 0 : i32
    %c0_i32_0 = arith.constant 0 : i32
    %c0_i32_1 = arith.constant 0 : i32
    %c0_i32_2 = arith.constant 0 : i32
    return %c0_i32, %c0_i32_0, %c0_i32_1 : i32, i32, i32
  }
  func.func @transform_6(%arg0: i32) -> (i32, i32, i32) {
    %c0_i32 = arith.constant 0 : i32
    %c0_i32_0 = arith.constant 0 : i32
    %c0_i32_1 = arith.constant 0 : i32
    %c0_i32_2 = arith.constant 0 : i32
    return %c0_i32, %c0_i32_0, %c0_i32_1 : i32, i32, i32
  }
  func.func @transform_7(%arg0: i32) -> (i32, i32, i32) {
    %c0_i32 = arith.constant 0 : i32
    %c0_i32_0 = arith.constant 0 : i32
    %c0_i32_1 = arith.constant 0 : i32
    %c0_i32_2 = arith.constant 0 : i32
    return %c0_i32, %c0_i32_0, %c0_i32_1 : i32, i32, i32
  }
  func.func @transform_8(%arg0: i32) -> (i32, i32, i32) {
    %c0_i32 = arith.constant 0 : i32
    %c0_i32_0 = arith.constant 0 : i32
    %c0_i32_1 = arith.constant 0 : i32
    %c0_i32_2 = arith.constant 0 : i32
    return %c0_i32, %c0_i32_0, %c0_i32_1 : i32, i32, i32
  }
  func.func @transform_9(%arg0: i32) -> (i32, i32, i32) {
    %c0_i32 = arith.constant 0 : i32
    %c0_i32_0 = arith.constant 0 : i32
    %c0_i32_1 = arith.constant 0 : i32
    %c0_i32_2 = arith.constant 0 : i32
    return %c0_i32, %c0_i32_0, %c0_i32_1 : i32, i32, i32
  }
  func.func @transform_10(%arg0: i32) -> (i32, i32, i32) {
    %c0_i32 = arith.constant 0 : i32
    %c0_i32_0 = arith.constant 0 : i32
    %c0_i32_1 = arith.constant 0 : i32
    %c0_i32_2 = arith.constant 0 : i32
    return %c0_i32, %c0_i32_0, %c0_i32_1 : i32, i32, i32
  }
  func.func @transform_11(%arg0: i32) -> (i32, i32, i32) {
    %c0_i32 = arith.constant 0 : i32
    %c0_i32_0 = arith.constant 0 : i32
    %c0_i32_1 = arith.constant 0 : i32
    %c0_i32_2 = arith.constant 0 : i32
    return %c0_i32, %c0_i32_0, %c0_i32_1 : i32, i32, i32
  }
  func.func @transform_12(%arg0: i32) -> (i32, i32, i32) {
    %c0_i32 = arith.constant 0 : i32
    %c0_i32_0 = arith.constant 0 : i32
    %c0_i32_1 = arith.constant 0 : i32
    %c0_i32_2 = arith.constant 0 : i32
    return %c0_i32, %c0_i32_0, %c0_i32_1 : i32, i32, i32
  }
  func.func @transform_13(%arg0: i32) -> (i32, i32, i32) {
    %c0_i32 = arith.constant 0 : i32
    %c0_i32_0 = arith.constant 0 : i32
    %c0_i32_1 = arith.constant 0 : i32
    %c0_i32_2 = arith.constant 0 : i32
    return %c0_i32, %c0_i32_0, %c0_i32_1 : i32, i32, i32
  }
  func.func @transform_14(%arg0: i32) -> (i32, i32, i32) {
    %c0_i32 = arith.constant 0 : i32
    %c0_i32_0 = arith.constant 0 : i32
    %c0_i32_1 = arith.constant 0 : i32
    %c0_i32_2 = arith.constant 0 : i32
    return %c0_i32, %c0_i32_0, %c0_i32_1 : i32, i32, i32
  }
  func.func @transform_15(%arg0: i32) -> (i32, i32, i32) {
    %c0_i32 = arith.constant 0 : i32
    %c0_i32_0 = arith.constant 0 : i32
    %c0_i32_1 = arith.constant 0 : i32
    %c0_i32_2 = arith.constant 0 : i32
    return %c0_i32, %c0_i32_0, %c0_i32_1 : i32, i32, i32
  }
  func.func @transform_16(%arg0: i32) -> (i32, i32) {
    %c0_i32 = arith.constant 0 : i32
    %c0_i32_0 = arith.constant 0 : i32
    %c0_i32_1 = arith.constant 0 : i32
    return %c0_i32, %c0_i32_0 : i32, i32
  }
  func.func @transform_17(%arg0: i32) -> (i32, i32) {
    %c0_i32 = arith.constant 0 : i32
    %c0_i32_0 = arith.constant 0 : i32
    %c0_i32_1 = arith.constant 0 : i32
    return %c0_i32, %c0_i32_0 : i32, i32
  }
  func.func @transform_18(%arg0: i32) -> (i32, i32) {
    %c0_i32 = arith.constant 0 : i32
    %c0_i32_0 = arith.constant 0 : i32
    %c0_i32_1 = arith.constant 0 : i32
    return %c0_i32, %c0_i32_0 : i32, i32
  }
  func.func @transform_19(%arg0: i32) -> (i32, i32) {
    %c0_i32 = arith.constant 0 : i32
    %c0_i32_0 = arith.constant 0 : i32
    %c0_i32_1 = arith.constant 0 : i32
    return %c0_i32, %c0_i32_0 : i32, i32
  }
  func.func @transform_20(%arg0: i32) -> (i32, i32, i32) {
    %c0_i32 = arith.constant 0 : i32
    %c0_i32_0 = arith.constant 0 : i32
    %c0_i32_1 = arith.constant 0 : i32
    return %arg0, %c0_i32, %c0_i32_0 : i32, i32, i32
  }
}

</mosaic_0001>

<llo_original>
// kernel: bert_classifier_forward.1
$region0: #{bert_classifier_forward.1}
  #allocation0 [shape = 'u32[]', space=smem, size = 0x4, offset = 0x4, fixed_abs, tag = 'smem constant byte address 0x4 - core index']
  #allocation1 [shape = 'u32[144,128]{1,0:T(1,128)}', space=vmem, size = 0x12000, scoped, tag = 'internal scratch']
  %s0 = inlined_call_operand.vmem [shape: f32[2,8,128], index: 0, kind: input, shape index: {}]
  %s1 = inlined_call_operand.vmem [shape: f32[2,1,8], index: 1, kind: input, shape index: {}]
  %s2 = inlined_call_operand.vmem [shape: f32[1,1,128], index: 2, kind: input, shape index: {}]
  %s3 = inlined_call_operand.vmem [shape: f32[1,1,128], index: 3, kind: input, shape index: {}]
  %s4 = inlined_call_operand.hbm [shape: bf16[2,128,384], index: 4, kind: input, shape index: {}]
  %s5 = inlined_call_operand.vmem [shape: f32[2,1,384], index: 5, kind: input, shape index: {}]
  %s6 = inlined_call_operand.vmem [shape: bf16[2,128,128], index: 6, kind: input, shape index: {}]
  %s7 = inlined_call_operand.vmem [shape: f32[2,1,128], index: 7, kind: input, shape index: {}]
  %s8 = inlined_call_operand.vmem [shape: f32[2,1,128], index: 8, kind: input, shape index: {}]
  %s9 = inlined_call_operand.vmem [shape: f32[2,1,128], index: 9, kind: input, shape index: {}]
  %s10 = inlined_call_operand.hbm [shape: bf16[2,128,256], index: 10, kind: input, shape index: {}]
  %s11 = inlined_call_operand.vmem [shape: f32[2,1,256], index: 11, kind: input, shape index: {}]
  %s12 = inlined_call_operand.hbm [shape: bf16[2,256,128], index: 12, kind: input, shape index: {}]
  %s13 = inlined_call_operand.vmem [shape: f32[2,1,128], index: 13, kind: input, shape index: {}]
  %s14 = inlined_call_operand.vmem [shape: f32[2,1,128], index: 14, kind: input, shape index: {}]
  %s15 = inlined_call_operand.hbm [shape: f32[2,1,128], index: 15, kind: input, shape index: {}]
  %s16 = inlined_call_operand.vmem [shape: bf16[128,128], index: 16, kind: input, shape index: {}]
  %s17 = inlined_call_operand.hbm [shape: f32[1,128], index: 17, kind: input, shape index: {}]
  %s18 = inlined_call_operand.hbm [shape: bf16[128,128], index: 18, kind: input, shape index: {}]
  %s19 = inlined_call_operand.vmem [shape: f32[1,128], index: 19, kind: input, shape index: {}]
  %s20 = inlined_call_operand.hbm [shape: f32[2,1,128], index: 20, kind: output, shape index: {}]
  %s21 = sld [smem:[#allocation0]]
  $region137: #{bert_classifier_forward.1} parent=0
    _
  %s23 = ssub.s32 1, %s21
  %s24 = scalar_select 0, %s23, %s21
  $region1: #{bert_classifier_forward.1} parent=0
    #allocation2 [shape = 'u8[196608]{0}', space=vmem, size = 0x30000, scoped, tag = 'input window, operand 4, single buffered']
    #allocation3 [shape = 's32[2]{0}', space=sflag, size = 0x8, scoped, tag = 'scoped memory for bert_classifier_forward.1']
    #allocation4 [shape = 's32[2]{0}', space=sflag, size = 0x8, scoped, tag = 'scoped memory for bert_classifier_forward.1']
    #allocation5 [shape = 'u8[131072]{0}', space=vmem, size = 0x20000, scoped, tag = 'input window, operand 10, single buffered']
    #allocation6 [shape = 's32[1]{0}', space=sflag, size = 0x4, scoped, tag = 'scoped memory for bert_classifier_forward.1']
    #allocation7 [shape = 'u8[131072]{0}', space=vmem, size = 0x20000, scoped, tag = 'input window, operand 12, single buffered']
    #allocation8 [shape = 'u8[1024]{0}', space=vmem, size = 0x400, scoped, tag = 'input window, operand 15, single buffered']
    #allocation9 [shape = 's32[1]{0}', space=sflag, size = 0x4, scoped, tag = 'scoped memory for bert_classifier_forward.1']
    #allocation10 [shape = 'u8[512]{0}', space=vmem, size = 0x400, scoped, tag = 'input window, operand 17, single buffered']
    #allocation11 [shape = 'u8[32768]{0}', space=vmem, size = 0x8000, scoped, tag = 'input window, operand 18, single buffered']
    #allocation12 [shape = 's32[1]{0}', space=sflag, size = 0x4, scoped, tag = 'scoped memory for bert_classifier_forward.1']
    #allocation13 [shape = 'u8[1024]{0}', space=vmem, size = 0x400, scoped, tag = 'output window, operand 0']
    %25 = vsyncpa [#allocation3], 0
    %26 = vsyncpa [#allocation6], 0
    %27 = vsyncpa [#allocation9], 0
    %28 = vsyncpa [#allocation12], 0
    %29 = vsyncpa [#allocation4], 0
    %s30 = scalar_lea.sflag [#allocation4], 1
    %31 = vsyncpa %s30, 0
    loop: start=0, step=1, limit=4
    $region2: #{bert_classifier_forward.1} parent=1 // loop_pre_header
      _
    $region3: #{bert_classifier_forward.1} parent=1 // loop_header
      %s33 = sphi 0, %s37
      %p34 = scmp.ge.s32.totalorder %s33, 4
      %s43 = sphi 0, %s45
      %s46 = sphi 0, %s43
      %s47 = sphi 0, %s46
      %s63 = sphi 0, %s47
      %s69 = sphi 0, %s71
      %s72 = sphi 0, %s69
      %s73 = sphi 0, %s72
      %s89 = sphi 0, %s73
      %s93 = sphi 0, %s93
      %s95 = sphi 0, %s93
      %s96 = sphi 0, %s95
      %s110 = sphi 0, %s96
      %s114 = sphi 0, %s114
      %s116 = sphi 0, %s114
      %s117 = sphi 0, %s116
      %s131 = sphi 0, %s117
      %s135 = sphi 0, %s135
      %s137 = sphi 0, %s135
      %s138 = sphi 0, %s137
      %s152 = sphi 0, %s138
      %s156 = sphi 0, %s156
      %s158 = sphi 0, %s156
      %s159 = sphi 0, %s158
      %s173 = sphi 0, %s159
      %s177 = sphi 0, %s177
      %s179 = sphi 0, %s177
      %s180 = sphi 0, %s179
      %s194 = sphi 0, %s180
      %s198 = sphi 0, %s198
      %s200 = sphi 0, %s198
      %s201 = sphi 0, %s200
      %s215 = sphi 0, %s201
      %s219 = sphi 0, %s219
      %s221 = sphi 0, %s219
      %s222 = sphi 0, %s221
      %s236 = sphi 0, %s222
      %s240 = sphi 0, %s240
      %s242 = sphi 0, %s240
      %s243 = sphi 0, %s242
      %s257 = sphi 0, %s243
      %s261 = sphi 0, %s261
      %s263 = sphi 0, %s261
      %s264 = sphi 0, %s263
      %s278 = sphi 0, %s264
      %s282 = sphi 0, %s282
      %s284 = sphi 0, %s282
      %s285 = sphi 0, %s284
      %s299 = sphi 0, %s285
      %s303 = sphi 0, %s303
      %s305 = sphi 0, %s303
      %s306 = sphi 0, %s305
      %s320 = sphi 0, %s306
      %s324 = sphi 0, %s324
      %s326 = sphi 0, %s324
      %s327 = sphi 0, %s326
      %s341 = sphi 0, %s327
      %s345 = sphi 0, %s345
      %s347 = sphi 0, %s345
      %s348 = sphi 0, %s347
      %s362 = sphi 0, %s348
      %s366 = sphi 0, %s366
      %s368 = sphi 0, %s366
      %s369 = sphi 0, %s368
      %s383 = sphi 0, %s369
      %s387 = sphi 0, %s387
      %s389 = sphi 0, %s387
      %s390 = sphi 0, %s389
      %s404 = sphi 0, %s390
      %s408 = sphi 0, %s408
      %s410 = sphi 0, %s408
      %s411 = sphi 0, %s410
      %s425 = sphi 0, %s411
      %s429 = sphi 0, %s429
      %s431 = sphi 0, %s429
      %s432 = sphi 0, %s431
      %s446 = sphi 0, %s432
      %s450 = sphi 0, %s450
      %s452 = sphi 0, %s450
      %s453 = sphi 0, %s452
      %s467 = sphi 0, %s453
      %s473 = sphi 0, %s475
      %s476 = sphi 0, %s473
      %s477 = sphi 0, %s476
      %s493 = sphi 0, %s477
    $region4: #{bert_classifier_forward.1} parent=1 // loop_header_branch
      %36 = sbr.rel (%p34) target = $region8
    $region5: #{bert_classifier_forward.1} parent=1 // loop_body
      %s38 = ssub.s32 %s33, 1
      %s39 = ssub.s32 %s33, 2
      %s40 = sadd.s32 %s33, 1
      %s41 = ssub.s32 %s33, %s40
      %p42 = scmp.eq.s32.totalorder %s41, 0
      %s44 = sadd.s32 %s43, 1
      %s45 = scalar_select %p42, %s43, %s44
      %p48 = pneg %p42
      %p49 = scmp.eq.s32.totalorder %s33, 1
      %p50 = por %p48, %p49
      %p51 = scmp.ne.s32.totalorder %s43, %s46
      %p52 = scmp.eq.s32.totalorder %s33, 0
      %p53 = por %p51, %p52
      %p54 = scmp.ne.s32.totalorder %s43, %s46
      %p55 = scmp.eq.s32.totalorder %s38, 1
      %p56 = por %p54, %p55
      %p57 = scmp.ne.s32.totalorder %s46, %s47
      %p58 = scmp.eq.s32.totalorder %s38, 0
      %p59 = por %p57, %p58
      %p60 = scmp.ne.s32.totalorder %s46, %s47
      %p61 = scmp.eq.s32.totalorder %s39, 1
      %p62 = por %p60, %p61
      %p64 = scmp.ne.s32.totalorder %s47, %s63
      %p65 = scmp.eq.s32.totalorder %s39, 0
      %p66 = por %p64, %p65
      %s67 = ssub.s32 %s33, %s40
      %p68 = scmp.eq.s32.totalorder %s67, 0
      %s70 = sadd.s32 %s69, 1
      %s71 = scalar_select %p68, %s69, %s70
      %p74 = pneg %p68
      %p75 = scmp.eq.s32.totalorder %s33, 1
      %p76 = por %p74, %p75
      %p77 = scmp.ne.s32.totalorder %s69, %s72
      %p78 = scmp.eq.s32.totalorder %s33, 0
      %p79 = por %p77, %p78
      %p80 = scmp.ne.s32.totalorder %s69, %s72
      %p81 = scmp.eq.s32.totalorder %s38, 1
      %p82 = por %p80, %p81
      %p83 = scmp.ne.s32.totalorder %s72, %s73
      %p84 = scmp.eq.s32.totalorder %s38, 0
      %p85 = por %p83, %p84
      %p86 = scmp.ne.s32.totalorder %s72, %s73
      %p87 = scmp.eq.s32.totalorder %s39, 1
      %p88 = por %p86, %p87
      %p90 = scmp.ne.s32.totalorder %s73, %s89
      %p91 = scmp.eq.s32.totalorder %s39, 0
      %p92 = por %p90, %p91
      %s94 = sadd.s32 %s93, 1
      %p97 = scmp.eq.s32.totalorder %s33, 1
      %p98 = scmp.ne.s32.totalorder %s93, %s95
      %p99 = scmp.eq.s32.totalorder %s33, 0
      %p100 = por %p98, %p99
      %p101 = scmp.ne.s32.totalorder %s93, %s95
      %p102 = scmp.eq.s32.totalorder %s38, 1
      %p103 = por %p101, %p102
      %p104 = scmp.ne.s32.totalorder %s95, %s96
      %p105 = scmp.eq.s32.totalorder %s38, 0
      %p106 = por %p104, %p105
      %p107 = scmp.ne.s32.totalorder %s95, %s96
      %p108 = scmp.eq.s32.totalorder %s39, 1
      %p109 = por %p107, %p108
      %p111 = scmp.ne.s32.totalorder %s96, %s110
      %p112 = scmp.eq.s32.totalorder %s39, 0
      %p113 = por %p111, %p112
      %s115 = sadd.s32 %s114, 1
      %p118 = scmp.eq.s32.totalorder %s33, 1
      %p119 = scmp.ne.s32.totalorder %s114, %s116
      %p120 = scmp.eq.s32.totalorder %s33, 0
      %p121 = por %p119, %p120
      %p122 = scmp.ne.s32.totalorder %s114, %s116
      %p123 = scmp.eq.s32.totalorder %s38, 1
      %p124 = por %p122, %p123
      %p125 = scmp.ne.s32.totalorder %s116, %s117
      %p126 = scmp.eq.s32.totalorder %s38, 0
      %p127 = por %p125, %p126
      %p128 = scmp.ne.s32.totalorder %s116, %s117
      %p129 = scmp.eq.s32.totalorder %s39, 1
      %p130 = por %p128, %p129
      %p132 = scmp.ne.s32.totalorder %s117, %s131
      %p133 = scmp.eq.s32.totalorder %s39, 0
      %p134 = por %p132, %p133
      %s136 = sadd.s32 %s135, 1
      %p139 = scmp.eq.s32.totalorder %s33, 1
      %p140 = scmp.ne.s32.totalorder %s135, %s137
      %p141 = scmp.eq.s32.totalorder %s33, 0
      %p142 = por %p140, %p141
      %p143 = scmp.ne.s32.totalorder %s135, %s137
      %p144 = scmp.eq.s32.totalorder %s38, 1
      %p145 = por %p143, %p144
      %p146 = scmp.ne.s32.totalorder %s137, %s138
      %p147 = scmp.eq.s32.totalorder %s38, 0
      %p148 = por %p146, %p147
      %p149 = scmp.ne.s32.totalorder %s137, %s138
      %p150 = scmp.eq.s32.totalorder %s39, 1
      %p151 = por %p149, %p150
      %p153 = scmp.ne.s32.totalorder %s138, %s152
      %p154 = scmp.eq.s32.totalorder %s39, 0
      %p155 = por %p153, %p154
      %s157 = sadd.s32 %s156, 1
      %p160 = scmp.eq.s32.totalorder %s33, 1
      %p161 = scmp.ne.s32.totalorder %s156, %s158
      %p162 = scmp.eq.s32.totalorder %s33, 0
      %p163 = por %p161, %p162
      %p164 = scmp.ne.s32.totalorder %s156, %s158
      %p165 = scmp.eq.s32.totalorder %s38, 1
      %p166 = por %p164, %p165
      %p167 = scmp.ne.s32.totalorder %s158, %s159
      %p168 = scmp.eq.s32.totalorder %s38, 0
      %p169 = por %p167, %p168
      %p170 = scmp.ne.s32.totalorder %s158, %s159
      %p171 = scmp.eq.s32.totalorder %s39, 1
      %p172 = por %p170, %p171
      %p174 = scmp.ne.s32.totalorder %s159, %s173
      %p175 = scmp.eq.s32.totalorder %s39, 0
      %p176 = por %p174, %p175
      %s178 = sadd.s32 %s177, 1
      %p181 = scmp.eq.s32.totalorder %s33, 1
      %p182 = scmp.ne.s32.totalorder %s177, %s179
      %p183 = scmp.eq.s32.totalorder %s33, 0
      %p184 = por %p182, %p183
      %p185 = scmp.ne.s32.totalorder %s177, %s179
      %p186 = scmp.eq.s32.totalorder %s38, 1
      %p187 = por %p185, %p186
      %p188 = scmp.ne.s32.totalorder %s179, %s180
      %p189 = scmp.eq.s32.totalorder %s38, 0
      %p190 = por %p188, %p189
      %p191 = scmp.ne.s32.totalorder %s179, %s180
      %p192 = scmp.eq.s32.totalorder %s39, 1
      %p193 = por %p191, %p192
      %p195 = scmp.ne.s32.totalorder %s180, %s194
      %p196 = scmp.eq.s32.totalorder %s39, 0
      %p197 = por %p195, %p196
      %s199 = sadd.s32 %s198, 1
      %p202 = scmp.eq.s32.totalorder %s33, 1
      %p203 = scmp.ne.s32.totalorder %s198, %s200
      %p204 = scmp.eq.s32.totalorder %s33, 0
      %p205 = por %p203, %p204
      %p206 = scmp.ne.s32.totalorder %s198, %s200
      %p207 = scmp.eq.s32.totalorder %s38, 1
      %p208 = por %p206, %p207
      %p209 = scmp.ne.s32.totalorder %s200, %s201
      %p210 = scmp.eq.s32.totalorder %s38, 0
      %p211 = por %p209, %p210
      %p212 = scmp.ne.s32.totalorder %s200, %s201
      %p213 = scmp.eq.s32.totalorder %s39, 1
      %p214 = por %p212, %p213
      %p216 = scmp.ne.s32.totalorder %s201, %s215
      %p217 = scmp.eq.s32.totalorder %s39, 0
      %p218 = por %p216, %p217
      %s220 = sadd.s32 %s219, 1
      %p223 = scmp.eq.s32.totalorder %s33, 1
      %p224 = scmp.ne.s32.totalorder %s219, %s221
      %p225 = scmp.eq.s32.totalorder %s33, 0
      %p226 = por %p224, %p225
      %p227 = scmp.ne.s32.totalorder %s219, %s221
      %p228 = scmp.eq.s32.totalorder %s38, 1
      %p229 = por %p227, %p228
      %p230 = scmp.ne.s32.totalorder %s221, %s222
      %p231 = scmp.eq.s32.totalorder %s38, 0
      %p232 = por %p230, %p231
      %p233 = scmp.ne.s32.totalorder %s221, %s222
      %p234 = scmp.eq.s32.totalorder %s39, 1
      %p235 = por %p233, %p234
      %p237 = scmp.ne.s32.totalorder %s222, %s236
      %p238 = scmp.eq.s32.totalorder %s39, 0
      %p239 = por %p237, %p238
      %s241 = sadd.s32 %s240, 1
      %p244 = scmp.eq.s32.totalorder %s33, 1
      %p245 = scmp.ne.s32.totalorder %s240, %s242
      %p246 = scmp.eq.s32.totalorder %s33, 0
      %p247 = por %p245, %p246
      %p248 = scmp.ne.s32.totalorder %s240, %s242
      %p249 = scmp.eq.s32.totalorder %s38, 1
      %p250 = por %p248, %p249
      %p251 = scmp.ne.s32.totalorder %s242, %s243
      %p252 = scmp.eq.s32.totalorder %s38, 0
      %p253 = por %p251, %p252
      %p254 = scmp.ne.s32.totalorder %s242, %s243
      %p255 = scmp.eq.s32.totalorder %s39, 1
      %p256 = por %p254, %p255
      %p258 = scmp.ne.s32.totalorder %s243, %s257
      %p259 = scmp.eq.s32.totalorder %s39, 0
      %p260 = por %p258, %p259
      %s262 = sadd.s32 %s261, 1
      %p265 = scmp.eq.s32.totalorder %s33, 1
      %p266 = scmp.ne.s32.totalorder %s261, %s263
      %p267 = scmp.eq.s32.totalorder %s33, 0
      %p268 = por %p266, %p267
      %p269 = scmp.ne.s32.totalorder %s261, %s263
      %p270 = scmp.eq.s32.totalorder %s38, 1
      %p271 = por %p269, %p270
      %p272 = scmp.ne.s32.totalorder %s263, %s264
      %p273 = scmp.eq.s32.totalorder %s38, 0
      %p274 = por %p272, %p273
      %p275 = scmp.ne.s32.totalorder %s263, %s264
      %p276 = scmp.eq.s32.totalorder %s39, 1
      %p277 = por %p275, %p276
      %p279 = scmp.ne.s32.totalorder %s264, %s278
      %p280 = scmp.eq.s32.totalorder %s39, 0
      %p281 = por %p279, %p280
      %s283 = sadd.s32 %s282, 1
      %p286 = scmp.eq.s32.totalorder %s33, 1
      %p287 = scmp.ne.s32.totalorder %s282, %s284
      %p288 = scmp.eq.s32.totalorder %s33, 0
      %p289 = por %p287, %p288
      %p290 = scmp.ne.s32.totalorder %s282, %s284
      %p291 = scmp.eq.s32.totalorder %s38, 1
      %p292 = por %p290, %p291
      %p293 = scmp.ne.s32.totalorder %s284, %s285
      %p294 = scmp.eq.s32.totalorder %s38, 0
      %p295 = por %p293, %p294
      %p296 = scmp.ne.s32.totalorder %s284, %s285
      %p297 = scmp.eq.s32.totalorder %s39, 1
      %p298 = por %p296, %p297
      %p300 = scmp.ne.s32.totalorder %s285, %s299
      %p301 = scmp.eq.s32.totalorder %s39, 0
      %p302 = por %p300, %p301
      %s304 = sadd.s32 %s303, 1
      %p307 = scmp.eq.s32.totalorder %s33, 1
      %p308 = scmp.ne.s32.totalorder %s303, %s305
      %p309 = scmp.eq.s32.totalorder %s33, 0
      %p310 = por %p308, %p309
      %p311 = scmp.ne.s32.totalorder %s303, %s305
      %p312 = scmp.eq.s32.totalorder %s38, 1
      %p313 = por %p311, %p312
      %p314 = scmp.ne.s32.totalorder %s305, %s306
      %p315 = scmp.eq.s32.totalorder %s38, 0
      %p316 = por %p314, %p315
      %p317 = scmp.ne.s32.totalorder %s305, %s306
      %p318 = scmp.eq.s32.totalorder %s39, 1
      %p319 = por %p317, %p318
      %p321 = scmp.ne.s32.totalorder %s306, %s320
      %p322 = scmp.eq.s32.totalorder %s39, 0
      %p323 = por %p321, %p322
      %s325 = sadd.s32 %s324, 1
      %p328 = scmp.eq.s32.totalorder %s33, 1
      %p329 = scmp.ne.s32.totalorder %s324, %s326
      %p330 = scmp.eq.s32.totalorder %s33, 0
      %p331 = por %p329, %p330
      %p332 = scmp.ne.s32.totalorder %s324, %s326
      %p333 = scmp.eq.s32.totalorder %s38, 1
      %p334 = por %p332, %p333
      %p335 = scmp.ne.s32.totalorder %s326, %s327
      %p336 = scmp.eq.s32.totalorder %s38, 0
      %p337 = por %p335, %p336
      %p338 = scmp.ne.s32.totalorder %s326, %s327
      %p339 = scmp.eq.s32.totalorder %s39, 1
      %p340 = por %p338, %p339
      %p342 = scmp.ne.s32.totalorder %s327, %s341
      %p343 = scmp.eq.s32.totalorder %s39, 0
      %p344 = por %p342, %p343
      %s346 = sadd.s32 %s345, 1
      %p349 = scmp.eq.s32.totalorder %s33, 1
      %p350 = scmp.ne.s32.totalorder %s345, %s347
      %p351 = scmp.eq.s32.totalorder %s33, 0
      %p352 = por %p350, %p351
      %p353 = scmp.ne.s32.totalorder %s345, %s347
      %p354 = scmp.eq.s32.totalorder %s38, 1
      %p355 = por %p353, %p354
      %p356 = scmp.ne.s32.totalorder %s347, %s348
      %p357 = scmp.eq.s32.totalorder %s38, 0
      %p358 = por %p356, %p357
      %p359 = scmp.ne.s32.totalorder %s347, %s348
      %p360 = scmp.eq.s32.totalorder %s39, 1
      %p361 = por %p359, %p360
      %p363 = scmp.ne.s32.totalorder %s348, %s362
      %p364 = scmp.eq.s32.totalorder %s39, 0
      %p365 = por %p363, %p364
      %s367 = sadd.s32 %s366, 1
      %p370 = scmp.eq.s32.totalorder %s33, 1
      %p371 = scmp.ne.s32.totalorder %s366, %s368
      %p372 = scmp.eq.s32.totalorder %s33, 0
      %p373 = por %p371, %p372
      %p374 = scmp.ne.s32.totalorder %s366, %s368
      %p375 = scmp.eq.s32.totalorder %s38, 1
      %p376 = por %p374, %p375
      %p377 = scmp.ne.s32.totalorder %s368, %s369
      %p378 = scmp.eq.s32.totalorder %s38, 0
      %p379 = por %p377, %p378
      %p380 = scmp.ne.s32.totalorder %s368, %s369
      %p381 = scmp.eq.s32.totalorder %s39, 1
      %p382 = por %p380, %p381
      %p384 = scmp.ne.s32.totalorder %s369, %s383
      %p385 = scmp.eq.s32.totalorder %s39, 0
      %p386 = por %p384, %p385
      %s388 = sadd.s32 %s387, 1
      %p391 = scmp.eq.s32.totalorder %s33, 1
      %p392 = scmp.ne.s32.totalorder %s387, %s389
      %p393 = scmp.eq.s32.totalorder %s33, 0
      %p394 = por %p392, %p393
      %p395 = scmp.ne.s32.totalorder %s387, %s389
      %p396 = scmp.eq.s32.totalorder %s38, 1
      %p397 = por %p395, %p396
      %p398 = scmp.ne.s32.totalorder %s389, %s390
      %p399 = scmp.eq.s32.totalorder %s38, 0
      %p400 = por %p398, %p399
      %p401 = scmp.ne.s32.totalorder %s389, %s390
      %p402 = scmp.eq.s32.totalorder %s39, 1
      %p403 = por %p401, %p402
      %p405 = scmp.ne.s32.totalorder %s390, %s404
      %p406 = scmp.eq.s32.totalorder %s39, 0
      %p407 = por %p405, %p406
      %s409 = sadd.s32 %s408, 1
      %p412 = scmp.eq.s32.totalorder %s33, 1
      %p413 = scmp.ne.s32.totalorder %s408, %s410
      %p414 = scmp.eq.s32.totalorder %s33, 0
      %p415 = por %p413, %p414
      %p416 = scmp.ne.s32.totalorder %s408, %s410
      %p417 = scmp.eq.s32.totalorder %s38, 1
      %p418 = por %p416, %p417
      %p419 = scmp.ne.s32.totalorder %s410, %s411
      %p420 = scmp.eq.s32.totalorder %s38, 0
      %p421 = por %p419, %p420
      %p422 = scmp.ne.s32.totalorder %s410, %s411
      %p423 = scmp.eq.s32.totalorder %s39, 1
      %p424 = por %p422, %p423
      %p426 = scmp.ne.s32.totalorder %s411, %s425
      %p427 = scmp.eq.s32.totalorder %s39, 0
      %p428 = por %p426, %p427
      %s430 = sadd.s32 %s429, 1
      %p433 = scmp.eq.s32.totalorder %s33, 1
      %p434 = scmp.ne.s32.totalorder %s429, %s431
      %p435 = scmp.eq.s32.totalorder %s33, 0
      %p436 = por %p434, %p435
      %p437 = scmp.ne.s32.totalorder %s429, %s431
      %p438 = scmp.eq.s32.totalorder %s38, 1
      %p439 = por %p437, %p438
      %p440 = scmp.ne.s32.totalorder %s431, %s432
      %p441 = scmp.eq.s32.totalorder %s38, 0
      %p442 = por %p440, %p441
      %p443 = scmp.ne.s32.totalorder %s431, %s432
      %p444 = scmp.eq.s32.totalorder %s39, 1
      %p445 = por %p443, %p444
      %p447 = scmp.ne.s32.totalorder %s432, %s446
      %p448 = scmp.eq.s32.totalorder %s39, 0
      %p449 = por %p447, %p448
      %s451 = sadd.s32 %s450, 1
      %p454 = scmp.eq.s32.totalorder %s33, 1
      %p455 = scmp.ne.s32.totalorder %s450, %s452
      %p456 = scmp.eq.s32.totalorder %s33, 0
      %p457 = por %p455, %p456
      %p458 = scmp.ne.s32.totalorder %s450, %s452
      %p459 = scmp.eq.s32.totalorder %s38, 1
      %p460 = por %p458, %p459
      %p461 = scmp.ne.s32.totalorder %s452, %s453
      %p462 = scmp.eq.s32.totalorder %s38, 0
      %p463 = por %p461, %p462
      %p464 = scmp.ne.s32.totalorder %s452, %s453
      %p465 = scmp.eq.s32.totalorder %s39, 1
      %p466 = por %p464, %p465
      %p468 = scmp.ne.s32.totalorder %s453, %s467
      %p469 = scmp.eq.s32.totalorder %s39, 0
      %p470 = por %p468, %p469
      %s471 = ssub.s32 %s33, %s40
      %p472 = scmp.eq.s32.totalorder %s471, 0
      %s474 = sadd.s32 %s473, 1
      %s475 = scalar_select %p472, %s473, %s474
      %p478 = pneg %p472
      %p479 = scmp.eq.s32.totalorder %s33, 1
      %p480 = por %p478, %p479
      %p481 = scmp.ne.s32.totalorder %s473, %s476
      %p482 = scmp.eq.s32.totalorder %s33, 0
      %p483 = por %p481, %p482
      %p484 = scmp.ne.s32.totalorder %s473, %s476
      %p485 = scmp.eq.s32.totalorder %s38, 1
      %p486 = por %p484, %p485
      %p487 = scmp.ne.s32.totalorder %s476, %s477
      %p488 = scmp.eq.s32.totalorder %s38, 0
      %p489 = por %p487, %p488
      %p490 = scmp.ne.s32.totalorder %s476, %s477
      %p491 = scmp.eq.s32.totalorder %s39, 1
      %p492 = por %p490, %p491
      %p494 = scmp.ne.s32.totalorder %s477, %s493
      %p495 = scmp.eq.s32.totalorder %s39, 0
      %p496 = por %p494, %p495
      %p497 = scmp.le.s32.totalorder 1, %s33
      %p498 = scmp.lt.s32.totalorder %s33, 3
      %p499 = pnand %p497, %p498
      %p500 = pneg %p499
      // Predicated region
      $region9: #{bert_classifier_forward.1} parent=5 // pred_check
        _
      $region10: #{bert_classifier_forward.1} parent=5 // pred_check_branch
        %502 = sbr.rel (%p499) target = $region12
      $region11: #{bert_classifier_forward.1} parent=5 // pred_region
        %s503 = ssub.s32 %s33, 1
        // Predicated region
        $region13: #{bert_classifier_forward.1} parent=11 // pred_check
          %p504 = pneg %p106
        $region14: #{bert_classifier_forward.1} parent=11 // pred_check_branch
          %506 = sbr.rel (%p504) target = $region16
        $region15: #{bert_classifier_forward.1} parent=11 // pred_region
          _
        $region16: #{bert_classifier_forward.1} parent=11 // pred_fallthru
          _
        // Predicated region
        $region17: #{bert_classifier_forward.1} parent=11 // pred_check
          %p507 = pneg %p127
        $region18: #{bert_classifier_forward.1} parent=11 // pred_check_branch
          %509 = sbr.rel (%p507) target = $region20
        $region19: #{bert_classifier_forward.1} parent=11 // pred_region
          _
        $region20: #{bert_classifier_forward.1} parent=11 // pred_fallthru
          _
        // Predicated region
        $region21: #{bert_classifier_forward.1} parent=11 // pred_check
          %p510 = pneg %p148
        $region22: #{bert_classifier_forward.1} parent=11 // pred_check_branch
          %512 = sbr.rel (%p510) target = $region24
        $region23: #{bert_classifier_forward.1} parent=11 // pred_region
          %s514 = ssub.s32 6144, 6144
          %515 = vsyncadd [#allocation3], %s514
          %s516 = sshll.u32 [#allocation2], 4
          %s517 = int_to_ptr.vmem [resolvable:$true] %s516
          %522 = dma.hbm_to_vmem [thread:$0]  %s4, 6144, %s517, [#allocation3], 192, 192, 12
        $region24: #{bert_classifier_forward.1} parent=11 // pred_fallthru
          _
        // Predicated region
        $region25: #{bert_classifier_forward.1} parent=11 // pred_check
          %p523 = pneg %p169
        $region26: #{bert_classifier_forward.1} parent=11 // pred_check_branch
          %525 = sbr.rel (%p523) target = $region28
        $region27: #{bert_classifier_forward.1} parent=11 // pred_region
          _
        $region28: #{bert_classifier_forward.1} parent=11 // pred_fallthru
          _
        // Predicated region
        $region29: #{bert_classifier_forward.1} parent=11 // pred_check
          %p526 = pneg %p190
        $region30: #{bert_classifier_forward.1} parent=11 // pred_check_branch
          %528 = sbr.rel (%p526) target = $region32
        $region31: #{bert_classifier_forward.1} parent=11 // pred_region
          _
        $region32: #{bert_classifier_forward.1} parent=11 // pred_fallthru
          _
        // Predicated region
        $region33: #{bert_classifier_forward.1} parent=11 // pred_check
          %p529 = pneg %p211
        $region34: #{bert_classifier_forward.1} parent=11 // pred_check_branch
          %531 = sbr.rel (%p529) target = $region36
        $region35: #{bert_classifier_forward.1} parent=11 // pred_region
          _
        $region36: #{bert_classifier_forward.1} parent=11 // pred_fallthru
          _
        // Predicated region
        $region37: #{bert_classifier_forward.1} parent=11 // pred_check
          %p532 = pneg %p232
        $region38: #{bert_classifier_forward.1} parent=11 // pred_check_branch
          %534 = sbr.rel (%p532) target = $region40
        $region39: #{bert_classifier_forward.1} parent=11 // pred_region
          _
        $region40: #{bert_classifier_forward.1} parent=11 // pred_fallthru
          _
        // Predicated region
        $region41: #{bert_classifier_forward.1} parent=11 // pred_check
          %p535 = pneg %p253
        $region42: #{bert_classifier_forward.1} parent=11 // pred_check_branch
          %537 = sbr.rel (%p535) target = $region44
        $region43: #{bert_classifier_forward.1} parent=11 // pred_region
          _
        $region44: #{bert_classifier_forward.1} parent=11 // pred_fallthru
          _
        // Predicated region
        $region45: #{bert_classifier_forward.1} parent=11 // pred_check
          %p538 = pneg %p274
        $region46: #{bert_classifier_forward.1} parent=11 // pred_check_branch
          %540 = sbr.rel (%p538) target = $region48
        $region47: #{bert_classifier_forward.1} parent=11 // pred_region
          %s542 = ssub.s32 4096, 4096
          %543 = vsyncadd [#allocation6], %s542
          %s544 = sshll.u32 [#allocation5], 4
          %s545 = int_to_ptr.vmem [resolvable:$true] %s544
          %550 = dma.hbm_to_vmem [thread:$0]  %s10, 4096, %s545, [#allocation6], 128, 128, 8
        $region48: #{bert_classifier_forward.1} parent=11 // pred_fallthru
          _
        // Predicated region
        $region49: #{bert_classifier_forward.1} parent=11 // pred_check
          %p551 = pneg %p295
        $region50: #{bert_classifier_forward.1} parent=11 // pred_check_branch
          %553 = sbr.rel (%p551) target = $region52
        $region51: #{bert_classifier_forward.1} parent=11 // pred_region
          _
        $region52: #{bert_classifier_forward.1} parent=11 // pred_fallthru
          _
        // Predicated region
        $region53: #{bert_classifier_forward.1} parent=11 // pred_check
          %p554 = pneg %p316
        $region54: #{bert_classifier_forward.1} parent=11 // pred_check_branch
          %556 = sbr.rel (%p554) target = $region56
        $region55: #{bert_classifier_forward.1} parent=11 // pred_region
          %s558 = ssub.s32 4096, 4096
          %559 = vsyncadd [#allocation6], %s558
          %s560 = sshll.u32 [#allocation7], 4
          %s561 = int_to_ptr.vmem [resolvable:$true] %s560
          %566 = dma.hbm_to_vmem [thread:$0]  %s12, 4096, %s561, [#allocation6], 64, 64, 4
        $region56: #{bert_classifier_forward.1} parent=11 // pred_fallthru
          _
        // Predicated region
        $region57: #{bert_classifier_forward.1} parent=11 // pred_check
          %p567 = pneg %p337
        $region58: #{bert_classifier_forward.1} parent=11 // pred_check_branch
          %569 = sbr.rel (%p567) target = $region60
        $region59: #{bert_classifier_forward.1} parent=11 // pred_region
          _
        $region60: #{bert_classifier_forward.1} parent=11 // pred_fallthru
          _
        // Predicated region
        $region61: #{bert_classifier_forward.1} parent=11 // pred_check
          %p570 = pneg %p358
        $region62: #{bert_classifier_forward.1} parent=11 // pred_check_branch
          %572 = sbr.rel (%p570) target = $region64
        $region63: #{bert_classifier_forward.1} parent=11 // pred_region
          _
        $region64: #{bert_classifier_forward.1} parent=11 // pred_fallthru
          _
        // Predicated region
        $region65: #{bert_classifier_forward.1} parent=11 // pred_check
          %p573 = pneg %p379
        $region66: #{bert_classifier_forward.1} parent=11 // pred_check_branch
          %575 = sbr.rel (%p573) target = $region68
        $region67: #{bert_classifier_forward.1} parent=11 // pred_region
          %s577 = ssub.s32 32, 32
          %578 = vsyncadd [#allocation9], %s577
          %s579 = sshll.u32 [#allocation8], 4
          %s580 = int_to_ptr.vmem [resolvable:$true] %s579
          %585 = dma.hbm_to_vmem [thread:$0]  %s15, 32, %s580, [#allocation9], 16, 16, 1
        $region68: #{bert_classifier_forward.1} parent=11 // pred_fallthru
          _
        // Predicated region
        $region69: #{bert_classifier_forward.1} parent=11 // pred_check
          %p586 = pneg %p400
        $region70: #{bert_classifier_forward.1} parent=11 // pred_check_branch
          %588 = sbr.rel (%p586) target = $region72
        $region71: #{bert_classifier_forward.1} parent=11 // pred_region
          _
        $region72: #{bert_classifier_forward.1} parent=11 // pred_fallthru
          _
        // Predicated region
        $region73: #{bert_classifier_forward.1} parent=11 // pred_check
          %p589 = pneg %p421
        $region74: #{bert_classifier_forward.1} parent=11 // pred_check_branch
          %591 = sbr.rel (%p589) target = $region76
        $region75: #{bert_classifier_forward.1} parent=11 // pred_region
          %s593 = ssub.s32 16, 16
          %594 = vsyncadd [#allocation9], %s593
          %s596 = sshll.u32 [#allocation10], 4
          %s597 = int_to_ptr.vmem [resolvable:$true] %s596
          %599 = dma.hbm_to_vmem [thread:$0]  %s17, 16, %s597, [#allocation9]
        $region76: #{bert_classifier_forward.1} parent=11 // pred_fallthru
          _
        // Predicated region
        $region77: #{bert_classifier_forward.1} parent=11 // pred_check
          %p600 = pneg %p442
        $region78: #{bert_classifier_forward.1} parent=11 // pred_check_branch
          %602 = sbr.rel (%p600) target = $region80
        $region79: #{bert_classifier_forward.1} parent=11 // pred_region
          %s604 = ssub.s32 1024, 1024
          %605 = vsyncadd [#allocation12], %s604
          %s606 = sshll.u32 [#allocation11], 4
          %s607 = int_to_ptr.vmem [resolvable:$true] %s606
          %612 = dma.hbm_to_vmem [thread:$0]  %s18, 1024, %s607, [#allocation12], 64, 64, 4
        $region80: #{bert_classifier_forward.1} parent=11 // pred_fallthru
          _
        // Predicated region
        $region81: #{bert_classifier_forward.1} parent=11 // pred_check
          %p613 = pneg %p463
        $region82: #{bert_classifier_forward.1} parent=11 // pred_check_branch
          %615 = sbr.rel (%p613) target = $region84
        $region83: #{bert_classifier_forward.1} parent=11 // pred_region
          _
        $region84: #{bert_classifier_forward.1} parent=11 // pred_fallthru
          _
      $region12: #{bert_classifier_forward.1} parent=5 // pred_fallthru
        _
      %p616 = scmp.lt.s32.totalorder %s33, 2
      // Predicated region
      $region85: #{bert_classifier_forward.1} parent=5 // pred_check
        %p617 = pneg %p616
      $region86: #{bert_classifier_forward.1} parent=5 // pred_check_branch
        %619 = sbr.rel (%p617) target = $region88
      $region87: #{bert_classifier_forward.1} parent=5 // pred_region
        // Predicated region
        $region89: #{bert_classifier_forward.1} parent=87 // pred_check
          %p620 = pneg %p53
        $region90: #{bert_classifier_forward.1} parent=87 // pred_check_branch
          %622 = sbr.rel (%p620) target = $region92
        $region91: #{bert_classifier_forward.1} parent=87 // pred_region
          %p623 = scmp.lt.s32.totalorder %s33, 1
          %s624 = scalar_select %p623, %s33, 1
          %s625 = smul.addr %s624, 8
          %s626 = scalar_lea.vmem %s0, %s625
        $region92: #{bert_classifier_forward.1} parent=87 // pred_fallthru
          _
        // Predicated region
        $region93: #{bert_classifier_forward.1} parent=87 // pred_check
          %p627 = pneg %p79
        $region94: #{bert_classifier_forward.1} parent=87 // pred_check_branch
          %629 = sbr.rel (%p627) target = $region96
        $region95: #{bert_classifier_forward.1} parent=87 // pred_region
          %p630 = scmp.lt.s32.totalorder %s33, 1
          %s631 = scalar_select %p630, %s33, 1
          %s632 = scalar_lea.vmem %s1, %s631
        $region96: #{bert_classifier_forward.1} parent=87 // pred_fallthru
          _
      $region88: #{bert_classifier_forward.1} parent=5 // pred_fallthru
        _
      %p633 = scmp.le.s32.totalorder 1, %s33
      %p634 = scmp.lt.s32.totalorder %s33, 3
      %p635 = pnand %p633, %p634
      %p636 = pneg %p635
      // Predicated region
      $region97: #{bert_classifier_forward.1} parent=5 // pred_check
        _
      $region98: #{bert_classifier_forward.1} parent=5 // pred_check_branch
        %638 = sbr.rel (%p635) target = $region100
      $region99: #{bert_classifier_forward.1} parent=5 // pred_region
        %s639 = ssub.s32 %s33, 1
        // Predicated region
        $region101: #{bert_classifier_forward.1} parent=99 // pred_check
          %p640 = pneg %p148
        $region102: #{bert_classifier_forward.1} parent=99 // pred_check_branch
          %642 = sbr.rel (%p640) target = $region104
        $region103: #{bert_classifier_forward.1} parent=99 // pred_region
          %643 = dma.done [#allocation3], 6144
        $region104: #{bert_classifier_forward.1} parent=99 // pred_fallthru
          _
        // Predicated region
        $region105: #{bert_classifier_forward.1} parent=99 // pred_check
          %p644 = pneg %p274
        $region106: #{bert_classifier_forward.1} parent=99 // pred_check_branch
          %646 = sbr.rel (%p644) target = $region108
        $region107: #{bert_classifier_forward.1} parent=99 // pred_region
          %647 = dma.done [#allocation6], 4096
        $region108: #{bert_classifier_forward.1} parent=99 // pred_fallthru
          _
        // Predicated region
        $region109: #{bert_classifier_forward.1} parent=99 // pred_check
          %p648 = pneg %p316
        $region110: #{bert_classifier_forward.1} parent=99 // pred_check_branch
          %650 = sbr.rel (%p648) target = $region112
        $region111: #{bert_classifier_forward.1} parent=99 // pred_region
          %651 = dma.done [#allocation6], 4096
        $region112: #{bert_classifier_forward.1} parent=99 // pred_fallthru
          _
        // Predicated region
        $region113: #{bert_classifier_forward.1} parent=99 // pred_check
          %p652 = pneg %p379
        $region114: #{bert_classifier_forward.1} parent=99 // pred_check_branch
          %654 = sbr.rel (%p652) target = $region116
        $region115: #{bert_classifier_forward.1} parent=99 // pred_region
          %655 = dma.done [#allocation9], 32
        $region116: #{bert_classifier_forward.1} parent=99 // pred_fallthru
          _
        // Predicated region
        $region117: #{bert_classifier_forward.1} parent=99 // pred_check
          %p656 = pneg %p421
        $region118: #{bert_classifier_forward.1} parent=99 // pred_check_branch
          %658 = sbr.rel (%p656) target = $region120
        $region119: #{bert_classifier_forward.1} parent=99 // pred_region
          %659 = dma.done [#allocation9], 16
        $region120: #{bert_classifier_forward.1} parent=99 // pred_fallthru
          _
        // Predicated region
        $region121: #{bert_classifier_forward.1} parent=99 // pred_check
          %p660 = pneg %p442
        $region122: #{bert_classifier_forward.1} parent=99 // pred_check_branch
          %662 = sbr.rel (%p660) target = $region124
        $region123: #{bert_classifier_forward.1} parent=99 // pred_region
          %663 = dma.done [#allocation12], 1024
        $region124: #{bert_classifier_forward.1} parent=99 // pred_fallthru
          _
        %p664 = scmp.lt.s32.totalorder %s38, 1
        %s665 = scalar_select %p664, %s38, 1
        %s666 = smul.addr %s665, 8
        %s667 = scalar_lea.vmem %s0, %s666
        %p668 = pneg %p59
        %p669 = pneg %p56
        %p670 = scmp.lt.s32.totalorder %s38, 1
        %s671 = scalar_select %p670, %s38, 1
        %s672 = scalar_lea.vmem %s1, %s671
        %p673 = pneg %p85
        %p674 = pneg %p82
        %p675 = pneg %p106
        %p676 = pneg %p103
        %p677 = pneg %p127
        %p678 = pneg %p124
        %p679 = pneg %p148
        %p680 = pneg %p145
        %p681 = pneg %p169
        %p682 = pneg %p166
        %p683 = pneg %p190
        %p684 = pneg %p187
        %p685 = pneg %p211
        %p686 = pneg %p208
        %p687 = pneg %p232
        %p688 = pneg %p229
        %p689 = pneg %p253
        %p690 = pneg %p250
        %p691 = pneg %p274
        %p692 = pneg %p271
        %p693 = pneg %p295
        %p694 = pneg %p292
        %p695 = pneg %p316
        %p696 = pneg %p313
        %p697 = pneg %p337
        %p698 = pneg %p334
        %p699 = pneg %p358
        %p700 = pneg %p355
        %p701 = pneg %p379
        %p702 = pneg %p376
        %p703 = pneg %p400
        %p704 = pneg %p397
        %p705 = pneg %p421
        %p706 = pneg %p418
        %p707 = pneg %p442
        %p708 = pneg %p439
        %p709 = pneg %p463
        %p710 = pneg %p460
        %p711 = pneg %p489
        %p712 = pneg %p486
        %s713 = sand.u32 %s476, 1
        %s714 = scalar_lea.sflag [#allocation4], %s713
        %s715 = sand.u32 %s476, 1
        %s716 = scalar_lea.vmem [#allocation13], %s715
        %p717 = scmp.lt.s32.totalorder %s38, 1
        %s718 = scalar_select %p717, %s38, 1
        %s719 = smul.addr %s718, 8
        %s720 = scalar_lea.vmem %s0, %s719
        %p721 = scmp.lt.s32.totalorder %s38, 1
        %s722 = scalar_select %p721, %s38, 1
        %s723 = scalar_lea.vmem %s1, %s722
        %v725 = vld [vmem:[%s720] sm:$0xff]
        %v726 = vld [vmem:[%s2] sm:$0x1]
        %v727 = vld [vmem:[%s3] sm:$0x1]
        %728 = vadd.xlane.f32.xlu0 %v725
        %v729 = vpop.xlane.xlu0 %728
        %v730 = vrcp.pop 128.0
        %v731 = vmul.f32 %v729, %v730
        %v732 = vmul.f32 %v725, %v725
        %733 = vadd.xlane.f32.xlu0 %v732
        %v734 = vpop.xlane.xlu0 %733
        %v735 = vmul.f32 %v734, %v730
        %v736 = vmul.f32 %v731, %v731
        %v737 = vsub.f32 %v735, %v736
        %v738 = vmax.f32 %v737, 0.0
        %v739 = vsub.f32 %v725, %v731
        %v740 = vadd.f32 %v738, 1e-12
        %v741 = vrsqrt.pop %v740
        %v742 = vmul.f32 %v739, %v741
        %v744 = vlaneseq
        %v745 = vshrl.u32 %v744, 7
        %v746 = vsub.s32 0, %v745
        %v747 = vrot.slane %v726, %v746
        %v749 = vmul.f32 %v742, %v747
        %v751 = vlaneseq
        %v752 = vshrl.u32 %v751, 7
        %v753 = vsub.s32 0, %v752
        %v754 = vrot.slane %v727, %v753
        %v756 = vadd.f32 %v749, %v754
        %v757 = vld [vmem:[%s723] sm:$0x1]
        %v758 = vpack.c.bf16 %v756, %v756
        %v759 = vld [vmem:[#allocation2] sm:$0xff]
        %v760 = vld [vmem:[#allocation2 + $0x8] sm:$0xf]
        %v761 = vld [vmem:[#allocation2 + $0xc] sm:$0xff]
        %v762 = vld [vmem:[#allocation2 + $0x14] sm:$0xf]
        %v763 = vld [vmem:[#allocation2 + $0x18] sm:$0xff]
        %v764 = vld [vmem:[#allocation2 + $0x20] sm:$0xf]
        %v765 = vld [vmem:[#allocation2 + $0x24] sm:$0xff]
        %v766 = vld [vmem:[#allocation2 + $0x2c] sm:$0xf]
        %v767 = vld [vmem:[#allocation2 + $0x30] sm:$0xff]
        %v768 = vld [vmem:[#allocation2 + $0x38] sm:$0xf]
        %v769 = vld [vmem:[#allocation2 + $0x3c] sm:$0xff]
        %v770 = vld [vmem:[#allocation2 + $0x44] sm:$0xf]
        %v771 = vld [vmem:[#allocation2 + $0x48] sm:$0xff]
        %v772 = vld [vmem:[#allocation2 + $0x50] sm:$0xf]
        %v773 = vld [vmem:[#allocation2 + $0x54] sm:$0xff]
        %v774 = vld [vmem:[#allocation2 + $0x5c] sm:$0xf]
        %v775 = vld [vmem:[#allocation2 + $0x60] sm:$0xff]
        %v776 = vld [vmem:[#allocation2 + $0x68] sm:$0xf]
        %v777 = vld [vmem:[#allocation2 + $0x6c] sm:$0xff]
        %v778 = vld [vmem:[#allocation2 + $0x74] sm:$0xf]
        %v779 = vld [vmem:[#allocation2 + $0x78] sm:$0xff]
        %v780 = vld [vmem:[#allocation2 + $0x80] sm:$0xf]
        %v781 = vld [vmem:[#allocation2 + $0x84] sm:$0xff]
        %v782 = vld [vmem:[#allocation2 + $0x8c] sm:$0xf]
        %v783 = vld [vmem:[#allocation2 + $0x90] sm:$0xff]
        %v784 = vld [vmem:[#allocation2 + $0x98] sm:$0xf]
        %v785 = vld [vmem:[#allocation2 + $0x9c] sm:$0xff]
        %v786 = vld [vmem:[#allocation2 + $0xa4] sm:$0xf]
        %v787 = vld [vmem:[#allocation2 + $0xa8] sm:$0xff]
        %v788 = vld [vmem:[#allocation2 + $0xb0] sm:$0xf]
        %v789 = vld [vmem:[#allocation2 + $0xb4] sm:$0xff]
        %v790 = vld [vmem:[#allocation2 + $0xbc] sm:$0xf]
        %v791 = vld [vmem:[%s5] sm:$0x7]
        %v793 = vlaneseq
        %v794 = vshrl.u32 %v793, 7
        %v795 = vsub.s32 0, %v794
        %v796 = vrot.slane %v791, %v795
        %v797 = vlaneseq
        %v798 = vshrl.u32 %v797, 7
        %v799 = vsub.s32 1, %v798
        %v800 = vrot.slane %v791, %v799
        %v801 = vlaneseq
        %v802 = vshrl.u32 %v801, 7
        %v803 = vsub.s32 2, %v802
        %v804 = vrot.slane %v791, %v803
        %v840 = vunpack.c.l.b16 %v759
        %v841 = vunpack.c.h.b16 %v759
        %v842 = vunpack.c.l.b16 %v760
        %v843 = vunpack.c.l.b16 %v761
        %v844 = vunpack.c.h.b16 %v761
        %v845 = vunpack.c.l.b16 %v762
        %v846 = vunpack.c.l.b16 %v763
        %v847 = vunpack.c.h.b16 %v763
        %v848 = vunpack.c.l.b16 %v764
        %v849 = vunpack.c.l.b16 %v765
        %v850 = vunpack.c.h.b16 %v765
        %v851 = vunpack.c.l.b16 %v766
        %v852 = vunpack.c.l.b16 %v767
        %v853 = vunpack.c.h.b16 %v767
        %v854 = vunpack.c.l.b16 %v768
        %v855 = vunpack.c.l.b16 %v769
        %v856 = vunpack.c.h.b16 %v769
        %v857 = vunpack.c.l.b16 %v770
        %v858 = vunpack.c.l.b16 %v771
        %v859 = vunpack.c.h.b16 %v771
        %v860 = vunpack.c.l.b16 %v772
        %v861 = vunpack.c.l.b16 %v773
        %v862 = vunpack.c.h.b16 %v773
        %v863 = vunpack.c.l.b16 %v774
        %v864 = vunpack.c.l.b16 %v775
        %v865 = vunpack.c.h.b16 %v775
        %v866 = vunpack.c.l.b16 %v776
        %v867 = vunpack.c.l.b16 %v777
        %v868 = vunpack.c.h.b16 %v777
        %v869 = vunpack.c.l.b16 %v778
        %v870 = vunpack.c.l.b16 %v779
        %v871 = vunpack.c.h.b16 %v779
        %v872 = vunpack.c.l.b16 %v780
        %v873 = vunpack.c.l.b16 %v781
        %v874 = vunpack.c.h.b16 %v781
        %v875 = vunpack.c.l.b16 %v782
        %v876 = vunpack.c.l.b16 %v783
        %v877 = vunpack.c.h.b16 %v783
        %v878 = vunpack.c.l.b16 %v784
        %v879 = vunpack.c.l.b16 %v785
        %v880 = vunpack.c.h.b16 %v785
        %v881 = vunpack.c.l.b16 %v786
        %v882 = vunpack.c.l.b16 %v787
        %v883 = vunpack.c.h.b16 %v787
        %v884 = vunpack.c.l.b16 %v788
        %v885 = vunpack.c.l.b16 %v789
        %v886 = vunpack.c.h.b16 %v789
        %v887 = vunpack.c.l.b16 %v790
        %v888 = vpack.c.b16 %v843, %v840
        %v889 = vpack.c.b16 %v844, %v841
        %v890 = vpack.c.b16 %v845, %v842
        %v891 = vpack.c.b16 %v849, %v846
        %v892 = vpack.c.b16 %v850, %v847
        %v893 = vpack.c.b16 %v851, %v848
        %v894 = vpack.c.b16 %v855, %v852
        %v895 = vpack.c.b16 %v856, %v853
        %v896 = vpack.c.b16 %v857, %v854
        %v897 = vpack.c.b16 %v861, %v858
        %v898 = vpack.c.b16 %v862, %v859
        %v899 = vpack.c.b16 %v863, %v860
        %v900 = vpack.c.b16 %v867, %v864
        %v901 = vpack.c.b16 %v868, %v865
        %v902 = vpack.c.b16 %v869, %v866
        %v903 = vpack.c.b16 %v873, %v870
        %v904 = vpack.c.b16 %v874, %v871
        %v905 = vpack.c.b16 %v875, %v872
        %v906 = vpack.c.b16 %v879, %v876
        %v907 = vpack.c.b16 %v880, %v877
        %v908 = vpack.c.b16 %v881, %v878
        %v909 = vpack.c.b16 %v885, %v882
        %v910 = vpack.c.b16 %v886, %v883
        %v911 = vpack.c.b16 %v887, %v884
        %936 = vmatprep.subr.bf16.mxu0 %v910
        %937 = vmatpush1.bf16.msra.mxu0 %v909
        %938 = vmatprep.subr.bf16.mxu0 %v907
        %939 = vmatpush1.bf16.msra.mxu0 %v906
        %940 = vmatprep.subr.bf16.mxu0 %v904
        %941 = vmatpush1.bf16.msra.mxu0 %v903
        %942 = vmatprep.subr.bf16.mxu0 %v901
        %943 = vmatpush1.bf16.msra.mxu0 %v900
        %944 = vmatprep.subr.bf16.mxu0 %v898
        %945 = vmatpush1.bf16.msra.mxu0 %v897
        %946 = vmatprep.subr.bf16.mxu0 %v895
        %947 = vmatpush1.bf16.msra.mxu0 %v894
        %948 = vmatprep.subr.bf16.mxu0 %v892
        %949 = vmatpush1.bf16.msra.mxu0 %v891
        %950 = vmatprep.subr.bf16.mxu0 %v889
        %951 = vmatpush1.bf16.msra.mxu0 %v888
        %952 = vmatprep.subr.bf16.mxu0 0
        %953 = vmatpush2.bf16.msra.mxu0 0
        %954 = vmatprep.subr.bf16.mxu0 0
        %955 = vmatpush2.bf16.msra.mxu0 0
        %956 = vmatprep.subr.bf16.mxu0 0
        %957 = vmatpush2.bf16.msra.mxu0 0
        %958 = vmatprep.subr.bf16.mxu0 0
        %959 = vmatpush2.bf16.msra.mxu0 0
        %960 = vmatprep.subr.bf16.mxu0 0
        %961 = vmatpush2.bf16.msra.mxu0 0
        %962 = vmatprep.subr.bf16.mxu0 0
        %963 = vmatpush2.bf16.msra.mxu0 0
        %964 = vmatprep.subr.bf16.mxu0 0
        %965 = vmatpush2.bf16.msra.mxu0 0
        %966 = vmatprep.subr.bf16.mxu0 0
        %967 = vmatpush2.bf16.msra.mxu0 0
        %968 = vmatprep.mubr.bf16.mxu0 0
        %969 = vmatmul.mubr.bf16.gmra.mxu0 %v758
        %v970 = vpop.f32.mrf.mxu0
        %v971 = vadd.f32 %v796, %v970
        %v972 = vpop.f32.mrf.mxu0
        %v973 = vadd.f32 %v800, %v972
        %v974 = vpop.f32.mrf.mxu0
        %v975 = vpop.f32.mrf.mxu0
        %976 = vdwg.mxu0
        %977 = vmatprep.subr.bf16.mxu0 0
        %978 = vmatpush1.bf16.msra.mxu0 %v911
        %979 = vmatprep.subr.bf16.mxu0 0
        %980 = vmatpush1.bf16.msra.mxu0 %v908
        %981 = vmatprep.subr.bf16.mxu0 0
        %982 = vmatpush1.bf16.msra.mxu0 %v905
        %983 = vmatprep.subr.bf16.mxu0 0
        %984 = vmatpush1.bf16.msra.mxu0 %v902
        %985 = vmatprep.subr.bf16.mxu0 0
        %986 = vmatpush1.bf16.msra.mxu0 %v899
        %987 = vmatprep.subr.bf16.mxu0 0
        %988 = vmatpush1.bf16.msra.mxu0 %v896
        %989 = vmatprep.subr.bf16.mxu0 0
        %990 = vmatpush1.bf16.msra.mxu0 %v893
        %991 = vmatprep.subr.bf16.mxu0 0
        %992 = vmatpush1.bf16.msra.mxu0 %v890
        %993 = vmatprep.subr.bf16.mxu0 0
        %994 = vmatpush2.bf16.msra.mxu0 0
        %995 = vmatprep.subr.bf16.mxu0 0
        %996 = vmatpush2.bf16.msra.mxu0 0
        %997 = vmatprep.subr.bf16.mxu0 0
        %998 = vmatpush2.bf16.msra.mxu0 0
        %999 = vmatprep.subr.bf16.mxu0 0
        %1000 = vmatpush2.bf16.msra.mxu0 0
        %1001 = vmatprep.subr.bf16.mxu0 0
        %1002 = vmatpush2.bf16.msra.mxu0 0
        %1003 = vmatprep.subr.bf16.mxu0 0
        %1004 = vmatpush2.bf16.msra.mxu0 0
        %1005 = vmatprep.subr.bf16.mxu0 0
        %1006 = vmatpush2.bf16.msra.mxu0 0
        %1007 = vmatprep.subr.bf16.mxu0 0
        %1008 = vmatpush2.bf16.msra.mxu0 0
        %1009 = vmatprep.mubr.bf16.mxu0 0
        %1010 = vmatmul.mubr.bf16.gmra.mxu0 %v758
        %v1011 = vpop.f32.mrf.mxu0
        %v1012 = vadd.f32 %v804, %v1011
        %v1013 = vpop.f32.mrf.mxu0
        %v1014 = vpop.f32.mrf.mxu0
        %v1015 = vpop.f32.mrf.mxu0
        %1016 = vdwg.mxu0
        %v1017 = vld [vmem:[%s6] sm:$0xf]
        %v1018 = vld [vmem:[%s6 + $0x4] sm:$0xf]
        %v1019 = vld [vmem:[%s6 + $0x8] sm:$0xf]
        %v1020 = vld [vmem:[%s6 + $0xc] sm:$0xf]
        %v1021 = vld [vmem:[%s6 + $0x10] sm:$0xf]
        %v1022 = vld [vmem:[%s6 + $0x14] sm:$0xf]
        %v1023 = vld [vmem:[%s6 + $0x18] sm:$0xf]
        %v1024 = vld [vmem:[%s6 + $0x1c] sm:$0xf]
        %v1025 = vld [vmem:[%s6 + $0x20] sm:$0xf]
        %v1026 = vld [vmem:[%s6 + $0x24] sm:$0xf]
        %v1027 = vld [vmem:[%s6 + $0x28] sm:$0xf]
        %v1028 = vld [vmem:[%s6 + $0x2c] sm:$0xf]
        %v1029 = vld [vmem:[%s6 + $0x30] sm:$0xf]
        %v1030 = vld [vmem:[%s6 + $0x34] sm:$0xf]
        %v1031 = vld [vmem:[%s6 + $0x38] sm:$0xf]
        %v1032 = vld [vmem:[%s6 + $0x3c] sm:$0xf]
        %v1033 = vpack.c.bf16 %v971, %v971
        %v1034 = vpack.c.bf16 %v973, %v973
        %v1035 = vpack.c.bf16 %v1012, %v1012
        %vm1036 = vcmask 261120
        %v1038 = vsel %vm1036, %v1033, 0
        %v1041 = vsel %vm1036, %v1034, 0
        %1043 = vmatprep.subr.bf16.mxu0 0
        %1044 = vmatpush1.bf16.xpose.msra.mxu0 0
        %1045 = vmatprep.subr.bf16.mxu0 0
        %1046 = vmatpush1.bf16.xpose.msra.mxu0 0
        %1047 = vmatprep.subr.bf16.mxu0 0
        %1048 = vmatpush1.bf16.xpose.msra.mxu0 0
        %1049 = vmatprep.subr.bf16.mxu0 0
        %1050 = vmatpush1.bf16.xpose.msra.mxu0 0
        %1051 = vmatprep.subr.bf16.mxu0 0
        %1052 = vmatpush1.bf16.xpose.msra.mxu0 0
        %1053 = vmatprep.subr.bf16.mxu0 0
        %1054 = vmatpush1.bf16.xpose.msra.mxu0 0
        %1055 = vmatprep.subr.bf16.mxu0 0
        %1056 = vmatpush1.bf16.xpose.msra.mxu0 0
        %1057 = vmatprep.subr.bf16.mxu0 0
        %1058 = vmatpush1.bf16.xpose.msra.mxu0 %v1041
        %1059 = vmatprep.subr.bf16.mxu0 0
        %1060 = vmatpush2.bf16.xpose.msra.mxu0 0
        %1061 = vmatprep.subr.bf16.mxu0 0
        %1062 = vmatpush2.bf16.xpose.msra.mxu0 0
        %1063 = vmatprep.subr.bf16.mxu0 0
        %1064 = vmatpush2.bf16.xpose.msra.mxu0 0
        %1065 = vmatprep.subr.bf16.mxu0 0
        %1066 = vmatpush2.bf16.xpose.msra.mxu0 0
        %1067 = vmatprep.subr.bf16.mxu0 0
        %1068 = vmatpush2.bf16.xpose.msra.mxu0 0
        %1069 = vmatprep.subr.bf16.mxu0 0
        %1070 = vmatpush2.bf16.xpose.msra.mxu0 0
        %1071 = vmatprep.subr.bf16.mxu0 0
        %1072 = vmatpush2.bf16.xpose.msra.mxu0 0
        %1073 = vmatprep.subr.bf16.mxu0 0
        %1074 = vmatpush2.bf16.xpose.msra.mxu0 0
        %1075 = vmatprep.mubr.bf16.mxu0 0
        %1076 = vmatmul.mubr.bf16.gmra.mxu0 %v1038
        %v1077 = vpop.f32.mrf.mxu0
        %v1078 = vadd.f32 0.0, %v1077
        %v1079 = vpop.f32.mrf.mxu0
        %v1080 = vpop.f32.mrf.mxu0
        %v1081 = vpop.f32.mrf.mxu0
        %1082 = vdwg.mxu0
        %v1083 = vmul.f32 %v1078, 0.17677669
        %v1085 = vlaneseq
        %v1086 = vshrl.u32 %v1085, 7
        %v1087 = vsub.s32 0, %v1086
        %v1088 = vrot.slane %v757, %v1087
        %v1090 = vadd.f32 %v1083, %v1088
        %vm1091 = vcmask 64512
        %v1092 = vsel %vm1091, %v1090, -inf
        %1093 = vmax.xlane.f32.xlu0 %v1092
        %v1094 = vpop.xlane.xlu0 %1093
        %v1095 = vsub.f32 %v1090, %v1094
        %v1096 = vmul.f32 %v1095, 1.442695
        %v1097 = vpow.pop %v1096
        %v1098 = vsel %vm1091, %v1097, 0.0
        %1099 = vadd.xlane.f32.xlu0 %v1098
        %v1100 = vpop.xlane.xlu0 %1099
        %v1101 = vrcp.pop %v1100
        %v1102 = vmul.f32 %v1097, %v1101
        %v1103 = vpack.c.bf16 %v1102, %v1102
        %v1105 = vsel %vm1091, %v1103, 0
        %vm1107 = vcmask 1043456
        %v1109 = vsel %vm1107, %v1035, 0
        %1111 = vmatprep.subr.bf16.mxu0 0
        %1112 = vmatpush1.bf16.msra.mxu0 0
        %1113 = vmatprep.subr.bf16.mxu0 0
        %1114 = vmatpush1.bf16.msra.mxu0 0
        %1115 = vmatprep.subr.bf16.mxu0 0
        %1116 = vmatpush1.bf16.msra.mxu0 0
        %1117 = vmatprep.subr.bf16.mxu0 0
        %1118 = vmatpush1.bf16.msra.mxu0 0
        %1119 = vmatprep.subr.bf16.mxu0 0
        %1120 = vmatpush1.bf16.msra.mxu0 0
        %1121 = vmatprep.subr.bf16.mxu0 0
        %1122 = vmatpush1.bf16.msra.mxu0 0
        %1123 = vmatprep.subr.bf16.mxu0 0
        %1124 = vmatpush1.bf16.msra.mxu0 0
        %1125 = vmatprep.subr.bf16.mxu0 0
        %1126 = vmatpush1.bf16.msra.mxu0 %v1109
        %1127 = vmatprep.subr.bf16.mxu0 0
        %1128 = vmatpush2.bf16.msra.mxu0 0
        %1129 = vmatprep.subr.bf16.mxu0 0
        %1130 = vmatpush2.bf16.msra.mxu0 0
        %1131 = vmatprep.subr.bf16.mxu0 0
        %1132 = vmatpush2.bf16.msra.mxu0 0
        %1133 = vmatprep.subr.bf16.mxu0 0
        %1134 = vmatpush2.bf16.msra.mxu0 0
        %1135 = vmatprep.subr.bf16.mxu0 0
        %1136 = vmatpush2.bf16.msra.mxu0 0
        %1137 = vmatprep.subr.bf16.mxu0 0
        %1138 = vmatpush2.bf16.msra.mxu0 0
        %1139 = vmatprep.subr.bf16.mxu0 0
        %1140 = vmatpush2.bf16.msra.mxu0 0
        %1141 = vmatprep.subr.bf16.mxu0 0
        %1142 = vmatpush2.bf16.msra.mxu0 0
        %1143 = vmatprep.mubr.bf16.mxu0 0
        %1144 = vmatmul.mubr.bf16.gmra.mxu0 %v1105
        %v1145 = vpop.f32.mrf.mxu0
        %v1146 = vadd.f32 0.0, %v1145
        %v1147 = vpop.f32.mrf.mxu0
        %v1148 = vpop.f32.mrf.mxu0
        %v1149 = vpop.f32.mrf.mxu0
        %1150 = vdwg.mxu0
        %v1151 = vpack.c.bf16 %v1146, %v1146
        %1153 = vrot.lane.b32.xlu0 %v1033, 96
        %v1154 = vpop.permute.xlu0 %1153
        %1156 = vrot.lane.b32.xlu0 %v1034, 96
        %v1157 = vpop.permute.xlu0 %1156
        %v1159 = vsel %vm1036, %v1154, 0
        %v1162 = vsel %vm1036, %v1157, 0
        %1164 = vmatprep.subr.bf16.mxu0 0
        %1165 = vmatpush1.bf16.xpose.msra.mxu0 0
        %1166 = vmatprep.subr.bf16.mxu0 0
        %1167 = vmatpush1.bf16.xpose.msra.mxu0 0
        %1168 = vmatprep.subr.bf16.mxu0 0
        %1169 = vmatpush1.bf16.xpose.msra.mxu0 0
        %1170 = vmatprep.subr.bf16.mxu0 0
        %1171 = vmatpush1.bf16.xpose.msra.mxu0 0
        %1172 = vmatprep.subr.bf16.mxu0 0
        %1173 = vmatpush1.bf16.xpose.msra.mxu0 0
        %1174 = vmatprep.subr.bf16.mxu0 0
        %1175 = vmatpush1.bf16.xpose.msra.mxu0 0
        %1176 = vmatprep.subr.bf16.mxu0 0
        %1177 = vmatpush1.bf16.xpose.msra.mxu0 0
        %1178 = vmatprep.subr.bf16.mxu0 0
        %1179 = vmatpush1.bf16.xpose.msra.mxu0 %v1162
        %1180 = vmatprep.subr.bf16.mxu0 0
        %1181 = vmatpush2.bf16.xpose.msra.mxu0 0
        %1182 = vmatprep.subr.bf16.mxu0 0
        %1183 = vmatpush2.bf16.xpose.msra.mxu0 0
        %1184 = vmatprep.subr.bf16.mxu0 0
        %1185 = vmatpush2.bf16.xpose.msra.mxu0 0
        %1186 = vmatprep.subr.bf16.mxu0 0
        %1187 = vmatpush2.bf16.xpose.msra.mxu0 0
        %1188 = vmatprep.subr.bf16.mxu0 0
        %1189 = vmatpush2.bf16.xpose.msra.mxu0 0
        %1190 = vmatprep.subr.bf16.mxu0 0
        %1191 = vmatpush2.bf16.xpose.msra.mxu0 0
        %1192 = vmatprep.subr.bf16.mxu0 0
        %1193 = vmatpush2.bf16.xpose.msra.mxu0 0
        %1194 = vmatprep.subr.bf16.mxu0 0
        %1195 = vmatpush2.bf16.xpose.msra.mxu0 0
        %1196 = vmatprep.mubr.bf16.mxu0 0
        %1197 = vmatmul.mubr.bf16.gmra.mxu0 %v1159
        %v1198 = vpop.f32.mrf.mxu0
        %v1199 = vadd.f32 0.0, %v1198
        %v1200 = vpop.f32.mrf.mxu0
        %v1201 = vpop.f32.mrf.mxu0
        %v1202 = vpop.f32.mrf.mxu0
        %1203 = vdwg.mxu0
        %v1204 = vmul.f32 %v1199, 0.17677669
        %v1205 = vadd.f32 %v1204, %v1088
        %v1206 = vsel %vm1091, %v1205, -inf
        %1207 = vmax.xlane.f32.xlu0 %v1206
        %v1208 = vpop.xlane.xlu0 %1207
        %v1209 = vsub.f32 %v1205, %v1208
        %v1210 = vmul.f32 %v1209, 1.442695
        %v1211 = vpow.pop %v1210
        %v1212 = vsel %vm1091, %v1211, 0.0
        %1213 = vadd.xlane.f32.xlu0 %v1212
        %v1214 = vpop.xlane.xlu0 %1213
        %v1215 = vrcp.pop %v1214
        %v1216 = vmul.f32 %v1211, %v1215
        %v1217 = vpack.c.bf16 %v1216, %v1216
        %1219 = vrot.lane.b32.xlu0 %v1035, 96
        %v1220 = vpop.permute.xlu0 %1219
        %v1222 = vsel %vm1091, %v1217, 0
        %v1225 = vsel %vm1107, %v1220, 0
        %1227 = vmatprep.subr.bf16.mxu0 0
        %1228 = vmatpush1.bf16.msra.mxu0 0
        %1229 = vmatprep.subr.bf16.mxu0 0
        %1230 = vmatpush1.bf16.msra.mxu0 0
        %1231 = vmatprep.subr.bf16.mxu0 0
        %1232 = vmatpush1.bf16.msra.mxu0 0
        %1233 = vmatprep.subr.bf16.mxu0 0
        %1234 = vmatpush1.bf16.msra.mxu0 0
        %1235 = vmatprep.subr.bf16.mxu0 0
        %1236 = vmatpush1.bf16.msra.mxu0 0
        %1237 = vmatprep.subr.bf16.mxu0 0
        %1238 = vmatpush1.bf16.msra.mxu0 0
        %1239 = vmatprep.subr.bf16.mxu0 0
        %1240 = vmatpush1.bf16.msra.mxu0 0
        %1241 = vmatprep.subr.bf16.mxu0 0
        %1242 = vmatpush1.bf16.msra.mxu0 %v1225
        %1243 = vmatprep.subr.bf16.mxu0 0
        %1244 = vmatpush2.bf16.msra.mxu0 0
        %1245 = vmatprep.subr.bf16.mxu0 0
        %1246 = vmatpush2.bf16.msra.mxu0 0
        %1247 = vmatprep.subr.bf16.mxu0 0
        %1248 = vmatpush2.bf16.msra.mxu0 0
        %1249 = vmatprep.subr.bf16.mxu0 0
        %1250 = vmatpush2.bf16.msra.mxu0 0
        %1251 = vmatprep.subr.bf16.mxu0 0
        %1252 = vmatpush2.bf16.msra.mxu0 0
        %1253 = vmatprep.subr.bf16.mxu0 0
        %1254 = vmatpush2.bf16.msra.mxu0 0
        %1255 = vmatprep.subr.bf16.mxu0 0
        %1256 = vmatpush2.bf16.msra.mxu0 0
        %1257 = vmatprep.subr.bf16.mxu0 0
        %1258 = vmatpush2.bf16.msra.mxu0 0
        %1259 = vmatprep.mubr.bf16.mxu0 0
        %1260 = vmatmul.mubr.bf16.gmra.mxu0 %v1222
        %v1261 = vpop.f32.mrf.mxu0
        %v1262 = vadd.f32 0.0, %v1261
        %v1263 = vpop.f32.mrf.mxu0
        %v1264 = vpop.f32.mrf.mxu0
        %v1265 = vpop.f32.mrf.mxu0
        %1266 = vdwg.mxu0
        %v1267 = vpack.c.bf16 %v1262, %v1262
        %v1272 = vunpack.c.l.b16 %v1021
        %v1273 = vunpack.c.l.b16 %v1022
        %v1274 = vunpack.c.l.b16 %v1023
        %v1275 = vunpack.c.l.b16 %v1024
        %v1276 = vpack.c.b16 %v1273, %v1272
        %v1277 = vpack.c.b16 %v1275, %v1274
        %v1281 = vsel %vm1036, %v1267, 0
        %1283 = vmatprep.subr.bf16.mxu0 0
        %1284 = vmatpush1.bf16.msra.mxu0 0
        %1285 = vmatprep.subr.bf16.mxu0 0
        %1286 = vmatpush1.bf16.msra.mxu0 0
        %1287 = vmatprep.subr.bf16.mxu0 0
        %1288 = vmatpush1.bf16.msra.mxu0 0
        %1289 = vmatprep.subr.bf16.mxu0 0
        %1290 = vmatpush1.bf16.msra.mxu0 0
        %1291 = vmatprep.subr.bf16.mxu0 0
        %1292 = vmatpush1.bf16.msra.mxu0 0
        %1293 = vmatprep.subr.bf16.mxu0 0
        %1294 = vmatpush1.bf16.msra.mxu0 0
        %1295 = vmatprep.subr.bf16.mxu0 0
        %1296 = vmatpush1.bf16.msra.mxu0 %v1277
        %1297 = vmatprep.subr.bf16.mxu0 0
        %1298 = vmatpush1.bf16.msra.mxu0 %v1276
        %1299 = vmatprep.subr.bf16.mxu0 0
        %1300 = vmatpush2.bf16.msra.mxu0 0
        %1301 = vmatprep.subr.bf16.mxu0 0
        %1302 = vmatpush2.bf16.msra.mxu0 0
        %1303 = vmatprep.subr.bf16.mxu0 0
        %1304 = vmatpush2.bf16.msra.mxu0 0
        %1305 = vmatprep.subr.bf16.mxu0 0
        %1306 = vmatpush2.bf16.msra.mxu0 0
        %1307 = vmatprep.subr.bf16.mxu0 0
        %1308 = vmatpush2.bf16.msra.mxu0 0
        %1309 = vmatprep.subr.bf16.mxu0 0
        %1310 = vmatpush2.bf16.msra.mxu0 0
        %1311 = vmatprep.subr.bf16.mxu0 0
        %1312 = vmatpush2.bf16.msra.mxu0 0
        %1313 = vmatprep.subr.bf16.mxu0 0
        %1314 = vmatpush2.bf16.msra.mxu0 0
        %1315 = vmatprep.mubr.bf16.mxu0 0
        %1316 = vmatmul.mubr.bf16.gmra.mxu0 %v1281
        %v1317 = vpop.f32.mrf.mxu0
        %v1318 = vadd.f32 0.0, %v1317
        %v1319 = vpop.f32.mrf.mxu0
        %v1320 = vpop.f32.mrf.mxu0
        %v1321 = vpop.f32.mrf.mxu0
        %1322 = vdwg.mxu0
        %v1327 = vunpack.c.l.b16 %v1017
        %v1328 = vunpack.c.l.b16 %v1018
        %v1329 = vunpack.c.l.b16 %v1019
        %v1330 = vunpack.c.l.b16 %v1020
        %v1331 = vpack.c.b16 %v1328, %v1327
        %v1332 = vpack.c.b16 %v1330, %v1329
        %v1336 = vsel %vm1036, %v1151, 0
        %1338 = vmatprep.subr.bf16.mxu0 0
        %1339 = vmatpush1.bf16.msra.mxu0 0
        %1340 = vmatprep.subr.bf16.mxu0 0
        %1341 = vmatpush1.bf16.msra.mxu0 0
        %1342 = vmatprep.subr.bf16.mxu0 0
        %1343 = vmatpush1.bf16.msra.mxu0 0
        %1344 = vmatprep.subr.bf16.mxu0 0
        %1345 = vmatpush1.bf16.msra.mxu0 0
        %1346 = vmatprep.subr.bf16.mxu0 0
        %1347 = vmatpush1.bf16.msra.mxu0 0
        %1348 = vmatprep.subr.bf16.mxu0 0
        %1349 = vmatpush1.bf16.msra.mxu0 0
        %1350 = vmatprep.subr.bf16.mxu0 0
        %1351 = vmatpush1.bf16.msra.mxu0 %v1332
        %1352 = vmatprep.subr.bf16.mxu0 0
        %1353 = vmatpush1.bf16.msra.mxu0 %v1331
        %1354 = vmatprep.subr.bf16.mxu0 0
        %1355 = vmatpush2.bf16.msra.mxu0 0
        %1356 = vmatprep.subr.bf16.mxu0 0
        %1357 = vmatpush2.bf16.msra.mxu0 0
        %1358 = vmatprep.subr.bf16.mxu0 0
        %1359 = vmatpush2.bf16.msra.mxu0 0
        %1360 = vmatprep.subr.bf16.mxu0 0
        %1361 = vmatpush2.bf16.msra.mxu0 0
        %1362 = vmatprep.subr.bf16.mxu0 0
        %1363 = vmatpush2.bf16.msra.mxu0 0
        %1364 = vmatprep.subr.bf16.mxu0 0
        %1365 = vmatpush2.bf16.msra.mxu0 0
        %1366 = vmatprep.subr.bf16.mxu0 0
        %1367 = vmatpush2.bf16.msra.mxu0 0
        %1368 = vmatprep.subr.bf16.mxu0 0
        %1369 = vmatpush2.bf16.msra.mxu0 0
        %1370 = vmatprep.mubr.bf16.mxu0 0
        %1371 = vmatmul.mubr.bf16.gmra.mxu0 %v1336
        %v1372 = vpop.f32.mrf.mxu0
        %v1373 = vadd.f32 %v1318, %v1372
        %v1374 = vpop.f32.mrf.mxu0
        %v1375 = vpop.f32.mrf.mxu0
        %v1376 = vpop.f32.mrf.mxu0
        %1377 = vdwg.mxu0
        %1378 = vrot.lane.b32.xlu0 %v1033, 64
        %v1379 = vpop.permute.xlu0 %1378
        %1380 = vrot.lane.b32.xlu0 %v1034, 64
        %v1381 = vpop.permute.xlu0 %1380
        %v1383 = vsel %vm1036, %v1379, 0
        %v1386 = vsel %vm1036, %v1381, 0
        %1388 = vmatprep.subr.bf16.mxu0 0
        %1389 = vmatpush1.bf16.xpose.msra.mxu0 0
        %1390 = vmatprep.subr.bf16.mxu0 0
        %1391 = vmatpush1.bf16.xpose.msra.mxu0 0
        %1392 = vmatprep.subr.bf16.mxu0 0
        %1393 = vmatpush1.bf16.xpose.msra.mxu0 0
        %1394 = vmatprep.subr.bf16.mxu0 0
        %1395 = vmatpush1.bf16.xpose.msra.mxu0 0
        %1396 = vmatprep.subr.bf16.mxu0 0
        %1397 = vmatpush1.bf16.xpose.msra.mxu0 0
        %1398 = vmatprep.subr.bf16.mxu0 0
        %1399 = vmatpush1.bf16.xpose.msra.mxu0 0
        %1400 = vmatprep.subr.bf16.mxu0 0
        %1401 = vmatpush1.bf16.xpose.msra.mxu0 0
        %1402 = vmatprep.subr.bf16.mxu0 0
        %1403 = vmatpush1.bf16.xpose.msra.mxu0 %v1386
        %1404 = vmatprep.subr.bf16.mxu0 0
        %1405 = vmatpush2.bf16.xpose.msra.mxu0 0
        %1406 = vmatprep.subr.bf16.mxu0 0
        %1407 = vmatpush2.bf16.xpose.msra.mxu0 0
        %1408 = vmatprep.subr.bf16.mxu0 0
        %1409 = vmatpush2.bf16.xpose.msra.mxu0 0
        %1410 = vmatprep.subr.bf16.mxu0 0
        %1411 = vmatpush2.bf16.xpose.msra.mxu0 0
        %1412 = vmatprep.subr.bf16.mxu0 0
        %1413 = vmatpush2.bf16.xpose.msra.mxu0 0
        %1414 = vmatprep.subr.bf16.mxu0 0
        %1415 = vmatpush2.bf16.xpose.msra.mxu0 0
        %1416 = vmatprep.subr.bf16.mxu0 0
        %1417 = vmatpush2.bf16.xpose.msra.mxu0 0
        %1418 = vmatprep.subr.bf16.mxu0 0
        %1419 = vmatpush2.bf16.xpose.msra.mxu0 0
        %1420 = vmatprep.mubr.bf16.mxu0 0
        %1421 = vmatmul.mubr.bf16.gmra.mxu0 %v1383
        %v1422 = vpop.f32.mrf.mxu0
        %v1423 = vadd.f32 0.0, %v1422
        %v1424 = vpop.f32.mrf.mxu0
        %v1425 = vpop.f32.mrf.mxu0
        %v1426 = vpop.f32.mrf.mxu0
        %1427 = vdwg.mxu0
        %v1428 = vmul.f32 %v1423, 0.17677669
        %v1429 = vadd.f32 %v1428, %v1088
        %v1430 = vsel %vm1091, %v1429, -inf
        %1431 = vmax.xlane.f32.xlu0 %v1430
        %v1432 = vpop.xlane.xlu0 %1431
        %v1433 = vsub.f32 %v1429, %v1432
        %v1434 = vmul.f32 %v1433, 1.442695
        %v1435 = vpow.pop %v1434
        %v1436 = vsel %vm1091, %v1435, 0.0
        %1437 = vadd.xlane.f32.xlu0 %v1436
        %v1438 = vpop.xlane.xlu0 %1437
        %v1439 = vrcp.pop %v1438
        %v1440 = vmul.f32 %v1435, %v1439
        %v1441 = vpack.c.bf16 %v1440, %v1440
        %1442 = vrot.lane.b32.xlu0 %v1035, 64
        %v1443 = vpop.permute.xlu0 %1442
        %v1445 = vsel %vm1091, %v1441, 0
        %v1448 = vsel %vm1107, %v1443, 0
        %1450 = vmatprep.subr.bf16.mxu0 0
        %1451 = vmatpush1.bf16.msra.mxu0 0
        %1452 = vmatprep.subr.bf16.mxu0 0
        %1453 = vmatpush1.bf16.msra.mxu0 0
        %1454 = vmatprep.subr.bf16.mxu0 0
        %1455 = vmatpush1.bf16.msra.mxu0 0
        %1456 = vmatprep.subr.bf16.mxu0 0
        %1457 = vmatpush1.bf16.msra.mxu0 0
        %1458 = vmatprep.subr.bf16.mxu0 0
        %1459 = vmatpush1.bf16.msra.mxu0 0
        %1460 = vmatprep.subr.bf16.mxu0 0
        %1461 = vmatpush1.bf16.msra.mxu0 0
        %1462 = vmatprep.subr.bf16.mxu0 0
        %1463 = vmatpush1.bf16.msra.mxu0 0
        %1464 = vmatprep.subr.bf16.mxu0 0
        %1465 = vmatpush1.bf16.msra.mxu0 %v1448
        %1466 = vmatprep.subr.bf16.mxu0 0
        %1467 = vmatpush2.bf16.msra.mxu0 0
        %1468 = vmatprep.subr.bf16.mxu0 0
        %1469 = vmatpush2.bf16.msra.mxu0 0
        %1470 = vmatprep.subr.bf16.mxu0 0
        %1471 = vmatpush2.bf16.msra.mxu0 0
        %1472 = vmatprep.subr.bf16.mxu0 0
        %1473 = vmatpush2.bf16.msra.mxu0 0
        %1474 = vmatprep.subr.bf16.mxu0 0
        %1475 = vmatpush2.bf16.msra.mxu0 0
        %1476 = vmatprep.subr.bf16.mxu0 0
        %1477 = vmatpush2.bf16.msra.mxu0 0
        %1478 = vmatprep.subr.bf16.mxu0 0
        %1479 = vmatpush2.bf16.msra.mxu0 0
        %1480 = vmatprep.subr.bf16.mxu0 0
        %1481 = vmatpush2.bf16.msra.mxu0 0
        %1482 = vmatprep.mubr.bf16.mxu0 0
        %1483 = vmatmul.mubr.bf16.gmra.mxu0 %v1445
        %v1484 = vpop.f32.mrf.mxu0
        %v1485 = vadd.f32 0.0, %v1484
        %v1486 = vpop.f32.mrf.mxu0
        %v1487 = vpop.f32.mrf.mxu0
        %v1488 = vpop.f32.mrf.mxu0
        %1489 = vdwg.mxu0
        %v1490 = vpack.c.bf16 %v1485, %v1485
        %v1495 = vunpack.c.l.b16 %v1025
        %v1496 = vunpack.c.l.b16 %v1026
        %v1497 = vunpack.c.l.b16 %v1027
        %v1498 = vunpack.c.l.b16 %v1028
        %v1499 = vpack.c.b16 %v1496, %v1495
        %v1500 = vpack.c.b16 %v1498, %v1497
        %v1504 = vsel %vm1036, %v1490, 0
        %1506 = vmatprep.subr.bf16.mxu0 0
        %1507 = vmatpush1.bf16.msra.mxu0 0
        %1508 = vmatprep.subr.bf16.mxu0 0
        %1509 = vmatpush1.bf16.msra.mxu0 0
        %1510 = vmatprep.subr.bf16.mxu0 0
        %1511 = vmatpush1.bf16.msra.mxu0 0
        %1512 = vmatprep.subr.bf16.mxu0 0
        %1513 = vmatpush1.bf16.msra.mxu0 0
        %1514 = vmatprep.subr.bf16.mxu0 0
        %1515 = vmatpush1.bf16.msra.mxu0 0
        %1516 = vmatprep.subr.bf16.mxu0 0
        %1517 = vmatpush1.bf16.msra.mxu0 0
        %1518 = vmatprep.subr.bf16.mxu0 0
        %1519 = vmatpush1.bf16.msra.mxu0 %v1500
        %1520 = vmatprep.subr.bf16.mxu0 0
        %1521 = vmatpush1.bf16.msra.mxu0 %v1499
        %1522 = vmatprep.subr.bf16.mxu0 0
        %1523 = vmatpush2.bf16.msra.mxu0 0
        %1524 = vmatprep.subr.bf16.mxu0 0
        %1525 = vmatpush2.bf16.msra.mxu0 0
        %1526 = vmatprep.subr.bf16.mxu0 0
        %1527 = vmatpush2.bf16.msra.mxu0 0
        %1528 = vmatprep.subr.bf16.mxu0 0
        %1529 = vmatpush2.bf16.msra.mxu0 0
        %1530 = vmatprep.subr.bf16.mxu0 0
        %1531 = vmatpush2.bf16.msra.mxu0 0
        %1532 = vmatprep.subr.bf16.mxu0 0
        %1533 = vmatpush2.bf16.msra.mxu0 0
        %1534 = vmatprep.subr.bf16.mxu0 0
        %1535 = vmatpush2.bf16.msra.mxu0 0
        %1536 = vmatprep.subr.bf16.mxu0 0
        %1537 = vmatpush2.bf16.msra.mxu0 0
        %1538 = vmatprep.mubr.bf16.mxu0 0
        %1539 = vmatmul.mubr.bf16.gmra.mxu0 %v1504
        %v1540 = vpop.f32.mrf.mxu0
        %v1541 = vadd.f32 0.0, %v1540
        %v1542 = vpop.f32.mrf.mxu0
        %v1543 = vpop.f32.mrf.mxu0
        %v1544 = vpop.f32.mrf.mxu0
        %1545 = vdwg.mxu0
        %v1546 = vadd.f32 %v1373, %v1541
        %1547 = vrot.lane.b32.xlu0 %v1033, 32
        %v1548 = vpop.permute.xlu0 %1547
        %1549 = vrot.lane.b32.xlu0 %v1034, 32
        %v1550 = vpop.permute.xlu0 %1549
        %v1552 = vsel %vm1036, %v1548, 0
        %v1555 = vsel %vm1036, %v1550, 0
        %1557 = vmatprep.subr.bf16.mxu0 0
        %1558 = vmatpush1.bf16.xpose.msra.mxu0 0
        %1559 = vmatprep.subr.bf16.mxu0 0
        %1560 = vmatpush1.bf16.xpose.msra.mxu0 0
        %1561 = vmatprep.subr.bf16.mxu0 0
        %1562 = vmatpush1.bf16.xpose.msra.mxu0 0
        %1563 = vmatprep.subr.bf16.mxu0 0
        %1564 = vmatpush1.bf16.xpose.msra.mxu0 0
        %1565 = vmatprep.subr.bf16.mxu0 0
        %1566 = vmatpush1.bf16.xpose.msra.mxu0 0
        %1567 = vmatprep.subr.bf16.mxu0 0
        %1568 = vmatpush1.bf16.xpose.msra.mxu0 0
        %1569 = vmatprep.subr.bf16.mxu0 0
        %1570 = vmatpush1.bf16.xpose.msra.mxu0 0
        %1571 = vmatprep.subr.bf16.mxu0 0
        %1572 = vmatpush1.bf16.xpose.msra.mxu0 %v1555
        %1573 = vmatprep.subr.bf16.mxu0 0
        %1574 = vmatpush2.bf16.xpose.msra.mxu0 0
        %1575 = vmatprep.subr.bf16.mxu0 0
        %1576 = vmatpush2.bf16.xpose.msra.mxu0 0
        %1577 = vmatprep.subr.bf16.mxu0 0
        %1578 = vmatpush2.bf16.xpose.msra.mxu0 0
        %1579 = vmatprep.subr.bf16.mxu0 0
        %1580 = vmatpush2.bf16.xpose.msra.mxu0 0
        %1581 = vmatprep.subr.bf16.mxu0 0
        %1582 = vmatpush2.bf16.xpose.msra.mxu0 0
        %1583 = vmatprep.subr.bf16.mxu0 0
        %1584 = vmatpush2.bf16.xpose.msra.mxu0 0
        %1585 = vmatprep.subr.bf16.mxu0 0
        %1586 = vmatpush2.bf16.xpose.msra.mxu0 0
        %1587 = vmatprep.subr.bf16.mxu0 0
        %1588 = vmatpush2.bf16.xpose.msra.mxu0 0
        %1589 = vmatprep.mubr.bf16.mxu0 0
        %1590 = vmatmul.mubr.bf16.gmra.mxu0 %v1552
        %v1591 = vpop.f32.mrf.mxu0
        %v1592 = vadd.f32 0.0, %v1591
        %v1593 = vpop.f32.mrf.mxu0
        %v1594 = vpop.f32.mrf.mxu0
        %v1595 = vpop.f32.mrf.mxu0
        %1596 = vdwg.mxu0
        %v1597 = vmul.f32 %v1592, 0.17677669
        %v1598 = vadd.f32 %v1597, %v1088
        %v1599 = vsel %vm1091, %v1598, -inf
        %1600 = vmax.xlane.f32.xlu0 %v1599
        %v1601 = vpop.xlane.xlu0 %1600
        %v1602 = vsub.f32 %v1598, %v1601
        %v1603 = vmul.f32 %v1602, 1.442695
        %v1604 = vpow.pop %v1603
        %v1605 = vsel %vm1091, %v1604, 0.0
        %1606 = vadd.xlane.f32.xlu0 %v1605
        %v1607 = vpop.xlane.xlu0 %1606
        %v1608 = vrcp.pop %v1607
        %v1609 = vmul.f32 %v1604, %v1608
        %v1610 = vpack.c.bf16 %v1609, %v1609
        %1611 = vrot.lane.b32.xlu0 %v1035, 32
        %v1612 = vpop.permute.xlu0 %1611
        %v1614 = vsel %vm1091, %v1610, 0
        %v1617 = vsel %vm1107, %v1612, 0
        %1619 = vmatprep.subr.bf16.mxu0 0
        %1620 = vmatpush1.bf16.msra.mxu0 0
        %1621 = vmatprep.subr.bf16.mxu0 0
        %1622 = vmatpush1.bf16.msra.mxu0 0
        %1623 = vmatprep.subr.bf16.mxu0 0
        %1624 = vmatpush1.bf16.msra.mxu0 0
        %1625 = vmatprep.subr.bf16.mxu0 0
        %1626 = vmatpush1.bf16.msra.mxu0 0
        %1627 = vmatprep.subr.bf16.mxu0 0
        %1628 = vmatpush1.bf16.msra.mxu0 0
        %1629 = vmatprep.subr.bf16.mxu0 0
        %1630 = vmatpush1.bf16.msra.mxu0 0
        %1631 = vmatprep.subr.bf16.mxu0 0
        %1632 = vmatpush1.bf16.msra.mxu0 0
        %1633 = vmatprep.subr.bf16.mxu0 0
        %1634 = vmatpush1.bf16.msra.mxu0 %v1617
        %1635 = vmatprep.subr.bf16.mxu0 0
        %1636 = vmatpush2.bf16.msra.mxu0 0
        %1637 = vmatprep.subr.bf16.mxu0 0
        %1638 = vmatpush2.bf16.msra.mxu0 0
        %1639 = vmatprep.subr.bf16.mxu0 0
        %1640 = vmatpush2.bf16.msra.mxu0 0
        %1641 = vmatprep.subr.bf16.mxu0 0
        %1642 = vmatpush2.bf16.msra.mxu0 0
        %1643 = vmatprep.subr.bf16.mxu0 0
        %1644 = vmatpush2.bf16.msra.mxu0 0
        %1645 = vmatprep.subr.bf16.mxu0 0
        %1646 = vmatpush2.bf16.msra.mxu0 0
        %1647 = vmatprep.subr.bf16.mxu0 0
        %1648 = vmatpush2.bf16.msra.mxu0 0
        %1649 = vmatprep.subr.bf16.mxu0 0
        %1650 = vmatpush2.bf16.msra.mxu0 0
        %1651 = vmatprep.mubr.bf16.mxu0 0
        %1652 = vmatmul.mubr.bf16.gmra.mxu0 %v1614
        %v1653 = vpop.f32.mrf.mxu0
        %v1654 = vadd.f32 0.0, %v1653
        %v1655 = vpop.f32.mrf.mxu0
        %v1656 = vpop.f32.mrf.mxu0
        %v1657 = vpop.f32.mrf.mxu0
        %1658 = vdwg.mxu0
        %v1659 = vpack.c.bf16 %v1654, %v1654
        %v1664 = vunpack.c.l.b16 %v1029
        %v1665 = vunpack.c.l.b16 %v1030
        %v1666 = vunpack.c.l.b16 %v1031
        %v1667 = vunpack.c.l.b16 %v1032
        %v1668 = vpack.c.b16 %v1665, %v1664
        %v1669 = vpack.c.b16 %v1667, %v1666
        %v1673 = vsel %vm1036, %v1659, 0
        %1675 = vmatprep.subr.bf16.mxu0 0
        %1676 = vmatpush1.bf16.msra.mxu0 0
        %1677 = vmatprep.subr.bf16.mxu0 0
        %1678 = vmatpush1.bf16.msra.mxu0 0
        %1679 = vmatprep.subr.bf16.mxu0 0
        %1680 = vmatpush1.bf16.msra.mxu0 0
        %1681 = vmatprep.subr.bf16.mxu0 0
        %1682 = vmatpush1.bf16.msra.mxu0 0
        %1683 = vmatprep.subr.bf16.mxu0 0
        %1684 = vmatpush1.bf16.msra.mxu0 0
        %1685 = vmatprep.subr.bf16.mxu0 0
        %1686 = vmatpush1.bf16.msra.mxu0 0
        %1687 = vmatprep.subr.bf16.mxu0 0
        %1688 = vmatpush1.bf16.msra.mxu0 %v1669
        %1689 = vmatprep.subr.bf16.mxu0 0
        %1690 = vmatpush1.bf16.msra.mxu0 %v1668
        %1691 = vmatprep.subr.bf16.mxu0 0
        %1692 = vmatpush2.bf16.msra.mxu0 0
        %1693 = vmatprep.subr.bf16.mxu0 0
        %1694 = vmatpush2.bf16.msra.mxu0 0
        %1695 = vmatprep.subr.bf16.mxu0 0
        %1696 = vmatpush2.bf16.msra.mxu0 0
        %1697 = vmatprep.subr.bf16.mxu0 0
        %1698 = vmatpush2.bf16.msra.mxu0 0
        %1699 = vmatprep.subr.bf16.mxu0 0
        %1700 = vmatpush2.bf16.msra.mxu0 0
        %1701 = vmatprep.subr.bf16.mxu0 0
        %1702 = vmatpush2.bf16.msra.mxu0 0
        %1703 = vmatprep.subr.bf16.mxu0 0
        %1704 = vmatpush2.bf16.msra.mxu0 0
        %1705 = vmatprep.subr.bf16.mxu0 0
        %1706 = vmatpush2.bf16.msra.mxu0 0
        %1707 = vmatprep.mubr.bf16.mxu0 0
        %1708 = vmatmul.mubr.bf16.gmra.mxu0 %v1673
        %v1709 = vpop.f32.mrf.mxu0
        %v1710 = vadd.f32 0.0, %v1709
        %v1711 = vpop.f32.mrf.mxu0
        %v1712 = vpop.f32.mrf.mxu0
        %v1713 = vpop.f32.mrf.mxu0
        %1714 = vdwg.mxu0
        %v1715 = vadd.f32 %v1546, %v1710
        %v1716 = vld [vmem:[%s7] sm:$0x1]
        %v1718 = vlaneseq
        %v1719 = vshrl.u32 %v1718, 7
        %v1720 = vsub.s32 0, %v1719
        %v1721 = vrot.slane %v1716, %v1720
        %v1723 = vadd.f32 %v1715, %v1721
        %v1724 = vadd.f32 %v756, %v1723
        %v1725 = vld [vmem:[%s8] sm:$0x1]
        %v1726 = vld [vmem:[%s9] sm:$0x1]
        %1727 = vadd.xlane.f32.xlu0 %v1724
        %v1728 = vpop.xlane.xlu0 %1727
        %v1729 = vmul.f32 %v1728, %v730
        %v1730 = vmul.f32 %v1724, %v1724
        %1731 = vadd.xlane.f32.xlu0 %v1730
        %v1732 = vpop.xlane.xlu0 %1731
        %v1733 = vmul.f32 %v1732, %v730
        %v1734 = vmul.f32 %v1729, %v1729
        %v1735 = vsub.f32 %v1733, %v1734
        %v1736 = vmax.f32 %v1735, 0.0
        %v1737 = vsub.f32 %v1724, %v1729
        %v1738 = vadd.f32 %v1736, 1e-12
        %v1739 = vrsqrt.pop %v1738
        %v1740 = vmul.f32 %v1737, %v1739
        %v1742 = vlaneseq
        %v1743 = vshrl.u32 %v1742, 7
        %v1744 = vsub.s32 0, %v1743
        %v1745 = vrot.slane %v1725, %v1744
        %v1747 = vmul.f32 %v1740, %v1745
        %v1749 = vlaneseq
        %v1750 = vshrl.u32 %v1749, 7
        %v1751 = vsub.s32 0, %v1750
        %v1752 = vrot.slane %v1726, %v1751
        %v1754 = vadd.f32 %v1747, %v1752
        %v1755 = vpack.c.bf16 %v1754, %v1754
        %v1756 = vld [vmem:[#allocation5] sm:$0xff]
        %v1757 = vld [vmem:[#allocation5 + $0x8] sm:$0xff]
        %v1758 = vld [vmem:[#allocation5 + $0x10] sm:$0xff]
        %v1759 = vld [vmem:[#allocation5 + $0x18] sm:$0xff]
        %v1760 = vld [vmem:[#allocation5 + $0x20] sm:$0xff]
        %v1761 = vld [vmem:[#allocation5 + $0x28] sm:$0xff]
        %v1762 = vld [vmem:[#allocation5 + $0x30] sm:$0xff]
        %v1763 = vld [vmem:[#allocation5 + $0x38] sm:$0xff]
        %v1764 = vld [vmem:[#allocation5 + $0x40] sm:$0xff]
        %v1765 = vld [vmem:[#allocation5 + $0x48] sm:$0xff]
        %v1766 = vld [vmem:[#allocation5 + $0x50] sm:$0xff]
        %v1767 = vld [vmem:[#allocation5 + $0x58] sm:$0xff]
        %v1768 = vld [vmem:[#allocation5 + $0x60] sm:$0xff]
        %v1769 = vld [vmem:[#allocation5 + $0x68] sm:$0xff]
        %v1770 = vld [vmem:[#allocation5 + $0x70] sm:$0xff]
        %v1771 = vld [vmem:[#allocation5 + $0x78] sm:$0xff]
        %v1772 = vld [vmem:[%s11] sm:$0x3]
        %v1774 = vlaneseq
        %v1775 = vshrl.u32 %v1774, 7
        %v1776 = vsub.s32 0, %v1775
        %v1777 = vrot.slane %v1772, %v1776
        %v1778 = vlaneseq
        %v1779 = vshrl.u32 %v1778, 7
        %v1780 = vsub.s32 1, %v1779
        %v1781 = vrot.slane %v1772, %v1780
        %v1800 = vunpack.c.l.b16 %v1756
        %v1801 = vunpack.c.h.b16 %v1756
        %v1802 = vunpack.c.l.b16 %v1757
        %v1803 = vunpack.c.h.b16 %v1757
        %v1804 = vunpack.c.l.b16 %v1758
        %v1805 = vunpack.c.h.b16 %v1758
        %v1806 = vunpack.c.l.b16 %v1759
        %v1807 = vunpack.c.h.b16 %v1759
        %v1808 = vunpack.c.l.b16 %v1760
        %v1809 = vunpack.c.h.b16 %v1760
        %v1810 = vunpack.c.l.b16 %v1761
        %v1811 = vunpack.c.h.b16 %v1761
        %v1812 = vunpack.c.l.b16 %v1762
        %v1813 = vunpack.c.h.b16 %v1762
        %v1814 = vunpack.c.l.b16 %v1763
        %v1815 = vunpack.c.h.b16 %v1763
        %v1816 = vunpack.c.l.b16 %v1764
        %v1817 = vunpack.c.h.b16 %v1764
        %v1818 = vunpack.c.l.b16 %v1765
        %v1819 = vunpack.c.h.b16 %v1765
        %v1820 = vunpack.c.l.b16 %v1766
        %v1821 = vunpack.c.h.b16 %v1766
        %v1822 = vunpack.c.l.b16 %v1767
        %v1823 = vunpack.c.h.b16 %v1767
        %v1824 = vunpack.c.l.b16 %v1768
        %v1825 = vunpack.c.h.b16 %v1768
        %v1826 = vunpack.c.l.b16 %v1769
        %v1827 = vunpack.c.h.b16 %v1769
        %v1828 = vunpack.c.l.b16 %v1770
        %v1829 = vunpack.c.h.b16 %v1770
        %v1830 = vunpack.c.l.b16 %v1771
        %v1831 = vunpack.c.h.b16 %v1771
        %v1832 = vpack.c.b16 %v1802, %v1800
        %v1833 = vpack.c.b16 %v1803, %v1801
        %v1834 = vpack.c.b16 %v1806, %v1804
        %v1835 = vpack.c.b16 %v1807, %v1805
        %v1836 = vpack.c.b16 %v1810, %v1808
        %v1837 = vpack.c.b16 %v1811, %v1809
        %v1838 = vpack.c.b16 %v1814, %v1812
        %v1839 = vpack.c.b16 %v1815, %v1813
        %v1840 = vpack.c.b16 %v1818, %v1816
        %v1841 = vpack.c.b16 %v1819, %v1817
        %v1842 = vpack.c.b16 %v1822, %v1820
        %v1843 = vpack.c.b16 %v1823, %v1821
        %v1844 = vpack.c.b16 %v1826, %v1824
        %v1845 = vpack.c.b16 %v1827, %v1825
        %v1846 = vpack.c.b16 %v1830, %v1828
        %v1847 = vpack.c.b16 %v1831, %v1829
        %1864 = vmatprep.subr.bf16.mxu0 %v1847
        %1865 = vmatpush1.bf16.msra.mxu0 %v1846
        %1866 = vmatprep.subr.bf16.mxu0 %v1845
        %1867 = vmatpush1.bf16.msra.mxu0 %v1844
        %1868 = vmatprep.subr.bf16.mxu0 %v1843
        %1869 = vmatpush1.bf16.msra.mxu0 %v1842
        %1870 = vmatprep.subr.bf16.mxu0 %v1841
        %1871 = vmatpush1.bf16.msra.mxu0 %v1840
        %1872 = vmatprep.subr.bf16.mxu0 %v1839
        %1873 = vmatpush1.bf16.msra.mxu0 %v1838
        %1874 = vmatprep.subr.bf16.mxu0 %v1837
        %1875 = vmatpush1.bf16.msra.mxu0 %v1836
        %1876 = vmatprep.subr.bf16.mxu0 %v1835
        %1877 = vmatpush1.bf16.msra.mxu0 %v1834
        %1878 = vmatprep.subr.bf16.mxu0 %v1833
        %1879 = vmatpush1.bf16.msra.mxu0 %v1832
        %1880 = vmatprep.subr.bf16.mxu0 0
        %1881 = vmatpush2.bf16.msra.mxu0 0
        %1882 = vmatprep.subr.bf16.mxu0 0
        %1883 = vmatpush2.bf16.msra.mxu0 0
        %1884 = vmatprep.subr.bf16.mxu0 0
        %1885 = vmatpush2.bf16.msra.mxu0 0
        %1886 = vmatprep.subr.bf16.mxu0 0
        %1887 = vmatpush2.bf16.msra.mxu0 0
        %1888 = vmatprep.subr.bf16.mxu0 0
        %1889 = vmatpush2.bf16.msra.mxu0 0
        %1890 = vmatprep.subr.bf16.mxu0 0
        %1891 = vmatpush2.bf16.msra.mxu0 0
        %1892 = vmatprep.subr.bf16.mxu0 0
        %1893 = vmatpush2.bf16.msra.mxu0 0
        %1894 = vmatprep.subr.bf16.mxu0 0
        %1895 = vmatpush2.bf16.msra.mxu0 0
        %1896 = vmatprep.mubr.bf16.mxu0 0
        %1897 = vmatmul.mubr.bf16.gmra.mxu0 %v1755
        %v1898 = vpop.f32.mrf.mxu0
        %v1899 = vadd.f32 %v1777, %v1898
        %v1900 = vpop.f32.mrf.mxu0
        %v1901 = vadd.f32 %v1781, %v1900
        %v1902 = vpop.f32.mrf.mxu0
        %v1903 = vpop.f32.mrf.mxu0
        %1904 = vdwg.mxu0
        %v1905 = vmul.f32 %v1899, 0.5
        %v1906 = vmul.f32 %v1901, 0.5
        %v1907 = vmul.f32 %v1899, 0.044715
        %v1908 = vmul.f32 %v1901, 0.044715
        %v1909 = vmul.f32 %v1907, %v1899
        %v1910 = vmul.f32 %v1908, %v1901
        %v1911 = vmul.f32 %v1909, %v1899
        %v1912 = vmul.f32 %v1910, %v1901
        %v1913 = vadd.f32 %v1899, %v1911
        %v1914 = vadd.f32 %v1901, %v1912
        %v1915 = vmul.f32 %v1913, 0.7978846
        %v1916 = vmul.f32 %v1914, 0.7978846
        %v1917 = vtanh.pop %v1915
        %v1918 = vtanh.pop %v1916
        %v1919 = vadd.f32 %v1917, 1.0
        %v1920 = vadd.f32 %v1918, 1.0
        %v1921 = vmul.f32 %v1905, %v1919
        %v1922 = vmul.f32 %v1906, %v1920
        %v1923 = vpack.c.bf16 %v1921, %v1921
        %v1924 = vpack.c.bf16 %v1922, %v1922
        %v1925 = vld [vmem:[#allocation7] sm:$0xf]
        %v1926 = vld [vmem:[#allocation7 + $0x4] sm:$0xf]
        %v1927 = vld [vmem:[#allocation7 + $0x8] sm:$0xf]
        %v1928 = vld [vmem:[#allocation7 + $0xc] sm:$0xf]
        %v1929 = vld [vmem:[#allocation7 + $0x10] sm:$0xf]
        %v1930 = vld [vmem:[#allocation7 + $0x14] sm:$0xf]
        %v1931 = vld [vmem:[#allocation7 + $0x18] sm:$0xf]
        %v1932 = vld [vmem:[#allocation7 + $0x1c] sm:$0xf]
        %v1933 = vld [vmem:[#allocation7 + $0x20] sm:$0xf]
        %v1934 = vld [vmem:[#allocation7 + $0x24] sm:$0xf]
        %v1935 = vld [vmem:[#allocation7 + $0x28] sm:$0xf]
        %v1936 = vld [vmem:[#allocation7 + $0x2c] sm:$0xf]
        %v1937 = vld [vmem:[#allocation7 + $0x30] sm:$0xf]
        %v1938 = vld [vmem:[#allocation7 + $0x34] sm:$0xf]
        %v1939 = vld [vmem:[#allocation7 + $0x38] sm:$0xf]
        %v1940 = vld [vmem:[#allocation7 + $0x3c] sm:$0xf]
        %v1941 = vld [vmem:[#allocation7 + $0x40] sm:$0xf]
        %v1942 = vld [vmem:[#allocation7 + $0x44] sm:$0xf]
        %v1943 = vld [vmem:[#allocation7 + $0x48] sm:$0xf]
        %v1944 = vld [vmem:[#allocation7 + $0x4c] sm:$0xf]
        %v1945 = vld [vmem:[#allocation7 + $0x50] sm:$0xf]
        %v1946 = vld [vmem:[#allocation7 + $0x54] sm:$0xf]
        %v1947 = vld [vmem:[#allocation7 + $0x58] sm:$0xf]
        %v1948 = vld [vmem:[#allocation7 + $0x5c] sm:$0xf]
        %v1949 = vld [vmem:[#allocation7 + $0x60] sm:$0xf]
        %v1950 = vld [vmem:[#allocation7 + $0x64] sm:$0xf]
        %v1951 = vld [vmem:[#allocation7 + $0x68] sm:$0xf]
        %v1952 = vld [vmem:[#allocation7 + $0x6c] sm:$0xf]
        %v1953 = vld [vmem:[#allocation7 + $0x70] sm:$0xf]
        %v1954 = vld [vmem:[#allocation7 + $0x74] sm:$0xf]
        %v1955 = vld [vmem:[#allocation7 + $0x78] sm:$0xf]
        %v1956 = vld [vmem:[#allocation7 + $0x7c] sm:$0xf]
        %v1957 = vld [vmem:[%s13] sm:$0x1]
        %v1959 = vlaneseq
        %v1960 = vshrl.u32 %v1959, 7
        %v1961 = vsub.s32 0, %v1960
        %v1962 = vrot.slane %v1957, %v1961
        %v1996 = vunpack.c.l.b16 %v1925
        %v1997 = vunpack.c.l.b16 %v1926
        %v1998 = vunpack.c.l.b16 %v1927
        %v1999 = vunpack.c.l.b16 %v1928
        %v2000 = vunpack.c.l.b16 %v1929
        %v2001 = vunpack.c.l.b16 %v1930
        %v2002 = vunpack.c.l.b16 %v1931
        %v2003 = vunpack.c.l.b16 %v1932
        %v2004 = vunpack.c.l.b16 %v1933
        %v2005 = vunpack.c.l.b16 %v1934
        %v2006 = vunpack.c.l.b16 %v1935
        %v2007 = vunpack.c.l.b16 %v1936
        %v2008 = vunpack.c.l.b16 %v1937
        %v2009 = vunpack.c.l.b16 %v1938
        %v2010 = vunpack.c.l.b16 %v1939
        %v2011 = vunpack.c.l.b16 %v1940
        %v2012 = vunpack.c.l.b16 %v1941
        %v2013 = vunpack.c.l.b16 %v1942
        %v2014 = vunpack.c.l.b16 %v1943
        %v2015 = vunpack.c.l.b16 %v1944
        %v2016 = vunpack.c.l.b16 %v1945
        %v2017 = vunpack.c.l.b16 %v1946
        %v2018 = vunpack.c.l.b16 %v1947
        %v2019 = vunpack.c.l.b16 %v1948
        %v2020 = vunpack.c.l.b16 %v1949
        %v2021 = vunpack.c.l.b16 %v1950
        %v2022 = vunpack.c.l.b16 %v1951
        %v2023 = vunpack.c.l.b16 %v1952
        %v2024 = vunpack.c.l.b16 %v1953
        %v2025 = vunpack.c.l.b16 %v1954
        %v2026 = vunpack.c.l.b16 %v1955
        %v2027 = vunpack.c.l.b16 %v1956
        %v2028 = vpack.c.b16 %v1997, %v1996
        %v2029 = vpack.c.b16 %v1999, %v1998
        %v2030 = vpack.c.b16 %v2001, %v2000
        %v2031 = vpack.c.b16 %v2003, %v2002
        %v2032 = vpack.c.b16 %v2005, %v2004
        %v2033 = vpack.c.b16 %v2007, %v2006
        %v2034 = vpack.c.b16 %v2009, %v2008
        %v2035 = vpack.c.b16 %v2011, %v2010
        %v2036 = vpack.c.b16 %v2013, %v2012
        %v2037 = vpack.c.b16 %v2015, %v2014
        %v2038 = vpack.c.b16 %v2017, %v2016
        %v2039 = vpack.c.b16 %v2019, %v2018
        %v2040 = vpack.c.b16 %v2021, %v2020
        %v2041 = vpack.c.b16 %v2023, %v2022
        %v2042 = vpack.c.b16 %v2025, %v2024
        %v2043 = vpack.c.b16 %v2027, %v2026
        %2060 = vmatprep.subr.bf16.mxu0 0
        %2061 = vmatpush1.bf16.msra.mxu0 %v2035
        %2062 = vmatprep.subr.bf16.mxu0 0
        %2063 = vmatpush1.bf16.msra.mxu0 %v2034
        %2064 = vmatprep.subr.bf16.mxu0 0
        %2065 = vmatpush1.bf16.msra.mxu0 %v2033
        %2066 = vmatprep.subr.bf16.mxu0 0
        %2067 = vmatpush1.bf16.msra.mxu0 %v2032
        %2068 = vmatprep.subr.bf16.mxu0 0
        %2069 = vmatpush1.bf16.msra.mxu0 %v2031
        %2070 = vmatprep.subr.bf16.mxu0 0
        %2071 = vmatpush1.bf16.msra.mxu0 %v2030
        %2072 = vmatprep.subr.bf16.mxu0 0
        %2073 = vmatpush1.bf16.msra.mxu0 %v2029
        %2074 = vmatprep.subr.bf16.mxu0 0
        %2075 = vmatpush1.bf16.msra.mxu0 %v2028
        %2076 = vmatprep.subr.bf16.mxu0 0
        %2077 = vmatpush2.bf16.msra.mxu0 %v2043
        %2078 = vmatprep.subr.bf16.mxu0 0
        %2079 = vmatpush2.bf16.msra.mxu0 %v2042
        %2080 = vmatprep.subr.bf16.mxu0 0
        %2081 = vmatpush2.bf16.msra.mxu0 %v2041
        %2082 = vmatprep.subr.bf16.mxu0 0
        %2083 = vmatpush2.bf16.msra.mxu0 %v2040
        %2084 = vmatprep.subr.bf16.mxu0 0
        %2085 = vmatpush2.bf16.msra.mxu0 %v2039
        %2086 = vmatprep.subr.bf16.mxu0 0
        %2087 = vmatpush2.bf16.msra.mxu0 %v2038
        %2088 = vmatprep.subr.bf16.mxu0 0
        %2089 = vmatpush2.bf16.msra.mxu0 %v2037
        %2090 = vmatprep.subr.bf16.mxu0 0
        %2091 = vmatpush2.bf16.msra.mxu0 %v2036
        %2092 = vmatprep.mubr.bf16.mxu0 %v1924
        %2093 = vmatmul.mubr.bf16.gmra.mxu0 %v1923
        %v2094 = vpop.f32.mrf.mxu0
        %v2095 = vadd.f32 %v1962, %v2094
        %v2096 = vpop.f32.mrf.mxu0
        %v2097 = vpop.f32.mrf.mxu0
        %v2098 = vpop.f32.mrf.mxu0
        %2099 = vdwg.mxu0
        %v2100 = vadd.f32 %v1754, %v2095
        %v2101 = vld [vmem:[%s14] sm:$0x1]
        %v2102 = vld [vmem:[#allocation8] sm:$0x1]
        %2103 = vadd.xlane.f32.xlu0 %v2100
        %v2104 = vpop.xlane.xlu0 %2103
        %v2105 = vmul.f32 %v2104, %v730
        %v2106 = vmul.f32 %v2100, %v2100
        %2107 = vadd.xlane.f32.xlu0 %v2106
        %v2108 = vpop.xlane.xlu0 %2107
        %v2109 = vmul.f32 %v2108, %v730
        %v2110 = vmul.f32 %v2105, %v2105
        %v2111 = vsub.f32 %v2109, %v2110
        %v2112 = vmax.f32 %v2111, 0.0
        %v2113 = vsub.f32 %v2100, %v2105
        %v2114 = vadd.f32 %v2112, 1e-12
        %v2115 = vrsqrt.pop %v2114
        %v2116 = vmul.f32 %v2113, %v2115
        %v2118 = vlaneseq
        %v2119 = vshrl.u32 %v2118, 7
        %v2120 = vsub.s32 0, %v2119
        %v2121 = vrot.slane %v2101, %v2120
        %v2123 = vmul.f32 %v2116, %v2121
        %v2125 = vlaneseq
        %v2126 = vshrl.u32 %v2125, 7
        %v2127 = vsub.s32 0, %v2126
        %v2128 = vrot.slane %v2102, %v2127
        %v2130 = vadd.f32 %v2123, %v2128
        %v2131 = vpack.c.bf16 %v2130, %v2130
        %s2132 = scalar_lea.vmem [#allocation2], 192
        %v2133 = vld [vmem:[%s2132] sm:$0xff]
        %v2134 = vld [vmem:[%s2132 + $0x8] sm:$0xf]
        %v2135 = vld [vmem:[%s2132 + $0xc] sm:$0xff]
        %v2136 = vld [vmem:[%s2132 + $0x14] sm:$0xf]
        %v2137 = vld [vmem:[%s2132 + $0x18] sm:$0xff]
        %v2138 = vld [vmem:[%s2132 + $0x20] sm:$0xf]
        %v2139 = vld [vmem:[%s2132 + $0x24] sm:$0xff]
        %v2140 = vld [vmem:[%s2132 + $0x2c] sm:$0xf]
        %v2141 = vld [vmem:[%s2132 + $0x30] sm:$0xff]
        %v2142 = vld [vmem:[%s2132 + $0x38] sm:$0xf]
        %v2143 = vld [vmem:[%s2132 + $0x3c] sm:$0xff]
        %v2144 = vld [vmem:[%s2132 + $0x44] sm:$0xf]
        %v2145 = vld [vmem:[%s2132 + $0x48] sm:$0xff]
        %v2146 = vld [vmem:[%s2132 + $0x50] sm:$0xf]
        %v2147 = vld [vmem:[%s2132 + $0x54] sm:$0xff]
        %v2148 = vld [vmem:[%s2132 + $0x5c] sm:$0xf]
        %v2149 = vld [vmem:[%s2132 + $0x60] sm:$0xff]
        %v2150 = vld [vmem:[%s2132 + $0x68] sm:$0xf]
        %v2151 = vld [vmem:[%s2132 + $0x6c] sm:$0xff]
        %v2152 = vld [vmem:[%s2132 + $0x74] sm:$0xf]
        %v2153 = vld [vmem:[%s2132 + $0x78] sm:$0xff]
        %v2154 = vld [vmem:[%s2132 + $0x80] sm:$0xf]
        %v2155 = vld [vmem:[%s2132 + $0x84] sm:$0xff]
        %v2156 = vld [vmem:[%s2132 + $0x8c] sm:$0xf]
        %v2157 = vld [vmem:[%s2132 + $0x90] sm:$0xff]
        %v2158 = vld [vmem:[%s2132 + $0x98] sm:$0xf]
        %v2159 = vld [vmem:[%s2132 + $0x9c] sm:$0xff]
        %v2160 = vld [vmem:[%s2132 + $0xa4] sm:$0xf]
        %v2161 = vld [vmem:[%s2132 + $0xa8] sm:$0xff]
        %v2162 = vld [vmem:[%s2132 + $0xb0] sm:$0xf]
        %v2163 = vld [vmem:[%s2132 + $0xb4] sm:$0xff]
        %v2164 = vld [vmem:[%s2132 + $0xbc] sm:$0xf]
        %s2165 = scalar_lea.vmem %s5, 3
        %v2166 = vld [vmem:[%s2165] sm:$0x7]
        %v2168 = vlaneseq
        %v2169 = vshrl.u32 %v2168, 7
        %v2170 = vsub.s32 0, %v2169
        %v2171 = vrot.slane %v2166, %v2170
        %v2172 = vlaneseq
        %v2173 = vshrl.u32 %v2172, 7
        %v2174 = vsub.s32 1, %v2173
        %v2175 = vrot.slane %v2166, %v2174
        %v2176 = vlaneseq
        %v2177 = vshrl.u32 %v2176, 7
        %v2178 = vsub.s32 2, %v2177
        %v2179 = vrot.slane %v2166, %v2178
        %v2215 = vunpack.c.l.b16 %v2133
        %v2216 = vunpack.c.h.b16 %v2133
        %v2217 = vunpack.c.l.b16 %v2134
        %v2218 = vunpack.c.l.b16 %v2135
        %v2219 = vunpack.c.h.b16 %v2135
        %v2220 = vunpack.c.l.b16 %v2136
        %v2221 = vunpack.c.l.b16 %v2137
        %v2222 = vunpack.c.h.b16 %v2137
        %v2223 = vunpack.c.l.b16 %v2138
        %v2224 = vunpack.c.l.b16 %v2139
        %v2225 = vunpack.c.h.b16 %v2139
        %v2226 = vunpack.c.l.b16 %v2140
        %v2227 = vunpack.c.l.b16 %v2141
        %v2228 = vunpack.c.h.b16 %v2141
        %v2229 = vunpack.c.l.b16 %v2142
        %v2230 = vunpack.c.l.b16 %v2143
        %v2231 = vunpack.c.h.b16 %v2143
        %v2232 = vunpack.c.l.b16 %v2144
        %v2233 = vunpack.c.l.b16 %v2145
        %v2234 = vunpack.c.h.b16 %v2145
        %v2235 = vunpack.c.l.b16 %v2146
        %v2236 = vunpack.c.l.b16 %v2147
        %v2237 = vunpack.c.h.b16 %v2147
        %v2238 = vunpack.c.l.b16 %v2148
        %v2239 = vunpack.c.l.b16 %v2149
        %v2240 = vunpack.c.h.b16 %v2149
        %v2241 = vunpack.c.l.b16 %v2150
        %v2242 = vunpack.c.l.b16 %v2151
        %v2243 = vunpack.c.h.b16 %v2151
        %v2244 = vunpack.c.l.b16 %v2152
        %v2245 = vunpack.c.l.b16 %v2153
        %v2246 = vunpack.c.h.b16 %v2153
        %v2247 = vunpack.c.l.b16 %v2154
        %v2248 = vunpack.c.l.b16 %v2155
        %v2249 = vunpack.c.h.b16 %v2155
        %v2250 = vunpack.c.l.b16 %v2156
        %v2251 = vunpack.c.l.b16 %v2157
        %v2252 = vunpack.c.h.b16 %v2157
        %v2253 = vunpack.c.l.b16 %v2158
        %v2254 = vunpack.c.l.b16 %v2159
        %v2255 = vunpack.c.h.b16 %v2159
        %v2256 = vunpack.c.l.b16 %v2160
        %v2257 = vunpack.c.l.b16 %v2161
        %v2258 = vunpack.c.h.b16 %v2161
        %v2259 = vunpack.c.l.b16 %v2162
        %v2260 = vunpack.c.l.b16 %v2163
        %v2261 = vunpack.c.h.b16 %v2163
        %v2262 = vunpack.c.l.b16 %v2164
        %v2263 = vpack.c.b16 %v2218, %v2215
        %v2264 = vpack.c.b16 %v2219, %v2216
        %v2265 = vpack.c.b16 %v2220, %v2217
        %v2266 = vpack.c.b16 %v2224, %v2221
        %v2267 = vpack.c.b16 %v2225, %v2222
        %v2268 = vpack.c.b16 %v2226, %v2223
        %v2269 = vpack.c.b16 %v2230, %v2227
        %v2270 = vpack.c.b16 %v2231, %v2228
        %v2271 = vpack.c.b16 %v2232, %v2229
        %v2272 = vpack.c.b16 %v2236, %v2233
        %v2273 = vpack.c.b16 %v2237, %v2234
        %v2274 = vpack.c.b16 %v2238, %v2235
        %v2275 = vpack.c.b16 %v2242, %v2239
        %v2276 = vpack.c.b16 %v2243, %v2240
        %v2277 = vpack.c.b16 %v2244, %v2241
        %v2278 = vpack.c.b16 %v2248, %v2245
        %v2279 = vpack.c.b16 %v2249, %v2246
        %v2280 = vpack.c.b16 %v2250, %v2247
        %v2281 = vpack.c.b16 %v2254, %v2251
        %v2282 = vpack.c.b16 %v2255, %v2252
        %v2283 = vpack.c.b16 %v2256, %v2253
        %v2284 = vpack.c.b16 %v2260, %v2257
        %v2285 = vpack.c.b16 %v2261, %v2258
        %v2286 = vpack.c.b16 %v2262, %v2259
        %2311 = vmatprep.subr.bf16.mxu0 %v2285
        %2312 = vmatpush1.bf16.msra.mxu0 %v2284
        %2313 = vmatprep.subr.bf16.mxu0 %v2282
        %2314 = vmatpush1.bf16.msra.mxu0 %v2281
        %2315 = vmatprep.subr.bf16.mxu0 %v2279
        %2316 = vmatpush1.bf16.msra.mxu0 %v2278
        %2317 = vmatprep.subr.bf16.mxu0 %v2276
        %2318 = vmatpush1.bf16.msra.mxu0 %v2275
        %2319 = vmatprep.subr.bf16.mxu0 %v2273
        %2320 = vmatpush1.bf16.msra.mxu0 %v2272
        %2321 = vmatprep.subr.bf16.mxu0 %v2270
        %2322 = vmatpush1.bf16.msra.mxu0 %v2269
        %2323 = vmatprep.subr.bf16.mxu0 %v2267
        %2324 = vmatpush1.bf16.msra.mxu0 %v2266
        %2325 = vmatprep.subr.bf16.mxu0 %v2264
        %2326 = vmatpush1.bf16.msra.mxu0 %v2263
        %2327 = vmatprep.subr.bf16.mxu0 0
        %2328 = vmatpush2.bf16.msra.mxu0 0
        %2329 = vmatprep.subr.bf16.mxu0 0
        %2330 = vmatpush2.bf16.msra.mxu0 0
        %2331 = vmatprep.subr.bf16.mxu0 0
        %2332 = vmatpush2.bf16.msra.mxu0 0
        %2333 = vmatprep.subr.bf16.mxu0 0
        %2334 = vmatpush2.bf16.msra.mxu0 0
        %2335 = vmatprep.subr.bf16.mxu0 0
        %2336 = vmatpush2.bf16.msra.mxu0 0
        %2337 = vmatprep.subr.bf16.mxu0 0
        %2338 = vmatpush2.bf16.msra.mxu0 0
        %2339 = vmatprep.subr.bf16.mxu0 0
        %2340 = vmatpush2.bf16.msra.mxu0 0
        %2341 = vmatprep.subr.bf16.mxu0 0
        %2342 = vmatpush2.bf16.msra.mxu0 0
        %2343 = vmatprep.mubr.bf16.mxu0 0
        %2344 = vmatmul.mubr.bf16.gmra.mxu0 %v2131
        %v2345 = vpop.f32.mrf.mxu0
        %v2346 = vadd.f32 %v2171, %v2345
        %v2347 = vpop.f32.mrf.mxu0
        %v2348 = vadd.f32 %v2175, %v2347
        %v2349 = vpop.f32.mrf.mxu0
        %v2350 = vpop.f32.mrf.mxu0
        %2351 = vdwg.mxu0
        %2352 = vmatprep.subr.bf16.mxu0 0
        %2353 = vmatpush1.bf16.msra.mxu0 %v2286
        %2354 = vmatprep.subr.bf16.mxu0 0
        %2355 = vmatpush1.bf16.msra.mxu0 %v2283
        %2356 = vmatprep.subr.bf16.mxu0 0
        %2357 = vmatpush1.bf16.msra.mxu0 %v2280
        %2358 = vmatprep.subr.bf16.mxu0 0
        %2359 = vmatpush1.bf16.msra.mxu0 %v2277
        %2360 = vmatprep.subr.bf16.mxu0 0
        %2361 = vmatpush1.bf16.msra.mxu0 %v2274
        %2362 = vmatprep.subr.bf16.mxu0 0
        %2363 = vmatpush1.bf16.msra.mxu0 %v2271
        %2364 = vmatprep.subr.bf16.mxu0 0
        %2365 = vmatpush1.bf16.msra.mxu0 %v2268
        %2366 = vmatprep.subr.bf16.mxu0 0
        %2367 = vmatpush1.bf16.msra.mxu0 %v2265
        %2368 = vmatprep.subr.bf16.mxu0 0
        %2369 = vmatpush2.bf16.msra.mxu0 0
        %2370 = vmatprep.subr.bf16.mxu0 0
        %2371 = vmatpush2.bf16.msra.mxu0 0
        %2372 = vmatprep.subr.bf16.mxu0 0
        %2373 = vmatpush2.bf16.msra.mxu0 0
        %2374 = vmatprep.subr.bf16.mxu0 0
        %2375 = vmatpush2.bf16.msra.mxu0 0
        %2376 = vmatprep.subr.bf16.mxu0 0
        %2377 = vmatpush2.bf16.msra.mxu0 0
        %2378 = vmatprep.subr.bf16.mxu0 0
        %2379 = vmatpush2.bf16.msra.mxu0 0
        %2380 = vmatprep.subr.bf16.mxu0 0
        %2381 = vmatpush2.bf16.msra.mxu0 0
        %2382 = vmatprep.subr.bf16.mxu0 0
        %2383 = vmatpush2.bf16.msra.mxu0 0
        %2384 = vmatprep.mubr.bf16.mxu0 0
        %2385 = vmatmul.mubr.bf16.gmra.mxu0 %v2131
        %v2386 = vpop.f32.mrf.mxu0
        %v2387 = vadd.f32 %v2179, %v2386
        %v2388 = vpop.f32.mrf.mxu0
        %v2389 = vpop.f32.mrf.mxu0
        %v2390 = vpop.f32.mrf.mxu0
        %2391 = vdwg.mxu0
        %s2392 = scalar_lea.vmem %s6, 64
        %v2393 = vld [vmem:[%s2392] sm:$0xf]
        %v2394 = vld [vmem:[%s2392 + $0x4] sm:$0xf]
        %v2395 = vld [vmem:[%s2392 + $0x8] sm:$0xf]
        %v2396 = vld [vmem:[%s2392 + $0xc] sm:$0xf]
        %v2397 = vld [vmem:[%s2392 + $0x10] sm:$0xf]
        %v2398 = vld [vmem:[%s2392 + $0x14] sm:$0xf]
        %v2399 = vld [vmem:[%s2392 + $0x18] sm:$0xf]
        %v2400 = vld [vmem:[%s2392 + $0x1c] sm:$0xf]
        %v2401 = vld [vmem:[%s2392 + $0x20] sm:$0xf]
        %v2402 = vld [vmem:[%s2392 + $0x24] sm:$0xf]
        %v2403 = vld [vmem:[%s2392 + $0x28] sm:$0xf]
        %v2404 = vld [vmem:[%s2392 + $0x2c] sm:$0xf]
        %v2405 = vld [vmem:[%s2392 + $0x30] sm:$0xf]
        %v2406 = vld [vmem:[%s2392 + $0x34] sm:$0xf]
        %v2407 = vld [vmem:[%s2392 + $0x38] sm:$0xf]
        %v2408 = vld [vmem:[%s2392 + $0x3c] sm:$0xf]
        %v2409 = vpack.c.bf16 %v2346, %v2346
        %v2410 = vpack.c.bf16 %v2348, %v2348
        %v2411 = vpack.c.bf16 %v2387, %v2387
        %v2413 = vsel %vm1036, %v2409, 0
        %v2416 = vsel %vm1036, %v2410, 0
        %2418 = vmatprep.subr.bf16.mxu0 0
        %2419 = vmatpush1.bf16.xpose.msra.mxu0 0
        %2420 = vmatprep.subr.bf16.mxu0 0
        %2421 = vmatpush1.bf16.xpose.msra.mxu0 0
        %2422 = vmatprep.subr.bf16.mxu0 0
        %2423 = vmatpush1.bf16.xpose.msra.mxu0 0
        %2424 = vmatprep.subr.bf16.mxu0 0
        %2425 = vmatpush1.bf16.xpose.msra.mxu0 0
        %2426 = vmatprep.subr.bf16.mxu0 0
        %2427 = vmatpush1.bf16.xpose.msra.mxu0 0
        %2428 = vmatprep.subr.bf16.mxu0 0
        %2429 = vmatpush1.bf16.xpose.msra.mxu0 0
        %2430 = vmatprep.subr.bf16.mxu0 0
        %2431 = vmatpush1.bf16.xpose.msra.mxu0 0
        %2432 = vmatprep.subr.bf16.mxu0 0
        %2433 = vmatpush1.bf16.xpose.msra.mxu0 %v2416
        %2434 = vmatprep.subr.bf16.mxu0 0
        %2435 = vmatpush2.bf16.xpose.msra.mxu0 0
        %2436 = vmatprep.subr.bf16.mxu0 0
        %2437 = vmatpush2.bf16.xpose.msra.mxu0 0
        %2438 = vmatprep.subr.bf16.mxu0 0
        %2439 = vmatpush2.bf16.xpose.msra.mxu0 0
        %2440 = vmatprep.subr.bf16.mxu0 0
        %2441 = vmatpush2.bf16.xpose.msra.mxu0 0
        %2442 = vmatprep.subr.bf16.mxu0 0
        %2443 = vmatpush2.bf16.xpose.msra.mxu0 0
        %2444 = vmatprep.subr.bf16.mxu0 0
        %2445 = vmatpush2.bf16.xpose.msra.mxu0 0
        %2446 = vmatprep.subr.bf16.mxu0 0
        %2447 = vmatpush2.bf16.xpose.msra.mxu0 0
        %2448 = vmatprep.subr.bf16.mxu0 0
        %2449 = vmatpush2.bf16.xpose.msra.mxu0 0
        %2450 = vmatprep.mubr.bf16.mxu0 0
        %2451 = vmatmul.mubr.bf16.gmra.mxu0 %v2413
        %v2452 = vpop.f32.mrf.mxu0
        %v2453 = vadd.f32 0.0, %v2452
        %v2454 = vpop.f32.mrf.mxu0
        %v2455 = vpop.f32.mrf.mxu0
        %v2456 = vpop.f32.mrf.mxu0
        %2457 = vdwg.mxu0
        %v2458 = vmul.f32 %v2453, 0.17677669
        %v2459 = vadd.f32 %v2458, %v1088
        %v2460 = vsel %vm1091, %v2459, -inf
        %2461 = vmax.xlane.f32.xlu0 %v2460
        %v2462 = vpop.xlane.xlu0 %2461
        %v2463 = vsub.f32 %v2459, %v2462
        %v2464 = vmul.f32 %v2463, 1.442695
        %v2465 = vpow.pop %v2464
        %v2466 = vsel %vm1091, %v2465, 0.0
        %2467 = vadd.xlane.f32.xlu0 %v2466
        %v2468 = vpop.xlane.xlu0 %2467
        %v2469 = vrcp.pop %v2468
        %v2470 = vmul.f32 %v2465, %v2469
        %v2471 = vpack.c.bf16 %v2470, %v2470
        %v2473 = vsel %vm1091, %v2471, 0
        %v2476 = vsel %vm1107, %v2411, 0
        %2478 = vmatprep.subr.bf16.mxu0 0
        %2479 = vmatpush1.bf16.msra.mxu0 0
        %2480 = vmatprep.subr.bf16.mxu0 0
        %2481 = vmatpush1.bf16.msra.mxu0 0
        %2482 = vmatprep.subr.bf16.mxu0 0
        %2483 = vmatpush1.bf16.msra.mxu0 0
        %2484 = vmatprep.subr.bf16.mxu0 0
        %2485 = vmatpush1.bf16.msra.mxu0 0
        %2486 = vmatprep.subr.bf16.mxu0 0
        %2487 = vmatpush1.bf16.msra.mxu0 0
        %2488 = vmatprep.subr.bf16.mxu0 0
        %2489 = vmatpush1.bf16.msra.mxu0 0
        %2490 = vmatprep.subr.bf16.mxu0 0
        %2491 = vmatpush1.bf16.msra.mxu0 0
        %2492 = vmatprep.subr.bf16.mxu0 0
        %2493 = vmatpush1.bf16.msra.mxu0 %v2476
        %2494 = vmatprep.subr.bf16.mxu0 0
        %2495 = vmatpush2.bf16.msra.mxu0 0
        %2496 = vmatprep.subr.bf16.mxu0 0
        %2497 = vmatpush2.bf16.msra.mxu0 0
        %2498 = vmatprep.subr.bf16.mxu0 0
        %2499 = vmatpush2.bf16.msra.mxu0 0
        %2500 = vmatprep.subr.bf16.mxu0 0
        %2501 = vmatpush2.bf16.msra.mxu0 0
        %2502 = vmatprep.subr.bf16.mxu0 0
        %2503 = vmatpush2.bf16.msra.mxu0 0
        %2504 = vmatprep.subr.bf16.mxu0 0
        %2505 = vmatpush2.bf16.msra.mxu0 0
        %2506 = vmatprep.subr.bf16.mxu0 0
        %2507 = vmatpush2.bf16.msra.mxu0 0
        %2508 = vmatprep.subr.bf16.mxu0 0
        %2509 = vmatpush2.bf16.msra.mxu0 0
        %2510 = vmatprep.mubr.bf16.mxu0 0
        %2511 = vmatmul.mubr.bf16.gmra.mxu0 %v2473
        %v2512 = vpop.f32.mrf.mxu0
        %v2513 = vadd.f32 0.0, %v2512
        %v2514 = vpop.f32.mrf.mxu0
        %v2515 = vpop.f32.mrf.mxu0
        %v2516 = vpop.f32.mrf.mxu0
        %2517 = vdwg.mxu0
        %v2518 = vpack.c.bf16 %v2513, %v2513
        %2520 = vrot.lane.b32.xlu0 %v2409, 96
        %v2521 = vpop.permute.xlu0 %2520
        %2523 = vrot.lane.b32.xlu0 %v2410, 96
        %v2524 = vpop.permute.xlu0 %2523
        %v2526 = vsel %vm1036, %v2521, 0
        %v2529 = vsel %vm1036, %v2524, 0
        %2531 = vmatprep.subr.bf16.mxu0 0
        %2532 = vmatpush1.bf16.xpose.msra.mxu0 0
        %2533 = vmatprep.subr.bf16.mxu0 0
        %2534 = vmatpush1.bf16.xpose.msra.mxu0 0
        %2535 = vmatprep.subr.bf16.mxu0 0
        %2536 = vmatpush1.bf16.xpose.msra.mxu0 0
        %2537 = vmatprep.subr.bf16.mxu0 0
        %2538 = vmatpush1.bf16.xpose.msra.mxu0 0
        %2539 = vmatprep.subr.bf16.mxu0 0
        %2540 = vmatpush1.bf16.xpose.msra.mxu0 0
        %2541 = vmatprep.subr.bf16.mxu0 0
        %2542 = vmatpush1.bf16.xpose.msra.mxu0 0
        %2543 = vmatprep.subr.bf16.mxu0 0
        %2544 = vmatpush1.bf16.xpose.msra.mxu0 0
        %2545 = vmatprep.subr.bf16.mxu0 0
        %2546 = vmatpush1.bf16.xpose.msra.mxu0 %v2529
        %2547 = vmatprep.subr.bf16.mxu0 0
        %2548 = vmatpush2.bf16.xpose.msra.mxu0 0
        %2549 = vmatprep.subr.bf16.mxu0 0
        %2550 = vmatpush2.bf16.xpose.msra.mxu0 0
        %2551 = vmatprep.subr.bf16.mxu0 0
        %2552 = vmatpush2.bf16.xpose.msra.mxu0 0
        %2553 = vmatprep.subr.bf16.mxu0 0
        %2554 = vmatpush2.bf16.xpose.msra.mxu0 0
        %2555 = vmatprep.subr.bf16.mxu0 0
        %2556 = vmatpush2.bf16.xpose.msra.mxu0 0
        %2557 = vmatprep.subr.bf16.mxu0 0
        %2558 = vmatpush2.bf16.xpose.msra.mxu0 0
        %2559 = vmatprep.subr.bf16.mxu0 0
        %2560 = vmatpush2.bf16.xpose.msra.mxu0 0
        %2561 = vmatprep.subr.bf16.mxu0 0
        %2562 = vmatpush2.bf16.xpose.msra.mxu0 0
        %2563 = vmatprep.mubr.bf16.mxu0 0
        %2564 = vmatmul.mubr.bf16.gmra.mxu0 %v2526
        %v2565 = vpop.f32.mrf.mxu0
        %v2566 = vadd.f32 0.0, %v2565
        %v2567 = vpop.f32.mrf.mxu0
        %v2568 = vpop.f32.mrf.mxu0
        %v2569 = vpop.f32.mrf.mxu0
        %2570 = vdwg.mxu0
        %v2571 = vmul.f32 %v2566, 0.17677669
        %v2572 = vadd.f32 %v2571, %v1088
        %v2573 = vsel %vm1091, %v2572, -inf
        %2574 = vmax.xlane.f32.xlu0 %v2573
        %v2575 = vpop.xlane.xlu0 %2574
        %v2576 = vsub.f32 %v2572, %v2575
        %v2577 = vmul.f32 %v2576, 1.442695
        %v2578 = vpow.pop %v2577
        %v2579 = vsel %vm1091, %v2578, 0.0
        %2580 = vadd.xlane.f32.xlu0 %v2579
        %v2581 = vpop.xlane.xlu0 %2580
        %v2582 = vrcp.pop %v2581
        %v2583 = vmul.f32 %v2578, %v2582
        %v2584 = vpack.c.bf16 %v2583, %v2583
        %2586 = vrot.lane.b32.xlu0 %v2411, 96
        %v2587 = vpop.permute.xlu0 %2586
        %v2589 = vsel %vm1091, %v2584, 0
        %v2592 = vsel %vm1107, %v2587, 0
        %2594 = vmatprep.subr.bf16.mxu0 0
        %2595 = vmatpush1.bf16.msra.mxu0 0
        %2596 = vmatprep.subr.bf16.mxu0 0
        %2597 = vmatpush1.bf16.msra.mxu0 0
        %2598 = vmatprep.subr.bf16.mxu0 0
        %2599 = vmatpush1.bf16.msra.mxu0 0
        %2600 = vmatprep.subr.bf16.mxu0 0
        %2601 = vmatpush1.bf16.msra.mxu0 0
        %2602 = vmatprep.subr.bf16.mxu0 0
        %2603 = vmatpush1.bf16.msra.mxu0 0
        %2604 = vmatprep.subr.bf16.mxu0 0
        %2605 = vmatpush1.bf16.msra.mxu0 0
        %2606 = vmatprep.subr.bf16.mxu0 0
        %2607 = vmatpush1.bf16.msra.mxu0 0
        %2608 = vmatprep.subr.bf16.mxu0 0
        %2609 = vmatpush1.bf16.msra.mxu0 %v2592
        %2610 = vmatprep.subr.bf16.mxu0 0
        %2611 = vmatpush2.bf16.msra.mxu0 0
        %2612 = vmatprep.subr.bf16.mxu0 0
        %2613 = vmatpush2.bf16.msra.mxu0 0
        %2614 = vmatprep.subr.bf16.mxu0 0
        %2615 = vmatpush2.bf16.msra.mxu0 0
        %2616 = vmatprep.subr.bf16.mxu0 0
        %2617 = vmatpush2.bf16.msra.mxu0 0
        %2618 = vmatprep.subr.bf16.mxu0 0
        %2619 = vmatpush2.bf16.msra.mxu0 0
        %2620 = vmatprep.subr.bf16.mxu0 0
        %2621 = vmatpush2.bf16.msra.mxu0 0
        %2622 = vmatprep.subr.bf16.mxu0 0
        %2623 = vmatpush2.bf16.msra.mxu0 0
        %2624 = vmatprep.subr.bf16.mxu0 0
        %2625 = vmatpush2.bf16.msra.mxu0 0
        %2626 = vmatprep.mubr.bf16.mxu0 0
        %2627 = vmatmul.mubr.bf16.gmra.mxu0 %v2589
        %v2628 = vpop.f32.mrf.mxu0
        %v2629 = vadd.f32 0.0, %v2628
        %v2630 = vpop.f32.mrf.mxu0
        %v2631 = vpop.f32.mrf.mxu0
        %v2632 = vpop.f32.mrf.mxu0
        %2633 = vdwg.mxu0
        %v2634 = vpack.c.bf16 %v2629, %v2629
        %v2639 = vunpack.c.l.b16 %v2397
        %v2640 = vunpack.c.l.b16 %v2398
        %v2641 = vunpack.c.l.b16 %v2399
        %v2642 = vunpack.c.l.b16 %v2400
        %v2643 = vpack.c.b16 %v2640, %v2639
        %v2644 = vpack.c.b16 %v2642, %v2641
        %v2648 = vsel %vm1036, %v2634, 0
        %2650 = vmatprep.subr.bf16.mxu0 0
        %2651 = vmatpush1.bf16.msra.mxu0 0
        %2652 = vmatprep.subr.bf16.mxu0 0
        %2653 = vmatpush1.bf16.msra.mxu0 0
        %2654 = vmatprep.subr.bf16.mxu0 0
        %2655 = vmatpush1.bf16.msra.mxu0 0
        %2656 = vmatprep.subr.bf16.mxu0 0
        %2657 = vmatpush1.bf16.msra.mxu0 0
        %2658 = vmatprep.subr.bf16.mxu0 0
        %2659 = vmatpush1.bf16.msra.mxu0 0
        %2660 = vmatprep.subr.bf16.mxu0 0
        %2661 = vmatpush1.bf16.msra.mxu0 0
        %2662 = vmatprep.subr.bf16.mxu0 0
        %2663 = vmatpush1.bf16.msra.mxu0 %v2644
        %2664 = vmatprep.subr.bf16.mxu0 0
        %2665 = vmatpush1.bf16.msra.mxu0 %v2643
        %2666 = vmatprep.subr.bf16.mxu0 0
        %2667 = vmatpush2.bf16.msra.mxu0 0
        %2668 = vmatprep.subr.bf16.mxu0 0
        %2669 = vmatpush2.bf16.msra.mxu0 0
        %2670 = vmatprep.subr.bf16.mxu0 0
        %2671 = vmatpush2.bf16.msra.mxu0 0
        %2672 = vmatprep.subr.bf16.mxu0 0
        %2673 = vmatpush2.bf16.msra.mxu0 0
        %2674 = vmatprep.subr.bf16.mxu0 0
        %2675 = vmatpush2.bf16.msra.mxu0 0
        %2676 = vmatprep.subr.bf16.mxu0 0
        %2677 = vmatpush2.bf16.msra.mxu0 0
        %2678 = vmatprep.subr.bf16.mxu0 0
        %2679 = vmatpush2.bf16.msra.mxu0 0
        %2680 = vmatprep.subr.bf16.mxu0 0
        %2681 = vmatpush2.bf16.msra.mxu0 0
        %2682 = vmatprep.mubr.bf16.mxu0 0
        %2683 = vmatmul.mubr.bf16.gmra.mxu0 %v2648
        %v2684 = vpop.f32.mrf.mxu0
        %v2685 = vadd.f32 0.0, %v2684
        %v2686 = vpop.f32.mrf.mxu0
        %v2687 = vpop.f32.mrf.mxu0
        %v2688 = vpop.f32.mrf.mxu0
        %2689 = vdwg.mxu0
        %v2694 = vunpack.c.l.b16 %v2393
        %v2695 = vunpack.c.l.b16 %v2394
        %v2696 = vunpack.c.l.b16 %v2395
        %v2697 = vunpack.c.l.b16 %v2396
        %v2698 = vpack.c.b16 %v2695, %v2694
        %v2699 = vpack.c.b16 %v2697, %v2696
        %v2703 = vsel %vm1036, %v2518, 0
        %2705 = vmatprep.subr.bf16.mxu0 0
        %2706 = vmatpush1.bf16.msra.mxu0 0
        %2707 = vmatprep.subr.bf16.mxu0 0
        %2708 = vmatpush1.bf16.msra.mxu0 0
        %2709 = vmatprep.subr.bf16.mxu0 0
        %2710 = vmatpush1.bf16.msra.mxu0 0
        %2711 = vmatprep.subr.bf16.mxu0 0
        %2712 = vmatpush1.bf16.msra.mxu0 0
        %2713 = vmatprep.subr.bf16.mxu0 0
        %2714 = vmatpush1.bf16.msra.mxu0 0
        %2715 = vmatprep.subr.bf16.mxu0 0
        %2716 = vmatpush1.bf16.msra.mxu0 0
        %2717 = vmatprep.subr.bf16.mxu0 0
        %2718 = vmatpush1.bf16.msra.mxu0 %v2699
        %2719 = vmatprep.subr.bf16.mxu0 0
        %2720 = vmatpush1.bf16.msra.mxu0 %v2698
        %2721 = vmatprep.subr.bf16.mxu0 0
        %2722 = vmatpush2.bf16.msra.mxu0 0
        %2723 = vmatprep.subr.bf16.mxu0 0
        %2724 = vmatpush2.bf16.msra.mxu0 0
        %2725 = vmatprep.subr.bf16.mxu0 0
        %2726 = vmatpush2.bf16.msra.mxu0 0
        %2727 = vmatprep.subr.bf16.mxu0 0
        %2728 = vmatpush2.bf16.msra.mxu0 0
        %2729 = vmatprep.subr.bf16.mxu0 0
        %2730 = vmatpush2.bf16.msra.mxu0 0
        %2731 = vmatprep.subr.bf16.mxu0 0
        %2732 = vmatpush2.bf16.msra.mxu0 0
        %2733 = vmatprep.subr.bf16.mxu0 0
        %2734 = vmatpush2.bf16.msra.mxu0 0
        %2735 = vmatprep.subr.bf16.mxu0 0
        %2736 = vmatpush2.bf16.msra.mxu0 0
        %2737 = vmatprep.mubr.bf16.mxu0 0
        %2738 = vmatmul.mubr.bf16.gmra.mxu0 %v2703
        %v2739 = vpop.f32.mrf.mxu0
        %v2740 = vadd.f32 %v2685, %v2739
        %v2741 = vpop.f32.mrf.mxu0
        %v2742 = vpop.f32.mrf.mxu0
        %v2743 = vpop.f32.mrf.mxu0
        %2744 = vdwg.mxu0
        %2745 = vrot.lane.b32.xlu0 %v2409, 64
        %v2746 = vpop.permute.xlu0 %2745
        %2747 = vrot.lane.b32.xlu0 %v2410, 64
        %v2748 = vpop.permute.xlu0 %2747
        %v2750 = vsel %vm1036, %v2746, 0
        %v2753 = vsel %vm1036, %v2748, 0
        %2755 = vmatprep.subr.bf16.mxu0 0
        %2756 = vmatpush1.bf16.xpose.msra.mxu0 0
        %2757 = vmatprep.subr.bf16.mxu0 0
        %2758 = vmatpush1.bf16.xpose.msra.mxu0 0
        %2759 = vmatprep.subr.bf16.mxu0 0
        %2760 = vmatpush1.bf16.xpose.msra.mxu0 0
        %2761 = vmatprep.subr.bf16.mxu0 0
        %2762 = vmatpush1.bf16.xpose.msra.mxu0 0
        %2763 = vmatprep.subr.bf16.mxu0 0
        %2764 = vmatpush1.bf16.xpose.msra.mxu0 0
        %2765 = vmatprep.subr.bf16.mxu0 0
        %2766 = vmatpush1.bf16.xpose.msra.mxu0 0
        %2767 = vmatprep.subr.bf16.mxu0 0
        %2768 = vmatpush1.bf16.xpose.msra.mxu0 0
        %2769 = vmatprep.subr.bf16.mxu0 0
        %2770 = vmatpush1.bf16.xpose.msra.mxu0 %v2753
        %2771 = vmatprep.subr.bf16.mxu0 0
        %2772 = vmatpush2.bf16.xpose.msra.mxu0 0
        %2773 = vmatprep.subr.bf16.mxu0 0
        %2774 = vmatpush2.bf16.xpose.msra.mxu0 0
        %2775 = vmatprep.subr.bf16.mxu0 0
        %2776 = vmatpush2.bf16.xpose.msra.mxu0 0
        %2777 = vmatprep.subr.bf16.mxu0 0
        %2778 = vmatpush2.bf16.xpose.msra.mxu0 0
        %2779 = vmatprep.subr.bf16.mxu0 0
        %2780 = vmatpush2.bf16.xpose.msra.mxu0 0
        %2781 = vmatprep.subr.bf16.mxu0 0
        %2782 = vmatpush2.bf16.xpose.msra.mxu0 0
        %2783 = vmatprep.subr.bf16.mxu0 0
        %2784 = vmatpush2.bf16.xpose.msra.mxu0 0
        %2785 = vmatprep.subr.bf16.mxu0 0
        %2786 = vmatpush2.bf16.xpose.msra.mxu0 0
        %2787 = vmatprep.mubr.bf16.mxu0 0
        %2788 = vmatmul.mubr.bf16.gmra.mxu0 %v2750
        %v2789 = vpop.f32.mrf.mxu0
        %v2790 = vadd.f32 0.0, %v2789
        %v2791 = vpop.f32.mrf.mxu0
        %v2792 = vpop.f32.mrf.mxu0
        %v2793 = vpop.f32.mrf.mxu0
        %2794 = vdwg.mxu0
        %v2795 = vmul.f32 %v2790, 0.17677669
        %v2796 = vadd.f32 %v2795, %v1088
        %v2797 = vsel %vm1091, %v2796, -inf
        %2798 = vmax.xlane.f32.xlu0 %v2797
        %v2799 = vpop.xlane.xlu0 %2798
        %v2800 = vsub.f32 %v2796, %v2799
        %v2801 = vmul.f32 %v2800, 1.442695
        %v2802 = vpow.pop %v2801
        %v2803 = vsel %vm1091, %v2802, 0.0
        %2804 = vadd.xlane.f32.xlu0 %v2803
        %v2805 = vpop.xlane.xlu0 %2804
        %v2806 = vrcp.pop %v2805
        %v2807 = vmul.f32 %v2802, %v2806
        %v2808 = vpack.c.bf16 %v2807, %v2807
        %2809 = vrot.lane.b32.xlu0 %v2411, 64
        %v2810 = vpop.permute.xlu0 %2809
        %v2812 = vsel %vm1091, %v2808, 0
        %v2815 = vsel %vm1107, %v2810, 0
        %2817 = vmatprep.subr.bf16.mxu0 0
        %2818 = vmatpush1.bf16.msra.mxu0 0
        %2819 = vmatprep.subr.bf16.mxu0 0
        %2820 = vmatpush1.bf16.msra.mxu0 0
        %2821 = vmatprep.subr.bf16.mxu0 0
        %2822 = vmatpush1.bf16.msra.mxu0 0
        %2823 = vmatprep.subr.bf16.mxu0 0
        %2824 = vmatpush1.bf16.msra.mxu0 0
        %2825 = vmatprep.subr.bf16.mxu0 0
        %2826 = vmatpush1.bf16.msra.mxu0 0
        %2827 = vmatprep.subr.bf16.mxu0 0
        %2828 = vmatpush1.bf16.msra.mxu0 0
        %2829 = vmatprep.subr.bf16.mxu0 0
        %2830 = vmatpush1.bf16.msra.mxu0 0
        %2831 = vmatprep.subr.bf16.mxu0 0
        %2832 = vmatpush1.bf16.msra.mxu0 %v2815
        %2833 = vmatprep.subr.bf16.mxu0 0
        %2834 = vmatpush2.bf16.msra.mxu0 0
        %2835 = vmatprep.subr.bf16.mxu0 0
        %2836 = vmatpush2.bf16.msra.mxu0 0
        %2837 = vmatprep.subr.bf16.mxu0 0
        %2838 = vmatpush2.bf16.msra.mxu0 0
        %2839 = vmatprep.subr.bf16.mxu0 0
        %2840 = vmatpush2.bf16.msra.mxu0 0
        %2841 = vmatprep.subr.bf16.mxu0 0
        %2842 = vmatpush2.bf16.msra.mxu0 0
        %2843 = vmatprep.subr.bf16.mxu0 0
        %2844 = vmatpush2.bf16.msra.mxu0 0
        %2845 = vmatprep.subr.bf16.mxu0 0
        %2846 = vmatpush2.bf16.msra.mxu0 0
        %2847 = vmatprep.subr.bf16.mxu0 0
        %2848 = vmatpush2.bf16.msra.mxu0 0
        %2849 = vmatprep.mubr.bf16.mxu0 0
        %2850 = vmatmul.mubr.bf16.gmra.mxu0 %v2812
        %v2851 = vpop.f32.mrf.mxu0
        %v2852 = vadd.f32 0.0, %v2851
        %v2853 = vpop.f32.mrf.mxu0
        %v2854 = vpop.f32.mrf.mxu0
        %v2855 = vpop.f32.mrf.mxu0
        %2856 = vdwg.mxu0
        %v2857 = vpack.c.bf16 %v2852, %v2852
        %v2862 = vunpack.c.l.b16 %v2401
        %v2863 = vunpack.c.l.b16 %v2402
        %v2864 = vunpack.c.l.b16 %v2403
        %v2865 = vunpack.c.l.b16 %v2404
        %v2866 = vpack.c.b16 %v2863, %v2862
        %v2867 = vpack.c.b16 %v2865, %v2864
        %v2871 = vsel %vm1036, %v2857, 0
        %2873 = vmatprep.subr.bf16.mxu0 0
        %2874 = vmatpush1.bf16.msra.mxu0 0
        %2875 = vmatprep.subr.bf16.mxu0 0
        %2876 = vmatpush1.bf16.msra.mxu0 0
        %2877 = vmatprep.subr.bf16.mxu0 0
        %2878 = vmatpush1.bf16.msra.mxu0 0
        %2879 = vmatprep.subr.bf16.mxu0 0
        %2880 = vmatpush1.bf16.msra.mxu0 0
        %2881 = vmatprep.subr.bf16.mxu0 0
        %2882 = vmatpush1.bf16.msra.mxu0 0
        %2883 = vmatprep.subr.bf16.mxu0 0
        %2884 = vmatpush1.bf16.msra.mxu0 0
        %2885 = vmatprep.subr.bf16.mxu0 0
        %2886 = vmatpush1.bf16.msra.mxu0 %v2867
        %2887 = vmatprep.subr.bf16.mxu0 0
        %2888 = vmatpush1.bf16.msra.mxu0 %v2866
        %2889 = vmatprep.subr.bf16.mxu0 0
        %2890 = vmatpush2.bf16.msra.mxu0 0
        %2891 = vmatprep.subr.bf16.mxu0 0
        %2892 = vmatpush2.bf16.msra.mxu0 0
        %2893 = vmatprep.subr.bf16.mxu0 0
        %2894 = vmatpush2.bf16.msra.mxu0 0
        %2895 = vmatprep.subr.bf16.mxu0 0
        %2896 = vmatpush2.bf16.msra.mxu0 0
        %2897 = vmatprep.subr.bf16.mxu0 0
        %2898 = vmatpush2.bf16.msra.mxu0 0
        %2899 = vmatprep.subr.bf16.mxu0 0
        %2900 = vmatpush2.bf16.msra.mxu0 0
        %2901 = vmatprep.subr.bf16.mxu0 0
        %2902 = vmatpush2.bf16.msra.mxu0 0
        %2903 = vmatprep.subr.bf16.mxu0 0
        %2904 = vmatpush2.bf16.msra.mxu0 0
        %2905 = vmatprep.mubr.bf16.mxu0 0
        %2906 = vmatmul.mubr.bf16.gmra.mxu0 %v2871
        %v2907 = vpop.f32.mrf.mxu0
        %v2908 = vadd.f32 0.0, %v2907
        %v2909 = vpop.f32.mrf.mxu0
        %v2910 = vpop.f32.mrf.mxu0
        %v2911 = vpop.f32.mrf.mxu0
        %2912 = vdwg.mxu0
        %v2913 = vadd.f32 %v2740, %v2908
        %2914 = vrot.lane.b32.xlu0 %v2409, 32
        %v2915 = vpop.permute.xlu0 %2914
        %2916 = vrot.lane.b32.xlu0 %v2410, 32
        %v2917 = vpop.permute.xlu0 %2916
        %v2919 = vsel %vm1036, %v2915, 0
        %v2922 = vsel %vm1036, %v2917, 0
        %2924 = vmatprep.subr.bf16.mxu0 0
        %2925 = vmatpush1.bf16.xpose.msra.mxu0 0
        %2926 = vmatprep.subr.bf16.mxu0 0
        %2927 = vmatpush1.bf16.xpose.msra.mxu0 0
        %2928 = vmatprep.subr.bf16.mxu0 0
        %2929 = vmatpush1.bf16.xpose.msra.mxu0 0
        %2930 = vmatprep.subr.bf16.mxu0 0
        %2931 = vmatpush1.bf16.xpose.msra.mxu0 0
        %2932 = vmatprep.subr.bf16.mxu0 0
        %2933 = vmatpush1.bf16.xpose.msra.mxu0 0
        %2934 = vmatprep.subr.bf16.mxu0 0
        %2935 = vmatpush1.bf16.xpose.msra.mxu0 0
        %2936 = vmatprep.subr.bf16.mxu0 0
        %2937 = vmatpush1.bf16.xpose.msra.mxu0 0
        %2938 = vmatprep.subr.bf16.mxu0 0
        %2939 = vmatpush1.bf16.xpose.msra.mxu0 %v2922
        %2940 = vmatprep.subr.bf16.mxu0 0
        %2941 = vmatpush2.bf16.xpose.msra.mxu0 0
        %2942 = vmatprep.subr.bf16.mxu0 0
        %2943 = vmatpush2.bf16.xpose.msra.mxu0 0
        %2944 = vmatprep.subr.bf16.mxu0 0
        %2945 = vmatpush2.bf16.xpose.msra.mxu0 0
        %2946 = vmatprep.subr.bf16.mxu0 0
        %2947 = vmatpush2.bf16.xpose.msra.mxu0 0
        %2948 = vmatprep.subr.bf16.mxu0 0
        %2949 = vmatpush2.bf16.xpose.msra.mxu0 0
        %2950 = vmatprep.subr.bf16.mxu0 0
        %2951 = vmatpush2.bf16.xpose.msra.mxu0 0
        %2952 = vmatprep.subr.bf16.mxu0 0
        %2953 = vmatpush2.bf16.xpose.msra.mxu0 0
        %2954 = vmatprep.subr.bf16.mxu0 0
        %2955 = vmatpush2.bf16.xpose.msra.mxu0 0
        %2956 = vmatprep.mubr.bf16.mxu0 0
        %2957 = vmatmul.mubr.bf16.gmra.mxu0 %v2919
        %v2958 = vpop.f32.mrf.mxu0
        %v2959 = vadd.f32 0.0, %v2958
        %v2960 = vpop.f32.mrf.mxu0
        %v2961 = vpop.f32.mrf.mxu0
        %v2962 = vpop.f32.mrf.mxu0
        %2963 = vdwg.mxu0
        %v2964 = vmul.f32 %v2959, 0.17677669
        %v2965 = vadd.f32 %v2964, %v1088
        %v2966 = vsel %vm1091, %v2965, -inf
        %2967 = vmax.xlane.f32.xlu0 %v2966
        %v2968 = vpop.xlane.xlu0 %2967
        %v2969 = vsub.f32 %v2965, %v2968
        %v2970 = vmul.f32 %v2969, 1.442695
        %v2971 = vpow.pop %v2970
        %v2972 = vsel %vm1091, %v2971, 0.0
        %2973 = vadd.xlane.f32.xlu0 %v2972
        %v2974 = vpop.xlane.xlu0 %2973
        %v2975 = vrcp.pop %v2974
        %v2976 = vmul.f32 %v2971, %v2975
        %v2977 = vpack.c.bf16 %v2976, %v2976
        %2978 = vrot.lane.b32.xlu0 %v2411, 32
        %v2979 = vpop.permute.xlu0 %2978
        %v2981 = vsel %vm1091, %v2977, 0
        %v2984 = vsel %vm1107, %v2979, 0
        %2986 = vmatprep.subr.bf16.mxu0 0
        %2987 = vmatpush1.bf16.msra.mxu0 0
        %2988 = vmatprep.subr.bf16.mxu0 0
        %2989 = vmatpush1.bf16.msra.mxu0 0
        %2990 = vmatprep.subr.bf16.mxu0 0
        %2991 = vmatpush1.bf16.msra.mxu0 0
        %2992 = vmatprep.subr.bf16.mxu0 0
        %2993 = vmatpush1.bf16.msra.mxu0 0
        %2994 = vmatprep.subr.bf16.mxu0 0
        %2995 = vmatpush1.bf16.msra.mxu0 0
        %2996 = vmatprep.subr.bf16.mxu0 0
        %2997 = vmatpush1.bf16.msra.mxu0 0
        %2998 = vmatprep.subr.bf16.mxu0 0
        %2999 = vmatpush1.bf16.msra.mxu0 0
        %3000 = vmatprep.subr.bf16.mxu0 0
        %3001 = vmatpush1.bf16.msra.mxu0 %v2984
        %3002 = vmatprep.subr.bf16.mxu0 0
        %3003 = vmatpush2.bf16.msra.mxu0 0
        %3004 = vmatprep.subr.bf16.mxu0 0
        %3005 = vmatpush2.bf16.msra.mxu0 0
        %3006 = vmatprep.subr.bf16.mxu0 0
        %3007 = vmatpush2.bf16.msra.mxu0 0
        %3008 = vmatprep.subr.bf16.mxu0 0
        %3009 = vmatpush2.bf16.msra.mxu0 0
        %3010 = vmatprep.subr.bf16.mxu0 0
        %3011 = vmatpush2.bf16.msra.mxu0 0
        %3012 = vmatprep.subr.bf16.mxu0 0
        %3013 = vmatpush2.bf16.msra.mxu0 0
        %3014 = vmatprep.subr.bf16.mxu0 0
        %3015 = vmatpush2.bf16.msra.mxu0 0
        %3016 = vmatprep.subr.bf16.mxu0 0
        %3017 = vmatpush2.bf16.msra.mxu0 0
        %3018 = vmatprep.mubr.bf16.mxu0 0
        %3019 = vmatmul.mubr.bf16.gmra.mxu0 %v2981
        %v3020 = vpop.f32.mrf.mxu0
        %v3021 = vadd.f32 0.0, %v3020
        %v3022 = vpop.f32.mrf.mxu0
        %v3023 = vpop.f32.mrf.mxu0
        %v3024 = vpop.f32.mrf.mxu0
        %3025 = vdwg.mxu0
        %v3026 = vpack.c.bf16 %v3021, %v3021
        %v3031 = vunpack.c.l.b16 %v2405
        %v3032 = vunpack.c.l.b16 %v2406
        %v3033 = vunpack.c.l.b16 %v2407
        %v3034 = vunpack.c.l.b16 %v2408
        %v3035 = vpack.c.b16 %v3032, %v3031
        %v3036 = vpack.c.b16 %v3034, %v3033
        %v3040 = vsel %vm1036, %v3026, 0
        %3042 = vmatprep.subr.bf16.mxu0 0
        %3043 = vmatpush1.bf16.msra.mxu0 0
        %3044 = vmatprep.subr.bf16.mxu0 0
        %3045 = vmatpush1.bf16.msra.mxu0 0
        %3046 = vmatprep.subr.bf16.mxu0 0
        %3047 = vmatpush1.bf16.msra.mxu0 0
        %3048 = vmatprep.subr.bf16.mxu0 0
        %3049 = vmatpush1.bf16.msra.mxu0 0
        %3050 = vmatprep.subr.bf16.mxu0 0
        %3051 = vmatpush1.bf16.msra.mxu0 0
        %3052 = vmatprep.subr.bf16.mxu0 0
        %3053 = vmatpush1.bf16.msra.mxu0 0
        %3054 = vmatprep.subr.bf16.mxu0 0
        %3055 = vmatpush1.bf16.msra.mxu0 %v3036
        %3056 = vmatprep.subr.bf16.mxu0 0
        %3057 = vmatpush1.bf16.msra.mxu0 %v3035
        %3058 = vmatprep.subr.bf16.mxu0 0
        %3059 = vmatpush2.bf16.msra.mxu0 0
        %3060 = vmatprep.subr.bf16.mxu0 0
        %3061 = vmatpush2.bf16.msra.mxu0 0
        %3062 = vmatprep.subr.bf16.mxu0 0
        %3063 = vmatpush2.bf16.msra.mxu0 0
        %3064 = vmatprep.subr.bf16.mxu0 0
        %3065 = vmatpush2.bf16.msra.mxu0 0
        %3066 = vmatprep.subr.bf16.mxu0 0
        %3067 = vmatpush2.bf16.msra.mxu0 0
        %3068 = vmatprep.subr.bf16.mxu0 0
        %3069 = vmatpush2.bf16.msra.mxu0 0
        %3070 = vmatprep.subr.bf16.mxu0 0
        %3071 = vmatpush2.bf16.msra.mxu0 0
        %3072 = vmatprep.subr.bf16.mxu0 0
        %3073 = vmatpush2.bf16.msra.mxu0 0
        %3074 = vmatprep.mubr.bf16.mxu0 0
        %3075 = vmatmul.mubr.bf16.gmra.mxu0 %v3040
        %v3076 = vpop.f32.mrf.mxu0
        %v3077 = vadd.f32 0.0, %v3076
        %v3078 = vpop.f32.mrf.mxu0
        %v3079 = vpop.f32.mrf.mxu0
        %v3080 = vpop.f32.mrf.mxu0
        %3081 = vdwg.mxu0
        %v3082 = vadd.f32 %v2913, %v3077
        %s3083 = scalar_lea.vmem %s7, 1
        %v3084 = vld [vmem:[%s3083] sm:$0x1]
        %v3086 = vlaneseq
        %v3087 = vshrl.u32 %v3086, 7
        %v3088 = vsub.s32 0, %v3087
        %v3089 = vrot.slane %v3084, %v3088
        %v3091 = vadd.f32 %v3082, %v3089
        %v3092 = vadd.f32 %v2130, %v3091
        %s3093 = scalar_lea.vmem %s8, 1
        %v3094 = vld [vmem:[%s3093] sm:$0x1]
        %s3095 = scalar_lea.vmem %s9, 1
        %v3096 = vld [vmem:[%s3095] sm:$0x1]
        %3097 = vadd.xlane.f32.xlu0 %v3092
        %v3098 = vpop.xlane.xlu0 %3097
        %v3099 = vmul.f32 %v3098, %v730
        %v3100 = vmul.f32 %v3092, %v3092
        %3101 = vadd.xlane.f32.xlu0 %v3100
        %v3102 = vpop.xlane.xlu0 %3101
        %v3103 = vmul.f32 %v3102, %v730
        %v3104 = vmul.f32 %v3099, %v3099
        %v3105 = vsub.f32 %v3103, %v3104
        %v3106 = vmax.f32 %v3105, 0.0
        %v3107 = vsub.f32 %v3092, %v3099
        %v3108 = vadd.f32 %v3106, 1e-12
        %v3109 = vrsqrt.pop %v3108
        %v3110 = vmul.f32 %v3107, %v3109
        %v3112 = vlaneseq
        %v3113 = vshrl.u32 %v3112, 7
        %v3114 = vsub.s32 0, %v3113
        %v3115 = vrot.slane %v3094, %v3114
        %v3117 = vmul.f32 %v3110, %v3115
        %v3119 = vlaneseq
        %v3120 = vshrl.u32 %v3119, 7
        %v3121 = vsub.s32 0, %v3120
        %v3122 = vrot.slane %v3096, %v3121
        %v3124 = vadd.f32 %v3117, %v3122
        %v3125 = vpack.c.bf16 %v3124, %v3124
        %s3126 = scalar_lea.vmem [#allocation5], 128
        %v3127 = vld [vmem:[%s3126] sm:$0xff]
        %v3128 = vld [vmem:[%s3126 + $0x8] sm:$0xff]
        %v3129 = vld [vmem:[%s3126 + $0x10] sm:$0xff]
        %v3130 = vld [vmem:[%s3126 + $0x18] sm:$0xff]
        %v3131 = vld [vmem:[%s3126 + $0x20] sm:$0xff]
        %v3132 = vld [vmem:[%s3126 + $0x28] sm:$0xff]
        %v3133 = vld [vmem:[%s3126 + $0x30] sm:$0xff]
        %v3134 = vld [vmem:[%s3126 + $0x38] sm:$0xff]
        %v3135 = vld [vmem:[%s3126 + $0x40] sm:$0xff]
        %v3136 = vld [vmem:[%s3126 + $0x48] sm:$0xff]
        %v3137 = vld [vmem:[%s3126 + $0x50] sm:$0xff]
        %v3138 = vld [vmem:[%s3126 + $0x58] sm:$0xff]
        %v3139 = vld [vmem:[%s3126 + $0x60] sm:$0xff]
        %v3140 = vld [vmem:[%s3126 + $0x68] sm:$0xff]
        %v3141 = vld [vmem:[%s3126 + $0x70] sm:$0xff]
        %v3142 = vld [vmem:[%s3126 + $0x78] sm:$0xff]
        %s3143 = scalar_lea.vmem %s11, 2
        %v3144 = vld [vmem:[%s3143] sm:$0x3]
        %v3146 = vlaneseq
        %v3147 = vshrl.u32 %v3146, 7
        %v3148 = vsub.s32 0, %v3147
        %v3149 = vrot.slane %v3144, %v3148
        %v3150 = vlaneseq
        %v3151 = vshrl.u32 %v3150, 7
        %v3152 = vsub.s32 1, %v3151
        %v3153 = vrot.slane %v3144, %v3152
        %v3172 = vunpack.c.l.b16 %v3127
        %v3173 = vunpack.c.h.b16 %v3127
        %v3174 = vunpack.c.l.b16 %v3128
        %v3175 = vunpack.c.h.b16 %v3128
        %v3176 = vunpack.c.l.b16 %v3129
        %v3177 = vunpack.c.h.b16 %v3129
        %v3178 = vunpack.c.l.b16 %v3130
        %v3179 = vunpack.c.h.b16 %v3130
        %v3180 = vunpack.c.l.b16 %v3131
        %v3181 = vunpack.c.h.b16 %v3131
        %v3182 = vunpack.c.l.b16 %v3132
        %v3183 = vunpack.c.h.b16 %v3132
        %v3184 = vunpack.c.l.b16 %v3133
        %v3185 = vunpack.c.h.b16 %v3133
        %v3186 = vunpack.c.l.b16 %v3134
        %v3187 = vunpack.c.h.b16 %v3134
        %v3188 = vunpack.c.l.b16 %v3135
        %v3189 = vunpack.c.h.b16 %v3135
        %v3190 = vunpack.c.l.b16 %v3136
        %v3191 = vunpack.c.h.b16 %v3136
        %v3192 = vunpack.c.l.b16 %v3137
        %v3193 = vunpack.c.h.b16 %v3137
        %v3194 = vunpack.c.l.b16 %v3138
        %v3195 = vunpack.c.h.b16 %v3138
        %v3196 = vunpack.c.l.b16 %v3139
        %v3197 = vunpack.c.h.b16 %v3139
        %v3198 = vunpack.c.l.b16 %v3140
        %v3199 = vunpack.c.h.b16 %v3140
        %v3200 = vunpack.c.l.b16 %v3141
        %v3201 = vunpack.c.h.b16 %v3141
        %v3202 = vunpack.c.l.b16 %v3142
        %v3203 = vunpack.c.h.b16 %v3142
        %v3204 = vpack.c.b16 %v3174, %v3172
        %v3205 = vpack.c.b16 %v3175, %v3173
        %v3206 = vpack.c.b16 %v3178, %v3176
        %v3207 = vpack.c.b16 %v3179, %v3177
        %v3208 = vpack.c.b16 %v3182, %v3180
        %v3209 = vpack.c.b16 %v3183, %v3181
        %v3210 = vpack.c.b16 %v3186, %v3184
        %v3211 = vpack.c.b16 %v3187, %v3185
        %v3212 = vpack.c.b16 %v3190, %v3188
        %v3213 = vpack.c.b16 %v3191, %v3189
        %v3214 = vpack.c.b16 %v3194, %v3192
        %v3215 = vpack.c.b16 %v3195, %v3193
        %v3216 = vpack.c.b16 %v3198, %v3196
        %v3217 = vpack.c.b16 %v3199, %v3197
        %v3218 = vpack.c.b16 %v3202, %v3200
        %v3219 = vpack.c.b16 %v3203, %v3201
        %3236 = vmatprep.subr.bf16.mxu0 %v3219
        %3237 = vmatpush1.bf16.msra.mxu0 %v3218
        %3238 = vmatprep.subr.bf16.mxu0 %v3217
        %3239 = vmatpush1.bf16.msra.mxu0 %v3216
        %3240 = vmatprep.subr.bf16.mxu0 %v3215
        %3241 = vmatpush1.bf16.msra.mxu0 %v3214
        %3242 = vmatprep.subr.bf16.mxu0 %v3213
        %3243 = vmatpush1.bf16.msra.mxu0 %v3212
        %3244 = vmatprep.subr.bf16.mxu0 %v3211
        %3245 = vmatpush1.bf16.msra.mxu0 %v3210
        %3246 = vmatprep.subr.bf16.mxu0 %v3209
        %3247 = vmatpush1.bf16.msra.mxu0 %v3208
        %3248 = vmatprep.subr.bf16.mxu0 %v3207
        %3249 = vmatpush1.bf16.msra.mxu0 %v3206
        %3250 = vmatprep.subr.bf16.mxu0 %v3205
        %3251 = vmatpush1.bf16.msra.mxu0 %v3204
        %3252 = vmatprep.subr.bf16.mxu0 0
        %3253 = vmatpush2.bf16.msra.mxu0 0
        %3254 = vmatprep.subr.bf16.mxu0 0
        %3255 = vmatpush2.bf16.msra.mxu0 0
        %3256 = vmatprep.subr.bf16.mxu0 0
        %3257 = vmatpush2.bf16.msra.mxu0 0
        %3258 = vmatprep.subr.bf16.mxu0 0
        %3259 = vmatpush2.bf16.msra.mxu0 0
        %3260 = vmatprep.subr.bf16.mxu0 0
        %3261 = vmatpush2.bf16.msra.mxu0 0
        %3262 = vmatprep.subr.bf16.mxu0 0
        %3263 = vmatpush2.bf16.msra.mxu0 0
        %3264 = vmatprep.subr.bf16.mxu0 0
        %3265 = vmatpush2.bf16.msra.mxu0 0
        %3266 = vmatprep.subr.bf16.mxu0 0
        %3267 = vmatpush2.bf16.msra.mxu0 0
        %3268 = vmatprep.mubr.bf16.mxu0 0
        %3269 = vmatmul.mubr.bf16.gmra.mxu0 %v3125
        %v3270 = vpop.f32.mrf.mxu0
        %v3271 = vadd.f32 %v3149, %v3270
        %v3272 = vpop.f32.mrf.mxu0
        %v3273 = vadd.f32 %v3153, %v3272
        %v3274 = vpop.f32.mrf.mxu0
        %v3275 = vpop.f32.mrf.mxu0
        %3276 = vdwg.mxu0
        %v3277 = vmul.f32 %v3271, 0.5
        %v3278 = vmul.f32 %v3273, 0.5
        %v3279 = vmul.f32 %v3271, 0.044715
        %v3280 = vmul.f32 %v3273, 0.044715
        %v3281 = vmul.f32 %v3279, %v3271
        %v3282 = vmul.f32 %v3280, %v3273
        %v3283 = vmul.f32 %v3281, %v3271
        %v3284 = vmul.f32 %v3282, %v3273
        %v3285 = vadd.f32 %v3271, %v3283
        %v3286 = vadd.f32 %v3273, %v3284
        %v3287 = vmul.f32 %v3285, 0.7978846
        %v3288 = vmul.f32 %v3286, 0.7978846
        %v3289 = vtanh.pop %v3287
        %v3290 = vtanh.pop %v3288
        %v3291 = vadd.f32 %v3289, 1.0
        %v3292 = vadd.f32 %v3290, 1.0
        %v3293 = vmul.f32 %v3277, %v3291
        %v3294 = vmul.f32 %v3278, %v3292
        %v3295 = vpack.c.bf16 %v3293, %v3293
        %v3296 = vpack.c.bf16 %v3294, %v3294
        %s3297 = scalar_lea.vmem [#allocation7], 128
        %v3298 = vld [vmem:[%s3297] sm:$0xf]
        %v3299 = vld [vmem:[%s3297 + $0x4] sm:$0xf]
        %v3300 = vld [vmem:[%s3297 + $0x8] sm:$0xf]
        %v3301 = vld [vmem:[%s3297 + $0xc] sm:$0xf]
        %v3302 = vld [vmem:[%s3297 + $0x10] sm:$0xf]
        %v3303 = vld [vmem:[%s3297 + $0x14] sm:$0xf]
        %v3304 = vld [vmem:[%s3297 + $0x18] sm:$0xf]
        %v3305 = vld [vmem:[%s3297 + $0x1c] sm:$0xf]
        %v3306 = vld [vmem:[%s3297 + $0x20] sm:$0xf]
        %v3307 = vld [vmem:[%s3297 + $0x24] sm:$0xf]
        %v3308 = vld [vmem:[%s3297 + $0x28] sm:$0xf]
        %v3309 = vld [vmem:[%s3297 + $0x2c] sm:$0xf]
        %v3310 = vld [vmem:[%s3297 + $0x30] sm:$0xf]
        %v3311 = vld [vmem:[%s3297 + $0x34] sm:$0xf]
        %v3312 = vld [vmem:[%s3297 + $0x38] sm:$0xf]
        %v3313 = vld [vmem:[%s3297 + $0x3c] sm:$0xf]
        %v3314 = vld [vmem:[%s3297 + $0x40] sm:$0xf]
        %v3315 = vld [vmem:[%s3297 + $0x44] sm:$0xf]
        %v3316 = vld [vmem:[%s3297 + $0x48] sm:$0xf]
        %v3317 = vld [vmem:[%s3297 + $0x4c] sm:$0xf]
        %v3318 = vld [vmem:[%s3297 + $0x50] sm:$0xf]
        %v3319 = vld [vmem:[%s3297 + $0x54] sm:$0xf]
        %v3320 = vld [vmem:[%s3297 + $0x58] sm:$0xf]
        %v3321 = vld [vmem:[%s3297 + $0x5c] sm:$0xf]
        %v3322 = vld [vmem:[%s3297 + $0x60] sm:$0xf]
        %v3323 = vld [vmem:[%s3297 + $0x64] sm:$0xf]
        %v3324 = vld [vmem:[%s3297 + $0x68] sm:$0xf]
        %v3325 = vld [vmem:[%s3297 + $0x6c] sm:$0xf]
        %v3326 = vld [vmem:[%s3297 + $0x70] sm:$0xf]
        %v3327 = vld [vmem:[%s3297 + $0x74] sm:$0xf]
        %v3328 = vld [vmem:[%s3297 + $0x78] sm:$0xf]
        %v3329 = vld [vmem:[%s3297 + $0x7c] sm:$0xf]
        %s3330 = scalar_lea.vmem %s13, 1
        %v3331 = vld [vmem:[%s3330] sm:$0x1]
        %v3333 = vlaneseq
        %v3334 = vshrl.u32 %v3333, 7
        %v3335 = vsub.s32 0, %v3334
        %v3336 = vrot.slane %v3331, %v3335
        %v3370 = vunpack.c.l.b16 %v3298
        %v3371 = vunpack.c.l.b16 %v3299
        %v3372 = vunpack.c.l.b16 %v3300
        %v3373 = vunpack.c.l.b16 %v3301
        %v3374 = vunpack.c.l.b16 %v3302
        %v3375 = vunpack.c.l.b16 %v3303
        %v3376 = vunpack.c.l.b16 %v3304
        %v3377 = vunpack.c.l.b16 %v3305
        %v3378 = vunpack.c.l.b16 %v3306
        %v3379 = vunpack.c.l.b16 %v3307
        %v3380 = vunpack.c.l.b16 %v3308
        %v3381 = vunpack.c.l.b16 %v3309
        %v3382 = vunpack.c.l.b16 %v3310
        %v3383 = vunpack.c.l.b16 %v3311
        %v3384 = vunpack.c.l.b16 %v3312
        %v3385 = vunpack.c.l.b16 %v3313
        %v3386 = vunpack.c.l.b16 %v3314
        %v3387 = vunpack.c.l.b16 %v3315
        %v3388 = vunpack.c.l.b16 %v3316
        %v3389 = vunpack.c.l.b16 %v3317
        %v3390 = vunpack.c.l.b16 %v3318
        %v3391 = vunpack.c.l.b16 %v3319
        %v3392 = vunpack.c.l.b16 %v3320
        %v3393 = vunpack.c.l.b16 %v3321
        %v3394 = vunpack.c.l.b16 %v3322
        %v3395 = vunpack.c.l.b16 %v3323
        %v3396 = vunpack.c.l.b16 %v3324
        %v3397 = vunpack.c.l.b16 %v3325
        %v3398 = vunpack.c.l.b16 %v3326
        %v3399 = vunpack.c.l.b16 %v3327
        %v3400 = vunpack.c.l.b16 %v3328
        %v3401 = vunpack.c.l.b16 %v3329
        %v3402 = vpack.c.b16 %v3371, %v3370
        %v3403 = vpack.c.b16 %v3373, %v3372
        %v3404 = vpack.c.b16 %v3375, %v3374
        %v3405 = vpack.c.b16 %v3377, %v3376
        %v3406 = vpack.c.b16 %v3379, %v3378
        %v3407 = vpack.c.b16 %v3381, %v3380
        %v3408 = vpack.c.b16 %v3383, %v3382
        %v3409 = vpack.c.b16 %v3385, %v3384
        %v3410 = vpack.c.b16 %v3387, %v3386
        %v3411 = vpack.c.b16 %v3389, %v3388
        %v3412 = vpack.c.b16 %v3391, %v3390
        %v3413 = vpack.c.b16 %v3393, %v3392
        %v3414 = vpack.c.b16 %v3395, %v3394
        %v3415 = vpack.c.b16 %v3397, %v3396
        %v3416 = vpack.c.b16 %v3399, %v3398
        %v3417 = vpack.c.b16 %v3401, %v3400
        %3434 = vmatprep.subr.bf16.mxu0 0
        %3435 = vmatpush1.bf16.msra.mxu0 %v3409
        %3436 = vmatprep.subr.bf16.mxu0 0
        %3437 = vmatpush1.bf16.msra.mxu0 %v3408
        %3438 = vmatprep.subr.bf16.mxu0 0
        %3439 = vmatpush1.bf16.msra.mxu0 %v3407
        %3440 = vmatprep.subr.bf16.mxu0 0
        %3441 = vmatpush1.bf16.msra.mxu0 %v3406
        %3442 = vmatprep.subr.bf16.mxu0 0
        %3443 = vmatpush1.bf16.msra.mxu0 %v3405
        %3444 = vmatprep.subr.bf16.mxu0 0
        %3445 = vmatpush1.bf16.msra.mxu0 %v3404
        %3446 = vmatprep.subr.bf16.mxu0 0
        %3447 = vmatpush1.bf16.msra.mxu0 %v3403
        %3448 = vmatprep.subr.bf16.mxu0 0
        %3449 = vmatpush1.bf16.msra.mxu0 %v3402
        %3450 = vmatprep.subr.bf16.mxu0 0
        %3451 = vmatpush2.bf16.msra.mxu0 %v3417
        %3452 = vmatprep.subr.bf16.mxu0 0
        %3453 = vmatpush2.bf16.msra.mxu0 %v3416
        %3454 = vmatprep.subr.bf16.mxu0 0
        %3455 = vmatpush2.bf16.msra.mxu0 %v3415
        %3456 = vmatprep.subr.bf16.mxu0 0
        %3457 = vmatpush2.bf16.msra.mxu0 %v3414
        %3458 = vmatprep.subr.bf16.mxu0 0
        %3459 = vmatpush2.bf16.msra.mxu0 %v3413
        %3460 = vmatprep.subr.bf16.mxu0 0
        %3461 = vmatpush2.bf16.msra.mxu0 %v3412
        %3462 = vmatprep.subr.bf16.mxu0 0
        %3463 = vmatpush2.bf16.msra.mxu0 %v3411
        %3464 = vmatprep.subr.bf16.mxu0 0
        %3465 = vmatpush2.bf16.msra.mxu0 %v3410
        %3466 = vmatprep.mubr.bf16.mxu0 %v3296
        %3467 = vmatmul.mubr.bf16.gmra.mxu0 %v3295
        %v3468 = vpop.f32.mrf.mxu0
        %v3469 = vadd.f32 %v3336, %v3468
        %v3470 = vpop.f32.mrf.mxu0
        %v3471 = vpop.f32.mrf.mxu0
        %v3472 = vpop.f32.mrf.mxu0
        %3473 = vdwg.mxu0
        %v3474 = vadd.f32 %v3124, %v3469
        %s3475 = scalar_lea.vmem %s14, 1
        %v3476 = vld [vmem:[%s3475] sm:$0x1]
        %s3477 = scalar_lea.vmem [#allocation8], 1
        %v3478 = vld [vmem:[%s3477] sm:$0x1]
        %3479 = vadd.xlane.f32.xlu0 %v3474
        %v3480 = vpop.xlane.xlu0 %3479
        %v3481 = vmul.f32 %v3480, %v730
        %v3482 = vmul.f32 %v3474, %v3474
        %3483 = vadd.xlane.f32.xlu0 %v3482
        %v3484 = vpop.xlane.xlu0 %3483
        %v3485 = vmul.f32 %v3484, %v730
        %v3486 = vmul.f32 %v3481, %v3481
        %v3487 = vsub.f32 %v3485, %v3486
        %v3488 = vmax.f32 %v3487, 0.0
        %v3489 = vsub.f32 %v3474, %v3481
        %v3490 = vadd.f32 %v3488, 1e-12
        %v3491 = vrsqrt.pop %v3490
        %v3492 = vmul.f32 %v3489, %v3491
        %v3494 = vlaneseq
        %v3495 = vshrl.u32 %v3494, 7
        %v3496 = vsub.s32 0, %v3495
        %v3497 = vrot.slane %v3476, %v3496
        %v3499 = vmul.f32 %v3492, %v3497
        %v3501 = vlaneseq
        %v3502 = vshrl.u32 %v3501, 7
        %v3503 = vsub.s32 0, %v3502
        %v3504 = vrot.slane %v3478, %v3503
        %v3506 = vadd.f32 %v3499, %v3504
        %v3507 = vpack.c.bf16 %v3506, %v3506
        %v3508 = vld [vmem:[%s16] sm:$0xf]
        %v3509 = vld [vmem:[%s16 + $0x4] sm:$0xf]
        %v3510 = vld [vmem:[%s16 + $0x8] sm:$0xf]
        %v3511 = vld [vmem:[%s16 + $0xc] sm:$0xf]
        %v3512 = vld [vmem:[%s16 + $0x10] sm:$0xf]
        %v3513 = vld [vmem:[%s16 + $0x14] sm:$0xf]
        %v3514 = vld [vmem:[%s16 + $0x18] sm:$0xf]
        %v3515 = vld [vmem:[%s16 + $0x1c] sm:$0xf]
        %v3516 = vld [vmem:[%s16 + $0x20] sm:$0xf]
        %v3517 = vld [vmem:[%s16 + $0x24] sm:$0xf]
        %v3518 = vld [vmem:[%s16 + $0x28] sm:$0xf]
        %v3519 = vld [vmem:[%s16 + $0x2c] sm:$0xf]
        %v3520 = vld [vmem:[%s16 + $0x30] sm:$0xf]
        %v3521 = vld [vmem:[%s16 + $0x34] sm:$0xf]
        %v3522 = vld [vmem:[%s16 + $0x38] sm:$0xf]
        %v3523 = vld [vmem:[%s16 + $0x3c] sm:$0xf]
        %v3524 = vld [vmem:[#allocation10] sm:$0x1]
        %v3541 = vunpack.c.l.b16 %v3508
        %v3542 = vunpack.c.l.b16 %v3509
        %v3543 = vunpack.c.l.b16 %v3510
        %v3544 = vunpack.c.l.b16 %v3511
        %v3545 = vunpack.c.l.b16 %v3512
        %v3546 = vunpack.c.l.b16 %v3513
        %v3547 = vunpack.c.l.b16 %v3514
        %v3548 = vunpack.c.l.b16 %v3515
        %v3549 = vunpack.c.l.b16 %v3516
        %v3550 = vunpack.c.l.b16 %v3517
        %v3551 = vunpack.c.l.b16 %v3518
        %v3552 = vunpack.c.l.b16 %v3519
        %v3553 = vunpack.c.l.b16 %v3520
        %v3554 = vunpack.c.l.b16 %v3521
        %v3555 = vunpack.c.l.b16 %v3522
        %v3556 = vunpack.c.l.b16 %v3523
        %v3557 = vpack.c.b16 %v3542, %v3541
        %v3558 = vpack.c.b16 %v3544, %v3543
        %v3559 = vpack.c.b16 %v3546, %v3545
        %v3560 = vpack.c.b16 %v3548, %v3547
        %v3561 = vpack.c.b16 %v3550, %v3549
        %v3562 = vpack.c.b16 %v3552, %v3551
        %v3563 = vpack.c.b16 %v3554, %v3553
        %v3564 = vpack.c.b16 %v3556, %v3555
        %3573 = vmatprep.subr.bf16.mxu0 0
        %3574 = vmatpush1.bf16.msra.mxu0 %v3564
        %3575 = vmatprep.subr.bf16.mxu0 0
        %3576 = vmatpush1.bf16.msra.mxu0 %v3563
        %3577 = vmatprep.subr.bf16.mxu0 0
        %3578 = vmatpush1.bf16.msra.mxu0 %v3562
        %3579 = vmatprep.subr.bf16.mxu0 0
        %3580 = vmatpush1.bf16.msra.mxu0 %v3561
        %3581 = vmatprep.subr.bf16.mxu0 0
        %3582 = vmatpush1.bf16.msra.mxu0 %v3560
        %3583 = vmatprep.subr.bf16.mxu0 0
        %3584 = vmatpush1.bf16.msra.mxu0 %v3559
        %3585 = vmatprep.subr.bf16.mxu0 0
        %3586 = vmatpush1.bf16.msra.mxu0 %v3558
        %3587 = vmatprep.subr.bf16.mxu0 0
        %3588 = vmatpush1.bf16.msra.mxu0 %v3557
        %3589 = vmatprep.subr.bf16.mxu0 0
        %3590 = vmatpush2.bf16.msra.mxu0 0
        %3591 = vmatprep.subr.bf16.mxu0 0
        %3592 = vmatpush2.bf16.msra.mxu0 0
        %3593 = vmatprep.subr.bf16.mxu0 0
        %3594 = vmatpush2.bf16.msra.mxu0 0
        %3595 = vmatprep.subr.bf16.mxu0 0
        %3596 = vmatpush2.bf16.msra.mxu0 0
        %3597 = vmatprep.subr.bf16.mxu0 0
        %3598 = vmatpush2.bf16.msra.mxu0 0
        %3599 = vmatprep.subr.bf16.mxu0 0
        %3600 = vmatpush2.bf16.msra.mxu0 0
        %3601 = vmatprep.subr.bf16.mxu0 0
        %3602 = vmatpush2.bf16.msra.mxu0 0
        %3603 = vmatprep.subr.bf16.mxu0 0
        %3604 = vmatpush2.bf16.msra.mxu0 0
        %3605 = vmatprep.mubr.bf16.mxu0 0
        %3606 = vmatmul.mubr.bf16.gmra.mxu0 %v3507
        %v3607 = vpop.f32.mrf.mxu0
        %v3608 = vadd.f32 %v3524, %v3607
        %v3609 = vpop.f32.mrf.mxu0
        %v3610 = vpop.f32.mrf.mxu0
        %v3611 = vpop.f32.mrf.mxu0
        %3612 = vdwg.mxu0
        %v3613 = vtanh.pop %v3608
        %v3614 = vpack.c.bf16 %v3613, %v3613
        %v3615 = vld [vmem:[#allocation11] sm:$0xf]
        %v3616 = vld [vmem:[#allocation11 + $0x4] sm:$0xf]
        %v3617 = vld [vmem:[#allocation11 + $0x8] sm:$0xf]
        %v3618 = vld [vmem:[#allocation11 + $0xc] sm:$0xf]
        %v3619 = vld [vmem:[#allocation11 + $0x10] sm:$0xf]
        %v3620 = vld [vmem:[#allocation11 + $0x14] sm:$0xf]
        %v3621 = vld [vmem:[#allocation11 + $0x18] sm:$0xf]
        %v3622 = vld [vmem:[#allocation11 + $0x1c] sm:$0xf]
        %v3623 = vld [vmem:[#allocation11 + $0x20] sm:$0xf]
        %v3624 = vld [vmem:[#allocation11 + $0x24] sm:$0xf]
        %v3625 = vld [vmem:[#allocation11 + $0x28] sm:$0xf]
        %v3626 = vld [vmem:[#allocation11 + $0x2c] sm:$0xf]
        %v3627 = vld [vmem:[#allocation11 + $0x30] sm:$0xf]
        %v3628 = vld [vmem:[#allocation11 + $0x34] sm:$0xf]
        %v3629 = vld [vmem:[#allocation11 + $0x38] sm:$0xf]
        %v3630 = vld [vmem:[#allocation11 + $0x3c] sm:$0xf]
        %v3631 = vld [vmem:[%s19] sm:$0x1]
        %v3648 = vunpack.c.l.b16 %v3615
        %v3649 = vunpack.c.l.b16 %v3616
        %v3650 = vunpack.c.l.b16 %v3617
        %v3651 = vunpack.c.l.b16 %v3618
        %v3652 = vunpack.c.l.b16 %v3619
        %v3653 = vunpack.c.l.b16 %v3620
        %v3654 = vunpack.c.l.b16 %v3621
        %v3655 = vunpack.c.l.b16 %v3622
        %v3656 = vunpack.c.l.b16 %v3623
        %v3657 = vunpack.c.l.b16 %v3624
        %v3658 = vunpack.c.l.b16 %v3625
        %v3659 = vunpack.c.l.b16 %v3626
        %v3660 = vunpack.c.l.b16 %v3627
        %v3661 = vunpack.c.l.b16 %v3628
        %v3662 = vunpack.c.l.b16 %v3629
        %v3663 = vunpack.c.l.b16 %v3630
        %v3664 = vpack.c.b16 %v3649, %v3648
        %v3665 = vpack.c.b16 %v3651, %v3650
        %v3666 = vpack.c.b16 %v3653, %v3652
        %v3667 = vpack.c.b16 %v3655, %v3654
        %v3668 = vpack.c.b16 %v3657, %v3656
        %v3669 = vpack.c.b16 %v3659, %v3658
        %v3670 = vpack.c.b16 %v3661, %v3660
        %v3671 = vpack.c.b16 %v3663, %v3662
        %3680 = vmatprep.subr.bf16.mxu0 0
        %3681 = vmatpush1.bf16.msra.mxu0 %v3671
        %3682 = vmatprep.subr.bf16.mxu0 0
        %3683 = vmatpush1.bf16.msra.mxu0 %v3670
        %3684 = vmatprep.subr.bf16.mxu0 0
        %3685 = vmatpush1.bf16.msra.mxu0 %v3669
        %3686 = vmatprep.subr.bf16.mxu0 0
        %3687 = vmatpush1.bf16.msra.mxu0 %v3668
        %3688 = vmatprep.subr.bf16.mxu0 0
        %3689 = vmatpush1.bf16.msra.mxu0 %v3667
        %3690 = vmatprep.subr.bf16.mxu0 0
        %3691 = vmatpush1.bf16.msra.mxu0 %v3666
        %3692 = vmatprep.subr.bf16.mxu0 0
        %3693 = vmatpush1.bf16.msra.mxu0 %v3665
        %3694 = vmatprep.subr.bf16.mxu0 0
        %3695 = vmatpush1.bf16.msra.mxu0 %v3664
        %3696 = vmatprep.subr.bf16.mxu0 0
        %3697 = vmatpush2.bf16.msra.mxu0 0
        %3698 = vmatprep.subr.bf16.mxu0 0
        %3699 = vmatpush2.bf16.msra.mxu0 0
        %3700 = vmatprep.subr.bf16.mxu0 0
        %3701 = vmatpush2.bf16.msra.mxu0 0
        %3702 = vmatprep.subr.bf16.mxu0 0
        %3703 = vmatpush2.bf16.msra.mxu0 0
        %3704 = vmatprep.subr.bf16.mxu0 0
        %3705 = vmatpush2.bf16.msra.mxu0 0
        %3706 = vmatprep.subr.bf16.mxu0 0
        %3707 = vmatpush2.bf16.msra.mxu0 0
        %3708 = vmatprep.subr.bf16.mxu0 0
        %3709 = vmatpush2.bf16.msra.mxu0 0
        %3710 = vmatprep.subr.bf16.mxu0 0
        %3711 = vmatpush2.bf16.msra.mxu0 0
        %3712 = vmatprep.mubr.bf16.mxu0 0
        %3713 = vmatmul.mubr.bf16.gmra.mxu0 %v3614
        %v3714 = vpop.f32.mrf.mxu0
        %v3715 = vadd.f32 %v3631, %v3714
        %v3716 = vpop.f32.mrf.mxu0
        %v3717 = vpop.f32.mrf.mxu0
        %v3718 = vpop.f32.mrf.mxu0
        %3719 = vdwg.mxu0
        %3720 = vst [vmem:[%s716] sm:$0x1] %v3715
        %s3721 = sand.u32 %s476, 1
        %s3722 = scalar_lea.sflag [#allocation4], %s3721
        %s3723 = sand.u32 %s476, 1
        %s3724 = scalar_lea.vmem [#allocation13], %s3723
        // Predicated region
        $region125: #{bert_classifier_forward.1} parent=99 // pred_check
          %p3725 = pneg %p486
        $region126: #{bert_classifier_forward.1} parent=99 // pred_check_branch
          %3727 = sbr.rel (%p3725) target = $region128
        $region127: #{bert_classifier_forward.1} parent=99 // pred_region
          %s3729 = ssub.s32 16, 16
          %3730 = vsyncadd %s3722, %s3729
          %s3731 = smul.addr %s38, 16
          %s3732 = scalar_lea.hbm %s20, %s3731
          %s3734 = sshll.u32 %s3724, 4
          %s3735 = int_to_ptr.vmem [resolvable:$true] %s3734
          %3737 = dma.vmem_to_hbm [thread:$0]  %s3735, 16, %s3732, %s3722
        $region128: #{bert_classifier_forward.1} parent=99 // pred_fallthru
          _
      $region100: #{bert_classifier_forward.1} parent=5 // pred_fallthru
        _
      %p3738 = scmp.le.s32.totalorder 2, %s33
      // Predicated region
      $region129: #{bert_classifier_forward.1} parent=5 // pred_check
        %p3739 = pneg %p3738
      $region130: #{bert_classifier_forward.1} parent=5 // pred_check_branch
        %3741 = sbr.rel (%p3739) target = $region132
      $region131: #{bert_classifier_forward.1} parent=5 // pred_region
        %s3742 = ssub.s32 %s33, 2
        // Predicated region
        $region133: #{bert_classifier_forward.1} parent=131 // pred_check
          %p3743 = pneg %p492
        $region134: #{bert_classifier_forward.1} parent=131 // pred_check_branch
          %3745 = sbr.rel (%p3743) target = $region136
        $region135: #{bert_classifier_forward.1} parent=131 // pred_region
          %s3746 = sand.u32 %s477, 1
          %s3747 = scalar_lea.sflag [#allocation4], %s3746
          %s3748 = sand.u32 %s477, 1
          %s3749 = scalar_lea.vmem [#allocation13], %s3748
          %3750 = dma.done %s3747, 16
        $region136: #{bert_classifier_forward.1} parent=131 // pred_fallthru
          _
      $region132: #{bert_classifier_forward.1} parent=5 // pred_fallthru
        _
    $region6: #{bert_classifier_forward.1} parent=1 // loop_footer
      %s37 = sadd.s32 1, %s33
    $region7: #{bert_classifier_forward.1} parent=1 // loop_footer_branch
      %32 = sbr.rel target = $region3
    $region8: #{bert_classifier_forward.1} parent=1 // loop_exit
      _
    %3751 = vsyncpa [#allocation3], 1
    %s3752 = scalar_lea.sflag [#allocation3], 1
    %3753 = vsyncpa %s3752, 1
    %3754 = vsyncpa [#allocation6], 1
    %3755 = vsyncpa [#allocation9], 1
    %3756 = vsyncpa [#allocation12], 1
    %3757 = vsyncpa [#allocation4], 1
    %s3758 = scalar_lea.sflag [#allocation4], 1
    %3759 = vsyncpa %s3758, 1

</llo_original>
